<compile_context>
chip_gen: v7x
topology: tpu7x:2x2x1
jax: 0.10.0
libtpu: 0.0.40
codegen_flags: <defaults>
</compile_context>

<pallas_src>
import functools

import jax
import jax.numpy as jnp
from jax import lax
from jax.experimental import pallas as pl
from jax.experimental.pallas import tpu as pltpu

SCALES = (1, 5, 9, 13)


def _round_up(x, m):
    return ((x + m - 1) // m) * m


def _chunks(total, size):
    """Static (start, length) row chunks covering [0, total)."""
    out = []
    h0 = 0
    while h0 < total:
        out.append((h0, min(size, total - h0)))
        h0 += size
    return out


def _spp_kernel(x_ref, o_ref, pad_ref, *, radii, pad, W, Wp, hc):
    """x_ref: (H, W, Ct); o_ref: (n_scales, H, W, Ct); pad_ref: (H+2p, Wp, Ct).

    pad_ref layout: valid data lives in rows [pad, pad+H) and columns
    [pad, pad+W); the surrounding strips stay -inf and are never overwritten.
    """
    H, _, Ct = x_ref.shape
    dt = pad_ref.dtype
    # TODO(synk): -inf sentinel assumes a floating dtype (as in the PyTorch module).
    neg_inf = -jnp.inf

    # ---- -inf border strips only; the (H, W) center is always overwritten by
    # the stage store before it is read, so it needs no initialization.
    pad_ref[pl.ds(0, pad), :, :] = jnp.full((pad, Wp, Ct), neg_inf, dt)
    pad_ref[pl.ds(pad + H, pad), :, :] = jnp.full((pad, Wp, Ct), neg_inf, dt)
    pad_ref[pl.ds(pad, H), pl.ds(0, pad), :] = jnp.full((H, pad, Ct), neg_inf, dt)
    right = Wp - (pad + W)
    if right > 0:
        pad_ref[pl.ds(pad, H), pl.ds(pad + W, right), :] = (
            jnp.full((H, right, Ct), neg_inf, dt))

    src = None          # None -> read from x_ref, else leading index into o_ref
    prev_r = 0
    for i, r in enumerate(radii):
        step = r - prev_r

        def read_src(h0, hcur, _src=src):
            if _src is None:
                return x_ref[pl.ds(h0, hcur), :, :]
            return o_ref[_src, pl.ds(h0, hcur), :, :]

        if step == 0:
            # kernel size 1 (or repeated radius): plain copy.
            for h0, hcur in _chunks(H, hc):
                o_ref[i, pl.ds(h0, hcur), :, :] = read_src(h0, hcur)
        else:
            # 1) stage the previous cascade result into the padded scratch
            #    (data region only; borders stay -inf).
            for h0, hcur in _chunks(H, hc):
                pad_ref[pl.ds(pad + h0, hcur), pl.ds(pad, W), :] = read_src(h0, hcur)
            # 2) separable (2*step+1)^2 max, H-chunked to bound live vregs:
            #    rows: H-shifted ref reads (plain leading-dim address offsets),
            #    cols: static sublane-offset slices of the register value
            #          (XLU relayouts; no slab write-back / reload).
            for h0, hcur in _chunks(H, hc):
                rows = pad_ref[pl.ds(pad + h0 - step, hcur), :, :]
                for dh in range(-step + 1, step + 1):
                    rows = jnp.maximum(
                        rows, pad_ref[pl.ds(pad + h0 + dh, hcur), :, :])
                acc = rows[:, pad - step:pad - step + W, :]
                for dw in range(-step + 1, step + 1):
                    acc = jnp.maximum(acc, rows[:, pad + dw:pad + dw + W, :])
                o_ref[i, pl.ds(h0, hcur), :, :] = acc
            src = i
        prev_r = r


def _choose_c_tile(N, C, H, W, Wp, pad, n_scales, itemsize):
    """Lane-dense channel tile that yields enough grid steps to pipeline and to
    feed both v7x TensorCores, while keeping double-buffered in+out blocks plus
    the scratch well under the v5e 16 MiB scoped-VMEM default."""
    if C % 128 != 0:
        return C          # small / odd channel counts: one lane-sparse tile

    budget = 12 * 1024 * 1024

    def vmem_bytes(ct):
        blocks = 2 * (1 + n_scales) * H * W * ct * itemsize   # double-buffered
        scratch = (H + 2 * pad) * Wp * ct * itemsize
        return blocks + scratch

    for ct in (256, 128):
        if C % ct == 0 and N * (C // ct) >= 8 and vmem_bytes(ct) <= budget:
            return ct
    return 128


def _choose_h_chunk(H, Wp, c_tile, itemsize):
    """Rows per chunk so rows/acc/slice-temp stay ~<= 40 live vregs."""
    sublanes = 8 * max(1, 4 // max(1, itemsize))          # packed sublanes/vreg
    vregs_per_row = -(-Wp // sublanes) * -(-c_tile // 128)
    hc = max(1, 40 // (3 * vregs_per_row))
    return max(1, min(hc, 8, H))


def spp(x, scales=SCALES):
    """x: (N, C, H, W) float array -> (N, len(scales)*C, H, W), like SPP.forward."""
    N, C, H, W = x.shape
    scales = tuple(scales)
    n_scales = len(scales)
    assert all(s % 2 == 1 for s in scales), "shape-preserving SPP expects odd scales"
    radii = tuple(s // 2 for s in scales)
    assert radii == tuple(sorted(radii)), "cascaded SPP expects ascending scales"
    steps = [b - a for a, b in zip((0,) + radii[:-1], radii)]
    pad = max([s for s in steps if s > 0], default=1)
    Wp = _round_up(W + 2 * pad, 8)          # sublane-aligned padded width

    itemsize = jnp.dtype(x.dtype).itemsize
    c_tile = _choose_c_tile(N, C, H, W, Wp, pad, n_scales, itemsize)
    hc = _choose_h_chunk(H, Wp, c_tile, itemsize)

    # Channels-last for the kernel (lane-dense). These two wrapper transposes
    # exist only to honor the module's NCHW contract; in a channels-last
    # network they disappear / fold into the neighboring convs.
    x_nhwc = jnp.transpose(x, (0, 2, 3, 1))

    kernel = functools.partial(
        _spp_kernel, radii=radii, pad=pad, W=W, Wp=Wp, hc=hc)
    out5 = pl.pallas_call(
        kernel,
        out_shape=jax.ShapeDtypeStruct((N, n_scales, H, W, C), x.dtype),
        grid=(N, C // c_tile),
        in_specs=[
            pl.BlockSpec((None, H, W, c_tile), lambda n, c: (n, 0, 0, c)),
        ],
        out_specs=pl.BlockSpec(
            (None, n_scales, H, W, c_tile), lambda n, c: (n, 0, 0, 0, c)),
        scratch_shapes=[
            pltpu.VMEM((H + 2 * pad, Wp, c_tile), x.dtype),
        ],
        compiler_params=pltpu.CompilerParams(
            dimension_semantics=("parallel", "parallel"),
            vmem_limit_bytes=32 * 1024 * 1024),
    )(x_nhwc)

    # (N, S, H, W, C) -> (N, S, C, H, W) -> (N, S*C, H, W): matches torch.cat(dim=1).
    return jnp.transpose(out5, (0, 1, 4, 2, 3)).reshape(N, n_scales * C, H, W)


def spp_reference(x, scales=SCALES):
    """Pure-JAX reference matching PyTorch MaxPool2d(stride=1, padding=s//2)."""
    outs = []
    for s in scales:
        p = s // 2
        outs.append(lax.reduce_window(
            x, -jnp.inf, lax.max,
            window_dimensions=(1, 1, s, s),
            window_strides=(1, 1, 1, 1),
            padding=((0, 0), (0, 0), (p, p), (p, p))))
    return jnp.concatenate(outs, axis=1)


if __name__ == "__main__":
    key = jax.random.PRNGKey(0)
    # SPP has no learnable parameters; input is an NCHW conv feature map.
    x = jax.random.normal(key, (2, 4, 16, 16), dtype=jnp.float32)

    out = jax.block_until_ready(spp(x))
    ref = spp_reference(x)

    assert out.shape == (2, 4 * len(SCALES), 16, 16), out.shape
    assert jnp.allclose(out, ref, atol=1e-6), float(jnp.max(jnp.abs(out - ref)))
    print("KERNEL_OK")
</pallas_src>

<mosaic_0001>
module attributes {stable_mosaic.version = 11 : i64} {
  func.func @_spp_kernel(%arg0: i32, %arg1: i32, %arg2: memref<1x16x16x4xf32, #tpu.memory_space<vmem>>, %arg3: memref<1x4x16x16x4xf32, #tpu.memory_space<vmem>>, %arg4: memref<20x24x4xf32, #tpu.memory_space<vmem>>) attributes {dimension_semantics = [#tpu.dimension_semantics<parallel>, #tpu.dimension_semantics<parallel>], iteration_bounds = array<i64: 2, 1>, scalar_prefetch = 0 : i64, scratch_operands = 1 : i64, tpu.core_type = #tpu.core_type<tc>, window_params = [{transform_indices = @transform_0, window_bounds = array<i64: 1, 16, 16, 4>}, {transform_indices = @transform_1, window_bounds = array<i64: 1, 4, 16, 16, 4>}]} {
    %cst = arith.constant 0xFF800000 : f32
    %0 = vector.broadcast %cst : f32 to vector<2x24x4xf32>
    %c0 = arith.constant 0 : index
    %c0_0 = arith.constant 0 : index
    %c0_1 = arith.constant 0 : index
    %1 = vector.load %arg4[%c0, %c0_0, %c0_1] : memref<20x24x4xf32, #tpu.memory_space<vmem>>, vector<2x24x4xf32>
    tpu.vector_store %arg4[%c0, %c0_0, %c0_1], %0 {strides = array<i32>} : memref<20x24x4xf32, #tpu.memory_space<vmem>>, vector<2x24x4xf32>,
    %cst_2 = arith.constant 0xFF800000 : f32
    %2 = vector.broadcast %cst_2 : f32 to vector<2x24x4xf32>
    %c18 = arith.constant 18 : index
    %c0_3 = arith.constant 0 : index
    %c0_4 = arith.constant 0 : index
    %3 = vector.load %arg4[%c18, %c0_3, %c0_4] : memref<20x24x4xf32, #tpu.memory_space<vmem>>, vector<2x24x4xf32>
    tpu.vector_store %arg4[%c18, %c0_3, %c0_4], %2 {strides = array<i32>} : memref<20x24x4xf32, #tpu.memory_space<vmem>>, vector<2x24x4xf32>,
    %cst_5 = arith.constant 0xFF800000 : f32
    %4 = vector.broadcast %cst_5 : f32 to vector<16x2x4xf32>
    %c2 = arith.constant 2 : index
    %c0_6 = arith.constant 0 : index
    %c0_7 = arith.constant 0 : index
    %5 = vector.load %arg4[%c2, %c0_6, %c0_7] : memref<20x24x4xf32, #tpu.memory_space<vmem>>, vector<16x2x4xf32>
    tpu.vector_store %arg4[%c2, %c0_6, %c0_7], %4 {strides = array<i32>} : memref<20x24x4xf32, #tpu.memory_space<vmem>>, vector<16x2x4xf32>,
    %cst_8 = arith.constant 0xFF800000 : f32
    %6 = vector.broadcast %cst_8 : f32 to vector<16x6x4xf32>
    %c2_9 = arith.constant 2 : index
    %c18_10 = arith.constant 18 : index
    %c0_11 = arith.constant 0 : index
    %7 = vector.load %arg4[%c2_9, %c18_10, %c0_11] : memref<20x24x4xf32, #tpu.memory_space<vmem>>, vector<16x6x4xf32>
    tpu.vector_store %arg4[%c2_9, %c18_10, %c0_11], %6 {strides = array<i32>} : memref<20x24x4xf32, #tpu.memory_space<vmem>>, vector<16x6x4xf32>,
    %c0_12 = arith.constant 0 : index
    %c0_13 = arith.constant 0 : index
    %c0_14 = arith.constant 0 : index
    %c0_15 = arith.constant 0 : index
    %8 = vector.load %arg2[%c0_12, %c0_13, %c0_14, %c0_15] : memref<1x16x16x4xf32, #tpu.memory_space<vmem>>, vector<1x4x16x4xf32>
    %9 = vector.shape_cast %8 : vector<1x4x16x4xf32> to vector<4x16x4xf32>
    %c0_16 = arith.constant 0 : index
    %c0_17 = arith.constant 0 : index
    %c0_18 = arith.constant 0 : index
    %c0_19 = arith.constant 0 : index
    %c0_20 = arith.constant 0 : index
    %10 = vector.load %arg3[%c0_16, %c0_17, %c0_18, %c0_19, %c0_20] : memref<1x4x16x16x4xf32, #tpu.memory_space<vmem>>, vector<1x1x4x16x4xf32>
    %11 = vector.shape_cast %10 : vector<1x1x4x16x4xf32> to vector<4x16x4xf32>
    %12 = vector.shape_cast %9 : vector<4x16x4xf32> to vector<1x1x4x16x4xf32>
    tpu.vector_store %arg3[%c0_16, %c0_17, %c0_18, %c0_19, %c0_20], %12 {strides = array<i32>} : memref<1x4x16x16x4xf32, #tpu.memory_space<vmem>>, vector<1x1x4x16x4xf32>,
    %c0_21 = arith.constant 0 : index
    %c4 = arith.constant 4 : index
    %c0_22 = arith.constant 0 : index
    %c0_23 = arith.constant 0 : index
    %13 = vector.load %arg2[%c0_21, %c4, %c0_22, %c0_23] : memref<1x16x16x4xf32, #tpu.memory_space<vmem>>, vector<1x4x16x4xf32>
    %14 = vector.shape_cast %13 : vector<1x4x16x4xf32> to vector<4x16x4xf32>
    %c0_24 = arith.constant 0 : index
    %c0_25 = arith.constant 0 : index
    %c4_26 = arith.constant 4 : index
    %c0_27 = arith.constant 0 : index
    %c0_28 = arith.constant 0 : index
    %15 = vector.load %arg3[%c0_24, %c0_25, %c4_26, %c0_27, %c0_28] : memref<1x4x16x16x4xf32, #tpu.memory_space<vmem>>, vector<1x1x4x16x4xf32>
    %16 = vector.shape_cast %15 : vector<1x1x4x16x4xf32> to vector<4x16x4xf32>
    %17 = vector.shape_cast %14 : vector<4x16x4xf32> to vector<1x1x4x16x4xf32>
    tpu.vector_store %arg3[%c0_24, %c0_25, %c4_26, %c0_27, %c0_28], %17 {strides = array<i32>} : memref<1x4x16x16x4xf32, #tpu.memory_space<vmem>>, vector<1x1x4x16x4xf32>,
    %c0_29 = arith.constant 0 : index
    %c8 = arith.constant 8 : index
    %c0_30 = arith.constant 0 : index
    %c0_31 = arith.constant 0 : index
    %18 = vector.load %arg2[%c0_29, %c8, %c0_30, %c0_31] : memref<1x16x16x4xf32, #tpu.memory_space<vmem>>, vector<1x4x16x4xf32>
    %19 = vector.shape_cast %18 : vector<1x4x16x4xf32> to vector<4x16x4xf32>
    %c0_32 = arith.constant 0 : index
    %c0_33 = arith.constant 0 : index
    %c8_34 = arith.constant 8 : index
    %c0_35 = arith.constant 0 : index
    %c0_36 = arith.constant 0 : index
    %20 = vector.load %arg3[%c0_32, %c0_33, %c8_34, %c0_35, %c0_36] : memref<1x4x16x16x4xf32, #tpu.memory_space<vmem>>, vector<1x1x4x16x4xf32>
    %21 = vector.shape_cast %20 : vector<1x1x4x16x4xf32> to vector<4x16x4xf32>
    %22 = vector.shape_cast %19 : vector<4x16x4xf32> to vector<1x1x4x16x4xf32>
    tpu.vector_store %arg3[%c0_32, %c0_33, %c8_34, %c0_35, %c0_36], %22 {strides = array<i32>} : memref<1x4x16x16x4xf32, #tpu.memory_space<vmem>>, vector<1x1x4x16x4xf32>,
    %c0_37 = arith.constant 0 : index
    %c12 = arith.constant 12 : index
    %c0_38 = arith.constant 0 : index
    %c0_39 = arith.constant 0 : index
    %23 = vector.load %arg2[%c0_37, %c12, %c0_38, %c0_39] : memref<1x16x16x4xf32, #tpu.memory_space<vmem>>, vector<1x4x16x4xf32>
    %24 = vector.shape_cast %23 : vector<1x4x16x4xf32> to vector<4x16x4xf32>
    %c0_40 = arith.constant 0 : index
    %c0_41 = arith.constant 0 : index
    %c12_42 = arith.constant 12 : index
    %c0_43 = arith.constant 0 : index
    %c0_44 = arith.constant 0 : index
    %25 = vector.load %arg3[%c0_40, %c0_41, %c12_42, %c0_43, %c0_44] : memref<1x4x16x16x4xf32, #tpu.memory_space<vmem>>, vector<1x1x4x16x4xf32>
    %26 = vector.shape_cast %25 : vector<1x1x4x16x4xf32> to vector<4x16x4xf32>
    %27 = vector.shape_cast %24 : vector<4x16x4xf32> to vector<1x1x4x16x4xf32>
    tpu.vector_store %arg3[%c0_40, %c0_41, %c12_42, %c0_43, %c0_44], %27 {strides = array<i32>} : memref<1x4x16x16x4xf32, #tpu.memory_space<vmem>>, vector<1x1x4x16x4xf32>,
    %c0_45 = arith.constant 0 : index
    %c0_46 = arith.constant 0 : index
    %c0_47 = arith.constant 0 : index
    %c0_48 = arith.constant 0 : index
    %28 = vector.load %arg2[%c0_45, %c0_46, %c0_47, %c0_48] : memref<1x16x16x4xf32, #tpu.memory_space<vmem>>, vector<1x4x16x4xf32>
    %29 = vector.shape_cast %28 : vector<1x4x16x4xf32> to vector<4x16x4xf32>
    %c2_49 = arith.constant 2 : index
    %c2_50 = arith.constant 2 : index
    %c0_51 = arith.constant 0 : index
    %30 = vector.load %arg4[%c2_49, %c2_50, %c0_51] : memref<20x24x4xf32, #tpu.memory_space<vmem>>, vector<4x16x4xf32>
    tpu.vector_store %arg4[%c2_49, %c2_50, %c0_51], %29 {strides = array<i32>} : memref<20x24x4xf32, #tpu.memory_space<vmem>>, vector<4x16x4xf32>,
    %c0_52 = arith.constant 0 : index
    %c4_53 = arith.constant 4 : index
    %c0_54 = arith.constant 0 : index
    %c0_55 = arith.constant 0 : index
    %31 = vector.load %arg2[%c0_52, %c4_53, %c0_54, %c0_55] : memref<1x16x16x4xf32, #tpu.memory_space<vmem>>, vector<1x4x16x4xf32>
    %32 = vector.shape_cast %31 : vector<1x4x16x4xf32> to vector<4x16x4xf32>
    %c6 = arith.constant 6 : index
    %c2_56 = arith.constant 2 : index
    %c0_57 = arith.constant 0 : index
    %33 = vector.load %arg4[%c6, %c2_56, %c0_57] : memref<20x24x4xf32, #tpu.memory_space<vmem>>, vector<4x16x4xf32>
    tpu.vector_store %arg4[%c6, %c2_56, %c0_57], %32 {strides = array<i32>} : memref<20x24x4xf32, #tpu.memory_space<vmem>>, vector<4x16x4xf32>,
    %c0_58 = arith.constant 0 : index
    %c8_59 = arith.constant 8 : index
    %c0_60 = arith.constant 0 : index
    %c0_61 = arith.constant 0 : index
    %34 = vector.load %arg2[%c0_58, %c8_59, %c0_60, %c0_61] : memref<1x16x16x4xf32, #tpu.memory_space<vmem>>, vector<1x4x16x4xf32>
    %35 = vector.shape_cast %34 : vector<1x4x16x4xf32> to vector<4x16x4xf32>
    %c10 = arith.constant 10 : index
    %c2_62 = arith.constant 2 : index
    %c0_63 = arith.constant 0 : index
    %36 = vector.load %arg4[%c10, %c2_62, %c0_63] : memref<20x24x4xf32, #tpu.memory_space<vmem>>, vector<4x16x4xf32>
    tpu.vector_store %arg4[%c10, %c2_62, %c0_63], %35 {strides = array<i32>} : memref<20x24x4xf32, #tpu.memory_space<vmem>>, vector<4x16x4xf32>,
    %c0_64 = arith.constant 0 : index
    %c12_65 = arith.constant 12 : index
    %c0_66 = arith.constant 0 : index
    %c0_67 = arith.constant 0 : index
    %37 = vector.load %arg2[%c0_64, %c12_65, %c0_66, %c0_67] : memref<1x16x16x4xf32, #tpu.memory_space<vmem>>, vector<1x4x16x4xf32>
    %38 = vector.shape_cast %37 : vector<1x4x16x4xf32> to vector<4x16x4xf32>
    %c14 = arith.constant 14 : index
    %c2_68 = arith.constant 2 : index
    %c0_69 = arith.constant 0 : index
    %39 = vector.load %arg4[%c14, %c2_68, %c0_69] : memref<20x24x4xf32, #tpu.memory_space<vmem>>, vector<4x16x4xf32>
    tpu.vector_store %arg4[%c14, %c2_68, %c0_69], %38 {strides = array<i32>} : memref<20x24x4xf32, #tpu.memory_space<vmem>>, vector<4x16x4xf32>,
    %c0_70 = arith.constant 0 : index
    %c0_71 = arith.constant 0 : index
    %c0_72 = arith.constant 0 : index
    %40 = vector.load %arg4[%c0_70, %c0_71, %c0_72] : memref<20x24x4xf32, #tpu.memory_space<vmem>>, vector<4x24x4xf32>
    %c1 = arith.constant 1 : index
    %c0_73 = arith.constant 0 : index
    %c0_74 = arith.constant 0 : index
    %41 = vector.load %arg4[%c1, %c0_73, %c0_74] : memref<20x24x4xf32, #tpu.memory_space<vmem>>, vector<4x24x4xf32>
    %42 = arith.maximumf %40, %41 : vector<4x24x4xf32>
    %c2_75 = arith.constant 2 : index
    %c0_76 = arith.constant 0 : index
    %c0_77 = arith.constant 0 : index
    %43 = vector.load %arg4[%c2_75, %c0_76, %c0_77] : memref<20x24x4xf32, #tpu.memory_space<vmem>>, vector<4x24x4xf32>
    %44 = arith.maximumf %42, %43 : vector<4x24x4xf32>
    %c3 = arith.constant 3 : index
    %c0_78 = arith.constant 0 : index
    %c0_79 = arith.constant 0 : index
    %45 = vector.load %arg4[%c3, %c0_78, %c0_79] : memref<20x24x4xf32, #tpu.memory_space<vmem>>, vector<4x24x4xf32>
    %46 = arith.maximumf %44, %45 : vector<4x24x4xf32>
    %c4_80 = arith.constant 4 : index
    %c0_81 = arith.constant 0 : index
    %c0_82 = arith.constant 0 : index
    %47 = vector.load %arg4[%c4_80, %c0_81, %c0_82] : memref<20x24x4xf32, #tpu.memory_space<vmem>>, vector<4x24x4xf32>
    %48 = arith.maximumf %46, %47 : vector<4x24x4xf32>
    %49 = vector.extract_strided_slice %48 {offsets = [0, 0, 0], sizes = [4, 16, 4], strides = [1, 1, 1]} : vector<4x24x4xf32> to vector<4x16x4xf32>
    %50 = vector.extract_strided_slice %48 {offsets = [0, 1, 0], sizes = [4, 16, 4], strides = [1, 1, 1]} : vector<4x24x4xf32> to vector<4x16x4xf32>
    %51 = arith.maximumf %49, %50 : vector<4x16x4xf32>
    %52 = vector.extract_strided_slice %48 {offsets = [0, 2, 0], sizes = [4, 16, 4], strides = [1, 1, 1]} : vector<4x24x4xf32> to vector<4x16x4xf32>
    %53 = arith.maximumf %51, %52 : vector<4x16x4xf32>
    %54 = vector.extract_strided_slice %48 {offsets = [0, 3, 0], sizes = [4, 16, 4], strides = [1, 1, 1]} : vector<4x24x4xf32> to vector<4x16x4xf32>
    %55 = arith.maximumf %53, %54 : vector<4x16x4xf32>
    %56 = vector.extract_strided_slice %48 {offsets = [0, 4, 0], sizes = [4, 16, 4], strides = [1, 1, 1]} : vector<4x24x4xf32> to vector<4x16x4xf32>
    %57 = arith.maximumf %55, %56 : vector<4x16x4xf32>
    %c0_83 = arith.constant 0 : index
    %c1_84 = arith.constant 1 : index
    %c0_85 = arith.constant 0 : index
    %c0_86 = arith.constant 0 : index
    %c0_87 = arith.constant 0 : index
    %58 = vector.load %arg3[%c0_83, %c1_84, %c0_85, %c0_86, %c0_87] : memref<1x4x16x16x4xf32, #tpu.memory_space<vmem>>, vector<1x1x4x16x4xf32>
    %59 = vector.shape_cast %58 : vector<1x1x4x16x4xf32> to vector<4x16x4xf32>
    %60 = vector.shape_cast %57 : vector<4x16x4xf32> to vector<1x1x4x16x4xf32>
    tpu.vector_store %arg3[%c0_83, %c1_84, %c0_85, %c0_86, %c0_87], %60 {strides = array<i32>} : memref<1x4x16x16x4xf32, #tpu.memory_space<vmem>>, vector<1x1x4x16x4xf32>,
    %c4_88 = arith.constant 4 : index
    %c0_89 = arith.constant 0 : index
    %c0_90 = arith.constant 0 : index
    %61 = vector.load %arg4[%c4_88, %c0_89, %c0_90] : memref<20x24x4xf32, #tpu.memory_space<vmem>>, vector<4x24x4xf32>
    %c5 = arith.constant 5 : index
    %c0_91 = arith.constant 0 : index
    %c0_92 = arith.constant 0 : index
    %62 = vector.load %arg4[%c5, %c0_91, %c0_92] : memref<20x24x4xf32, #tpu.memory_space<vmem>>, vector<4x24x4xf32>
    %63 = arith.maximumf %61, %62 : vector<4x24x4xf32>
    %c6_93 = arith.constant 6 : index
    %c0_94 = arith.constant 0 : index
    %c0_95 = arith.constant 0 : index
    %64 = vector.load %arg4[%c6_93, %c0_94, %c0_95] : memref<20x24x4xf32, #tpu.memory_space<vmem>>, vector<4x24x4xf32>
    %65 = arith.maximumf %63, %64 : vector<4x24x4xf32>
    %c7 = arith.constant 7 : index
    %c0_96 = arith.constant 0 : index
    %c0_97 = arith.constant 0 : index
    %66 = vector.load %arg4[%c7, %c0_96, %c0_97] : memref<20x24x4xf32, #tpu.memory_space<vmem>>, vector<4x24x4xf32>
    %67 = arith.maximumf %65, %66 : vector<4x24x4xf32>
    %c8_98 = arith.constant 8 : index
    %c0_99 = arith.constant 0 : index
    %c0_100 = arith.constant 0 : index
    %68 = vector.load %arg4[%c8_98, %c0_99, %c0_100] : memref<20x24x4xf32, #tpu.memory_space<vmem>>, vector<4x24x4xf32>
    %69 = arith.maximumf %67, %68 : vector<4x24x4xf32>
    %70 = vector.extract_strided_slice %69 {offsets = [0, 0, 0], sizes = [4, 16, 4], strides = [1, 1, 1]} : vector<4x24x4xf32> to vector<4x16x4xf32>
    %71 = vector.extract_strided_slice %69 {offsets = [0, 1, 0], sizes = [4, 16, 4], strides = [1, 1, 1]} : vector<4x24x4xf32> to vector<4x16x4xf32>
    %72 = arith.maximumf %70, %71 : vector<4x16x4xf32>
    %73 = vector.extract_strided_slice %69 {offsets = [0, 2, 0], sizes = [4, 16, 4], strides = [1, 1, 1]} : vector<4x24x4xf32> to vector<4x16x4xf32>
    %74 = arith.maximumf %72, %73 : vector<4x16x4xf32>
    %75 = vector.extract_strided_slice %69 {offsets = [0, 3, 0], sizes = [4, 16, 4], strides = [1, 1, 1]} : vector<4x24x4xf32> to vector<4x16x4xf32>
    %76 = arith.maximumf %74, %75 : vector<4x16x4xf32>
    %77 = vector.extract_strided_slice %69 {offsets = [0, 4, 0], sizes = [4, 16, 4], strides = [1, 1, 1]} : vector<4x24x4xf32> to vector<4x16x4xf32>
    %78 = arith.maximumf %76, %77 : vector<4x16x4xf32>
    %c0_101 = arith.constant 0 : index
    %c1_102 = arith.constant 1 : index
    %c4_103 = arith.constant 4 : index
    %c0_104 = arith.constant 0 : index
    %c0_105 = arith.constant 0 : index
    %79 = vector.load %arg3[%c0_101, %c1_102, %c4_103, %c0_104, %c0_105] : memref<1x4x16x16x4xf32, #tpu.memory_space<vmem>>, vector<1x1x4x16x4xf32>
    %80 = vector.shape_cast %79 : vector<1x1x4x16x4xf32> to vector<4x16x4xf32>
    %81 = vector.shape_cast %78 : vector<4x16x4xf32> to vector<1x1x4x16x4xf32>
    tpu.vector_store %arg3[%c0_101, %c1_102, %c4_103, %c0_104, %c0_105], %81 {strides = array<i32>} : memref<1x4x16x16x4xf32, #tpu.memory_space<vmem>>, vector<1x1x4x16x4xf32>,
    %c8_106 = arith.constant 8 : index
    %c0_107 = arith.constant 0 : index
    %c0_108 = arith.constant 0 : index
    %82 = vector.load %arg4[%c8_106, %c0_107, %c0_108] : memref<20x24x4xf32, #tpu.memory_space<vmem>>, vector<4x24x4xf32>
    %c9 = arith.constant 9 : index
    %c0_109 = arith.constant 0 : index
    %c0_110 = arith.constant 0 : index
    %83 = vector.load %arg4[%c9, %c0_109, %c0_110] : memref<20x24x4xf32, #tpu.memory_space<vmem>>, vector<4x24x4xf32>
    %84 = arith.maximumf %82, %83 : vector<4x24x4xf32>
    %c10_111 = arith.constant 10 : index
    %c0_112 = arith.constant 0 : index
    %c0_113 = arith.constant 0 : index
    %85 = vector.load %arg4[%c10_111, %c0_112, %c0_113] : memref<20x24x4xf32, #tpu.memory_space<vmem>>, vector<4x24x4xf32>
    %86 = arith.maximumf %84, %85 : vector<4x24x4xf32>
    %c11 = arith.constant 11 : index
    %c0_114 = arith.constant 0 : index
    %c0_115 = arith.constant 0 : index
    %87 = vector.load %arg4[%c11, %c0_114, %c0_115] : memref<20x24x4xf32, #tpu.memory_space<vmem>>, vector<4x24x4xf32>
    %88 = arith.maximumf %86, %87 : vector<4x24x4xf32>
    %c12_116 = arith.constant 12 : index
    %c0_117 = arith.constant 0 : index
    %c0_118 = arith.constant 0 : index
    %89 = vector.load %arg4[%c12_116, %c0_117, %c0_118] : memref<20x24x4xf32, #tpu.memory_space<vmem>>, vector<4x24x4xf32>
    %90 = arith.maximumf %88, %89 : vector<4x24x4xf32>
    %91 = vector.extract_strided_slice %90 {offsets = [0, 0, 0], sizes = [4, 16, 4], strides = [1, 1, 1]} : vector<4x24x4xf32> to vector<4x16x4xf32>
    %92 = vector.extract_strided_slice %90 {offsets = [0, 1, 0], sizes = [4, 16, 4], strides = [1, 1, 1]} : vector<4x24x4xf32> to vector<4x16x4xf32>
    %93 = arith.maximumf %91, %92 : vector<4x16x4xf32>
    %94 = vector.extract_strided_slice %90 {offsets = [0, 2, 0], sizes = [4, 16, 4], strides = [1, 1, 1]} : vector<4x24x4xf32> to vector<4x16x4xf32>
    %95 = arith.maximumf %93, %94 : vector<4x16x4xf32>
    %96 = vector.extract_strided_slice %90 {offsets = [0, 3, 0], sizes = [4, 16, 4], strides = [1, 1, 1]} : vector<4x24x4xf32> to vector<4x16x4xf32>
    %97 = arith.maximumf %95, %96 : vector<4x16x4xf32>
    %98 = vector.extract_strided_slice %90 {offsets = [0, 4, 0], sizes = [4, 16, 4], strides = [1, 1, 1]} : vector<4x24x4xf32> to vector<4x16x4xf32>
    %99 = arith.maximumf %97, %98 : vector<4x16x4xf32>
    %c0_119 = arith.constant 0 : index
    %c1_120 = arith.constant 1 : index
    %c8_121 = arith.constant 8 : index
    %c0_122 = arith.constant 0 : index
    %c0_123 = arith.constant 0 : index
    %100 = vector.load %arg3[%c0_119, %c1_120, %c8_121, %c0_122, %c0_123] : memref<1x4x16x16x4xf32, #tpu.memory_space<vmem>>, vector<1x1x4x16x4xf32>
    %101 = vector.shape_cast %100 : vector<1x1x4x16x4xf32> to vector<4x16x4xf32>
    %102 = vector.shape_cast %99 : vector<4x16x4xf32> to vector<1x1x4x16x4xf32>
    tpu.vector_store %arg3[%c0_119, %c1_120, %c8_121, %c0_122, %c0_123], %102 {strides = array<i32>} : memref<1x4x16x16x4xf32, #tpu.memory_space<vmem>>, vector<1x1x4x16x4xf32>,
    %c12_124 = arith.constant 12 : index
    %c0_125 = arith.constant 0 : index
    %c0_126 = arith.constant 0 : index
    %103 = vector.load %arg4[%c12_124, %c0_125, %c0_126] : memref<20x24x4xf32, #tpu.memory_space<vmem>>, vector<4x24x4xf32>
    %c13 = arith.constant 13 : index
    %c0_127 = arith.constant 0 : index
    %c0_128 = arith.constant 0 : index
    %104 = vector.load %arg4[%c13, %c0_127, %c0_128] : memref<20x24x4xf32, #tpu.memory_space<vmem>>, vector<4x24x4xf32>
    %105 = arith.maximumf %103, %104 : vector<4x24x4xf32>
    %c14_129 = arith.constant 14 : index
    %c0_130 = arith.constant 0 : index
    %c0_131 = arith.constant 0 : index
    %106 = vector.load %arg4[%c14_129, %c0_130, %c0_131] : memref<20x24x4xf32, #tpu.memory_space<vmem>>, vector<4x24x4xf32>
    %107 = arith.maximumf %105, %106 : vector<4x24x4xf32>
    %c15 = arith.constant 15 : index
    %c0_132 = arith.constant 0 : index
    %c0_133 = arith.constant 0 : index
    %108 = vector.load %arg4[%c15, %c0_132, %c0_133] : memref<20x24x4xf32, #tpu.memory_space<vmem>>, vector<4x24x4xf32>
    %109 = arith.maximumf %107, %108 : vector<4x24x4xf32>
    %c16 = arith.constant 16 : index
    %c0_134 = arith.constant 0 : index
    %c0_135 = arith.constant 0 : index
    %110 = vector.load %arg4[%c16, %c0_134, %c0_135] : memref<20x24x4xf32, #tpu.memory_space<vmem>>, vector<4x24x4xf32>
    %111 = arith.maximumf %109, %110 : vector<4x24x4xf32>
    %112 = vector.extract_strided_slice %111 {offsets = [0, 0, 0], sizes = [4, 16, 4], strides = [1, 1, 1]} : vector<4x24x4xf32> to vector<4x16x4xf32>
    %113 = vector.extract_strided_slice %111 {offsets = [0, 1, 0], sizes = [4, 16, 4], strides = [1, 1, 1]} : vector<4x24x4xf32> to vector<4x16x4xf32>
    %114 = arith.maximumf %112, %113 : vector<4x16x4xf32>
    %115 = vector.extract_strided_slice %111 {offsets = [0, 2, 0], sizes = [4, 16, 4], strides = [1, 1, 1]} : vector<4x24x4xf32> to vector<4x16x4xf32>
    %116 = arith.maximumf %114, %115 : vector<4x16x4xf32>
    %117 = vector.extract_strided_slice %111 {offsets = [0, 3, 0], sizes = [4, 16, 4], strides = [1, 1, 1]} : vector<4x24x4xf32> to vector<4x16x4xf32>
    %118 = arith.maximumf %116, %117 : vector<4x16x4xf32>
    %119 = vector.extract_strided_slice %111 {offsets = [0, 4, 0], sizes = [4, 16, 4], strides = [1, 1, 1]} : vector<4x24x4xf32> to vector<4x16x4xf32>
    %120 = arith.maximumf %118, %119 : vector<4x16x4xf32>
    %c0_136 = arith.constant 0 : index
    %c1_137 = arith.constant 1 : index
    %c12_138 = arith.constant 12 : index
    %c0_139 = arith.constant 0 : index
    %c0_140 = arith.constant 0 : index
    %121 = vector.load %arg3[%c0_136, %c1_137, %c12_138, %c0_139, %c0_140] : memref<1x4x16x16x4xf32, #tpu.memory_space<vmem>>, vector<1x1x4x16x4xf32>
    %122 = vector.shape_cast %121 : vector<1x1x4x16x4xf32> to vector<4x16x4xf32>
    %123 = vector.shape_cast %120 : vector<4x16x4xf32> to vector<1x1x4x16x4xf32>
    tpu.vector_store %arg3[%c0_136, %c1_137, %c12_138, %c0_139, %c0_140], %123 {strides = array<i32>} : memref<1x4x16x16x4xf32, #tpu.memory_space<vmem>>, vector<1x1x4x16x4xf32>,
    %c0_141 = arith.constant 0 : index
    %c1_142 = arith.constant 1 : index
    %c0_143 = arith.constant 0 : index
    %c0_144 = arith.constant 0 : index
    %c0_145 = arith.constant 0 : index
    %124 = vector.load %arg3[%c0_141, %c1_142, %c0_143, %c0_144, %c0_145] : memref<1x4x16x16x4xf32, #tpu.memory_space<vmem>>, vector<1x1x4x16x4xf32>
    %125 = vector.shape_cast %124 : vector<1x1x4x16x4xf32> to vector<4x16x4xf32>
    %c2_146 = arith.constant 2 : index
    %c2_147 = arith.constant 2 : index
    %c0_148 = arith.constant 0 : index
    %126 = vector.load %arg4[%c2_146, %c2_147, %c0_148] : memref<20x24x4xf32, #tpu.memory_space<vmem>>, vector<4x16x4xf32>
    tpu.vector_store %arg4[%c2_146, %c2_147, %c0_148], %125 {strides = array<i32>} : memref<20x24x4xf32, #tpu.memory_space<vmem>>, vector<4x16x4xf32>,
    %c0_149 = arith.constant 0 : index
    %c1_150 = arith.constant 1 : index
    %c4_151 = arith.constant 4 : index
    %c0_152 = arith.constant 0 : index
    %c0_153 = arith.constant 0 : index
    %127 = vector.load %arg3[%c0_149, %c1_150, %c4_151, %c0_152, %c0_153] : memref<1x4x16x16x4xf32, #tpu.memory_space<vmem>>, vector<1x1x4x16x4xf32>
    %128 = vector.shape_cast %127 : vector<1x1x4x16x4xf32> to vector<4x16x4xf32>
    %c6_154 = arith.constant 6 : index
    %c2_155 = arith.constant 2 : index
    %c0_156 = arith.constant 0 : index
    %129 = vector.load %arg4[%c6_154, %c2_155, %c0_156] : memref<20x24x4xf32, #tpu.memory_space<vmem>>, vector<4x16x4xf32>
    tpu.vector_store %arg4[%c6_154, %c2_155, %c0_156], %128 {strides = array<i32>} : memref<20x24x4xf32, #tpu.memory_space<vmem>>, vector<4x16x4xf32>,
    %c0_157 = arith.constant 0 : index
    %c1_158 = arith.constant 1 : index
    %c8_159 = arith.constant 8 : index
    %c0_160 = arith.constant 0 : index
    %c0_161 = arith.constant 0 : index
    %130 = vector.load %arg3[%c0_157, %c1_158, %c8_159, %c0_160, %c0_161] : memref<1x4x16x16x4xf32, #tpu.memory_space<vmem>>, vector<1x1x4x16x4xf32>
    %131 = vector.shape_cast %130 : vector<1x1x4x16x4xf32> to vector<4x16x4xf32>
    %c10_162 = arith.constant 10 : index
    %c2_163 = arith.constant 2 : index
    %c0_164 = arith.constant 0 : index
    %132 = vector.load %arg4[%c10_162, %c2_163, %c0_164] : memref<20x24x4xf32, #tpu.memory_space<vmem>>, vector<4x16x4xf32>
    tpu.vector_store %arg4[%c10_162, %c2_163, %c0_164], %131 {strides = array<i32>} : memref<20x24x4xf32, #tpu.memory_space<vmem>>, vector<4x16x4xf32>,
    %c0_165 = arith.constant 0 : index
    %c1_166 = arith.constant 1 : index
    %c12_167 = arith.constant 12 : index
    %c0_168 = arith.constant 0 : index
    %c0_169 = arith.constant 0 : index
    %133 = vector.load %arg3[%c0_165, %c1_166, %c12_167, %c0_168, %c0_169] : memref<1x4x16x16x4xf32, #tpu.memory_space<vmem>>, vector<1x1x4x16x4xf32>
    %134 = vector.shape_cast %133 : vector<1x1x4x16x4xf32> to vector<4x16x4xf32>
    %c14_170 = arith.constant 14 : index
    %c2_171 = arith.constant 2 : index
    %c0_172 = arith.constant 0 : index
    %135 = vector.load %arg4[%c14_170, %c2_171, %c0_172] : memref<20x24x4xf32, #tpu.memory_space<vmem>>, vector<4x16x4xf32>
    tpu.vector_store %arg4[%c14_170, %c2_171, %c0_172], %134 {strides = array<i32>} : memref<20x24x4xf32, #tpu.memory_space<vmem>>, vector<4x16x4xf32>,
    %c0_173 = arith.constant 0 : index
    %c0_174 = arith.constant 0 : index
    %c0_175 = arith.constant 0 : index
    %136 = vector.load %arg4[%c0_173, %c0_174, %c0_175] : memref<20x24x4xf32, #tpu.memory_space<vmem>>, vector<4x24x4xf32>
    %c1_176 = arith.constant 1 : index
    %c0_177 = arith.constant 0 : index
    %c0_178 = arith.constant 0 : index
    %137 = vector.load %arg4[%c1_176, %c0_177, %c0_178] : memref<20x24x4xf32, #tpu.memory_space<vmem>>, vector<4x24x4xf32>
    %138 = arith.maximumf %136, %137 : vector<4x24x4xf32>
    %c2_179 = arith.constant 2 : index
    %c0_180 = arith.constant 0 : index
    %c0_181 = arith.constant 0 : index
    %139 = vector.load %arg4[%c2_179, %c0_180, %c0_181] : memref<20x24x4xf32, #tpu.memory_space<vmem>>, vector<4x24x4xf32>
    %140 = arith.maximumf %138, %139 : vector<4x24x4xf32>
    %c3_182 = arith.constant 3 : index
    %c0_183 = arith.constant 0 : index
    %c0_184 = arith.constant 0 : index
    %141 = vector.load %arg4[%c3_182, %c0_183, %c0_184] : memref<20x24x4xf32, #tpu.memory_space<vmem>>, vector<4x24x4xf32>
    %142 = arith.maximumf %140, %141 : vector<4x24x4xf32>
    %c4_185 = arith.constant 4 : index
    %c0_186 = arith.constant 0 : index
    %c0_187 = arith.constant 0 : index
    %143 = vector.load %arg4[%c4_185, %c0_186, %c0_187] : memref<20x24x4xf32, #tpu.memory_space<vmem>>, vector<4x24x4xf32>
    %144 = arith.maximumf %142, %143 : vector<4x24x4xf32>
    %145 = vector.extract_strided_slice %144 {offsets = [0, 0, 0], sizes = [4, 16, 4], strides = [1, 1, 1]} : vector<4x24x4xf32> to vector<4x16x4xf32>
    %146 = vector.extract_strided_slice %144 {offsets = [0, 1, 0], sizes = [4, 16, 4], strides = [1, 1, 1]} : vector<4x24x4xf32> to vector<4x16x4xf32>
    %147 = arith.maximumf %145, %146 : vector<4x16x4xf32>
    %148 = vector.extract_strided_slice %144 {offsets = [0, 2, 0], sizes = [4, 16, 4], strides = [1, 1, 1]} : vector<4x24x4xf32> to vector<4x16x4xf32>
    %149 = arith.maximumf %147, %148 : vector<4x16x4xf32>
    %150 = vector.extract_strided_slice %144 {offsets = [0, 3, 0], sizes = [4, 16, 4], strides = [1, 1, 1]} : vector<4x24x4xf32> to vector<4x16x4xf32>
    %151 = arith.maximumf %149, %150 : vector<4x16x4xf32>
    %152 = vector.extract_strided_slice %144 {offsets = [0, 4, 0], sizes = [4, 16, 4], strides = [1, 1, 1]} : vector<4x24x4xf32> to vector<4x16x4xf32>
    %153 = arith.maximumf %151, %152 : vector<4x16x4xf32>
    %c0_188 = arith.constant 0 : index
    %c2_189 = arith.constant 2 : index
    %c0_190 = arith.constant 0 : index
    %c0_191 = arith.constant 0 : index
    %c0_192 = arith.constant 0 : index
    %154 = vector.load %arg3[%c0_188, %c2_189, %c0_190, %c0_191, %c0_192] : memref<1x4x16x16x4xf32, #tpu.memory_space<vmem>>, vector<1x1x4x16x4xf32>
    %155 = vector.shape_cast %154 : vector<1x1x4x16x4xf32> to vector<4x16x4xf32>
    %156 = vector.shape_cast %153 : vector<4x16x4xf32> to vector<1x1x4x16x4xf32>
    tpu.vector_store %arg3[%c0_188, %c2_189, %c0_190, %c0_191, %c0_192], %156 {strides = array<i32>} : memref<1x4x16x16x4xf32, #tpu.memory_space<vmem>>, vector<1x1x4x16x4xf32>,
    %c4_193 = arith.constant 4 : index
    %c0_194 = arith.constant 0 : index
    %c0_195 = arith.constant 0 : index
    %157 = vector.load %arg4[%c4_193, %c0_194, %c0_195] : memref<20x24x4xf32, #tpu.memory_space<vmem>>, vector<4x24x4xf32>
    %c5_196 = arith.constant 5 : index
    %c0_197 = arith.constant 0 : index
    %c0_198 = arith.constant 0 : index
    %158 = vector.load %arg4[%c5_196, %c0_197, %c0_198] : memref<20x24x4xf32, #tpu.memory_space<vmem>>, vector<4x24x4xf32>
    %159 = arith.maximumf %157, %158 : vector<4x24x4xf32>
    %c6_199 = arith.constant 6 : index
    %c0_200 = arith.constant 0 : index
    %c0_201 = arith.constant 0 : index
    %160 = vector.load %arg4[%c6_199, %c0_200, %c0_201] : memref<20x24x4xf32, #tpu.memory_space<vmem>>, vector<4x24x4xf32>
    %161 = arith.maximumf %159, %160 : vector<4x24x4xf32>
    %c7_202 = arith.constant 7 : index
    %c0_203 = arith.constant 0 : index
    %c0_204 = arith.constant 0 : index
    %162 = vector.load %arg4[%c7_202, %c0_203, %c0_204] : memref<20x24x4xf32, #tpu.memory_space<vmem>>, vector<4x24x4xf32>
    %163 = arith.maximumf %161, %162 : vector<4x24x4xf32>
    %c8_205 = arith.constant 8 : index
    %c0_206 = arith.constant 0 : index
    %c0_207 = arith.constant 0 : index
    %164 = vector.load %arg4[%c8_205, %c0_206, %c0_207] : memref<20x24x4xf32, #tpu.memory_space<vmem>>, vector<4x24x4xf32>
    %165 = arith.maximumf %163, %164 : vector<4x24x4xf32>
    %166 = vector.extract_strided_slice %165 {offsets = [0, 0, 0], sizes = [4, 16, 4], strides = [1, 1, 1]} : vector<4x24x4xf32> to vector<4x16x4xf32>
    %167 = vector.extract_strided_slice %165 {offsets = [0, 1, 0], sizes = [4, 16, 4], strides = [1, 1, 1]} : vector<4x24x4xf32> to vector<4x16x4xf32>
    %168 = arith.maximumf %166, %167 : vector<4x16x4xf32>
    %169 = vector.extract_strided_slice %165 {offsets = [0, 2, 0], sizes = [4, 16, 4], strides = [1, 1, 1]} : vector<4x24x4xf32> to vector<4x16x4xf32>
    %170 = arith.maximumf %168, %169 : vector<4x16x4xf32>
    %171 = vector.extract_strided_slice %165 {offsets = [0, 3, 0], sizes = [4, 16, 4], strides = [1, 1, 1]} : vector<4x24x4xf32> to vector<4x16x4xf32>
    %172 = arith.maximumf %170, %171 : vector<4x16x4xf32>
    %173 = vector.extract_strided_slice %165 {offsets = [0, 4, 0], sizes = [4, 16, 4], strides = [1, 1, 1]} : vector<4x24x4xf32> to vector<4x16x4xf32>
    %174 = arith.maximumf %172, %173 : vector<4x16x4xf32>
    %c0_208 = arith.constant 0 : index
    %c2_209 = arith.constant 2 : index
    %c4_210 = arith.constant 4 : index
    %c0_211 = arith.constant 0 : index
    %c0_212 = arith.constant 0 : index
    %175 = vector.load %arg3[%c0_208, %c2_209, %c4_210, %c0_211, %c0_212] : memref<1x4x16x16x4xf32, #tpu.memory_space<vmem>>, vector<1x1x4x16x4xf32>
    %176 = vector.shape_cast %175 : vector<1x1x4x16x4xf32> to vector<4x16x4xf32>
    %177 = vector.shape_cast %174 : vector<4x16x4xf32> to vector<1x1x4x16x4xf32>
    tpu.vector_store %arg3[%c0_208, %c2_209, %c4_210, %c0_211, %c0_212], %177 {strides = array<i32>} : memref<1x4x16x16x4xf32, #tpu.memory_space<vmem>>, vector<1x1x4x16x4xf32>,
    %c8_213 = arith.constant 8 : index
    %c0_214 = arith.constant 0 : index
    %c0_215 = arith.constant 0 : index
    %178 = vector.load %arg4[%c8_213, %c0_214, %c0_215] : memref<20x24x4xf32, #tpu.memory_space<vmem>>, vector<4x24x4xf32>
    %c9_216 = arith.constant 9 : index
    %c0_217 = arith.constant 0 : index
    %c0_218 = arith.constant 0 : index
    %179 = vector.load %arg4[%c9_216, %c0_217, %c0_218] : memref<20x24x4xf32, #tpu.memory_space<vmem>>, vector<4x24x4xf32>
    %180 = arith.maximumf %178, %179 : vector<4x24x4xf32>
    %c10_219 = arith.constant 10 : index
    %c0_220 = arith.constant 0 : index
    %c0_221 = arith.constant 0 : index
    %181 = vector.load %arg4[%c10_219, %c0_220, %c0_221] : memref<20x24x4xf32, #tpu.memory_space<vmem>>, vector<4x24x4xf32>
    %182 = arith.maximumf %180, %181 : vector<4x24x4xf32>
    %c11_222 = arith.constant 11 : index
    %c0_223 = arith.constant 0 : index
    %c0_224 = arith.constant 0 : index
    %183 = vector.load %arg4[%c11_222, %c0_223, %c0_224] : memref<20x24x4xf32, #tpu.memory_space<vmem>>, vector<4x24x4xf32>
    %184 = arith.maximumf %182, %183 : vector<4x24x4xf32>
    %c12_225 = arith.constant 12 : index
    %c0_226 = arith.constant 0 : index
    %c0_227 = arith.constant 0 : index
    %185 = vector.load %arg4[%c12_225, %c0_226, %c0_227] : memref<20x24x4xf32, #tpu.memory_space<vmem>>, vector<4x24x4xf32>
    %186 = arith.maximumf %184, %185 : vector<4x24x4xf32>
    %187 = vector.extract_strided_slice %186 {offsets = [0, 0, 0], sizes = [4, 16, 4], strides = [1, 1, 1]} : vector<4x24x4xf32> to vector<4x16x4xf32>
    %188 = vector.extract_strided_slice %186 {offsets = [0, 1, 0], sizes = [4, 16, 4], strides = [1, 1, 1]} : vector<4x24x4xf32> to vector<4x16x4xf32>
    %189 = arith.maximumf %187, %188 : vector<4x16x4xf32>
    %190 = vector.extract_strided_slice %186 {offsets = [0, 2, 0], sizes = [4, 16, 4], strides = [1, 1, 1]} : vector<4x24x4xf32> to vector<4x16x4xf32>
    %191 = arith.maximumf %189, %190 : vector<4x16x4xf32>
    %192 = vector.extract_strided_slice %186 {offsets = [0, 3, 0], sizes = [4, 16, 4], strides = [1, 1, 1]} : vector<4x24x4xf32> to vector<4x16x4xf32>
    %193 = arith.maximumf %191, %192 : vector<4x16x4xf32>
    %194 = vector.extract_strided_slice %186 {offsets = [0, 4, 0], sizes = [4, 16, 4], strides = [1, 1, 1]} : vector<4x24x4xf32> to vector<4x16x4xf32>
    %195 = arith.maximumf %193, %194 : vector<4x16x4xf32>
    %c0_228 = arith.constant 0 : index
    %c2_229 = arith.constant 2 : index
    %c8_230 = arith.constant 8 : index
    %c0_231 = arith.constant 0 : index
    %c0_232 = arith.constant 0 : index
    %196 = vector.load %arg3[%c0_228, %c2_229, %c8_230, %c0_231, %c0_232] : memref<1x4x16x16x4xf32, #tpu.memory_space<vmem>>, vector<1x1x4x16x4xf32>
    %197 = vector.shape_cast %196 : vector<1x1x4x16x4xf32> to vector<4x16x4xf32>
    %198 = vector.shape_cast %195 : vector<4x16x4xf32> to vector<1x1x4x16x4xf32>
    tpu.vector_store %arg3[%c0_228, %c2_229, %c8_230, %c0_231, %c0_232], %198 {strides = array<i32>} : memref<1x4x16x16x4xf32, #tpu.memory_space<vmem>>, vector<1x1x4x16x4xf32>,
    %c12_233 = arith.constant 12 : index
    %c0_234 = arith.constant 0 : index
    %c0_235 = arith.constant 0 : index
    %199 = vector.load %arg4[%c12_233, %c0_234, %c0_235] : memref<20x24x4xf32, #tpu.memory_space<vmem>>, vector<4x24x4xf32>
    %c13_236 = arith.constant 13 : index
    %c0_237 = arith.constant 0 : index
    %c0_238 = arith.constant 0 : index
    %200 = vector.load %arg4[%c13_236, %c0_237, %c0_238] : memref<20x24x4xf32, #tpu.memory_space<vmem>>, vector<4x24x4xf32>
    %201 = arith.maximumf %199, %200 : vector<4x24x4xf32>
    %c14_239 = arith.constant 14 : index
    %c0_240 = arith.constant 0 : index
    %c0_241 = arith.constant 0 : index
    %202 = vector.load %arg4[%c14_239, %c0_240, %c0_241] : memref<20x24x4xf32, #tpu.memory_space<vmem>>, vector<4x24x4xf32>
    %203 = arith.maximumf %201, %202 : vector<4x24x4xf32>
    %c15_242 = arith.constant 15 : index
    %c0_243 = arith.constant 0 : index
    %c0_244 = arith.constant 0 : index
    %204 = vector.load %arg4[%c15_242, %c0_243, %c0_244] : memref<20x24x4xf32, #tpu.memory_space<vmem>>, vector<4x24x4xf32>
    %205 = arith.maximumf %203, %204 : vector<4x24x4xf32>
    %c16_245 = arith.constant 16 : index
    %c0_246 = arith.constant 0 : index
    %c0_247 = arith.constant 0 : index
    %206 = vector.load %arg4[%c16_245, %c0_246, %c0_247] : memref<20x24x4xf32, #tpu.memory_space<vmem>>, vector<4x24x4xf32>
    %207 = arith.maximumf %205, %206 : vector<4x24x4xf32>
    %208 = vector.extract_strided_slice %207 {offsets = [0, 0, 0], sizes = [4, 16, 4], strides = [1, 1, 1]} : vector<4x24x4xf32> to vector<4x16x4xf32>
    %209 = vector.extract_strided_slice %207 {offsets = [0, 1, 0], sizes = [4, 16, 4], strides = [1, 1, 1]} : vector<4x24x4xf32> to vector<4x16x4xf32>
    %210 = arith.maximumf %208, %209 : vector<4x16x4xf32>
    %211 = vector.extract_strided_slice %207 {offsets = [0, 2, 0], sizes = [4, 16, 4], strides = [1, 1, 1]} : vector<4x24x4xf32> to vector<4x16x4xf32>
    %212 = arith.maximumf %210, %211 : vector<4x16x4xf32>
    %213 = vector.extract_strided_slice %207 {offsets = [0, 3, 0], sizes = [4, 16, 4], strides = [1, 1, 1]} : vector<4x24x4xf32> to vector<4x16x4xf32>
    %214 = arith.maximumf %212, %213 : vector<4x16x4xf32>
    %215 = vector.extract_strided_slice %207 {offsets = [0, 4, 0], sizes = [4, 16, 4], strides = [1, 1, 1]} : vector<4x24x4xf32> to vector<4x16x4xf32>
    %216 = arith.maximumf %214, %215 : vector<4x16x4xf32>
    %c0_248 = arith.constant 0 : index
    %c2_249 = arith.constant 2 : index
    %c12_250 = arith.constant 12 : index
    %c0_251 = arith.constant 0 : index
    %c0_252 = arith.constant 0 : index
    %217 = vector.load %arg3[%c0_248, %c2_249, %c12_250, %c0_251, %c0_252] : memref<1x4x16x16x4xf32, #tpu.memory_space<vmem>>, vector<1x1x4x16x4xf32>
    %218 = vector.shape_cast %217 : vector<1x1x4x16x4xf32> to vector<4x16x4xf32>
    %219 = vector.shape_cast %216 : vector<4x16x4xf32> to vector<1x1x4x16x4xf32>
    tpu.vector_store %arg3[%c0_248, %c2_249, %c12_250, %c0_251, %c0_252], %219 {strides = array<i32>} : memref<1x4x16x16x4xf32, #tpu.memory_space<vmem>>, vector<1x1x4x16x4xf32>,
    %c0_253 = arith.constant 0 : index
    %c2_254 = arith.constant 2 : index
    %c0_255 = arith.constant 0 : index
    %c0_256 = arith.constant 0 : index
    %c0_257 = arith.constant 0 : index
    %220 = vector.load %arg3[%c0_253, %c2_254, %c0_255, %c0_256, %c0_257] : memref<1x4x16x16x4xf32, #tpu.memory_space<vmem>>, vector<1x1x4x16x4xf32>
    %221 = vector.shape_cast %220 : vector<1x1x4x16x4xf32> to vector<4x16x4xf32>
    %c2_258 = arith.constant 2 : index
    %c2_259 = arith.constant 2 : index
    %c0_260 = arith.constant 0 : index
    %222 = vector.load %arg4[%c2_258, %c2_259, %c0_260] : memref<20x24x4xf32, #tpu.memory_space<vmem>>, vector<4x16x4xf32>
    tpu.vector_store %arg4[%c2_258, %c2_259, %c0_260], %221 {strides = array<i32>} : memref<20x24x4xf32, #tpu.memory_space<vmem>>, vector<4x16x4xf32>,
    %c0_261 = arith.constant 0 : index
    %c2_262 = arith.constant 2 : index
    %c4_263 = arith.constant 4 : index
    %c0_264 = arith.constant 0 : index
    %c0_265 = arith.constant 0 : index
    %223 = vector.load %arg3[%c0_261, %c2_262, %c4_263, %c0_264, %c0_265] : memref<1x4x16x16x4xf32, #tpu.memory_space<vmem>>, vector<1x1x4x16x4xf32>
    %224 = vector.shape_cast %223 : vector<1x1x4x16x4xf32> to vector<4x16x4xf32>
    %c6_266 = arith.constant 6 : index
    %c2_267 = arith.constant 2 : index
    %c0_268 = arith.constant 0 : index
    %225 = vector.load %arg4[%c6_266, %c2_267, %c0_268] : memref<20x24x4xf32, #tpu.memory_space<vmem>>, vector<4x16x4xf32>
    tpu.vector_store %arg4[%c6_266, %c2_267, %c0_268], %224 {strides = array<i32>} : memref<20x24x4xf32, #tpu.memory_space<vmem>>, vector<4x16x4xf32>,
    %c0_269 = arith.constant 0 : index
    %c2_270 = arith.constant 2 : index
    %c8_271 = arith.constant 8 : index
    %c0_272 = arith.constant 0 : index
    %c0_273 = arith.constant 0 : index
    %226 = vector.load %arg3[%c0_269, %c2_270, %c8_271, %c0_272, %c0_273] : memref<1x4x16x16x4xf32, #tpu.memory_space<vmem>>, vector<1x1x4x16x4xf32>
    %227 = vector.shape_cast %226 : vector<1x1x4x16x4xf32> to vector<4x16x4xf32>
    %c10_274 = arith.constant 10 : index
    %c2_275 = arith.constant 2 : index
    %c0_276 = arith.constant 0 : index
    %228 = vector.load %arg4[%c10_274, %c2_275, %c0_276] : memref<20x24x4xf32, #tpu.memory_space<vmem>>, vector<4x16x4xf32>
    tpu.vector_store %arg4[%c10_274, %c2_275, %c0_276], %227 {strides = array<i32>} : memref<20x24x4xf32, #tpu.memory_space<vmem>>, vector<4x16x4xf32>,
    %c0_277 = arith.constant 0 : index
    %c2_278 = arith.constant 2 : index
    %c12_279 = arith.constant 12 : index
    %c0_280 = arith.constant 0 : index
    %c0_281 = arith.constant 0 : index
    %229 = vector.load %arg3[%c0_277, %c2_278, %c12_279, %c0_280, %c0_281] : memref<1x4x16x16x4xf32, #tpu.memory_space<vmem>>, vector<1x1x4x16x4xf32>
    %230 = vector.shape_cast %229 : vector<1x1x4x16x4xf32> to vector<4x16x4xf32>
    %c14_282 = arith.constant 14 : index
    %c2_283 = arith.constant 2 : index
    %c0_284 = arith.constant 0 : index
    %231 = vector.load %arg4[%c14_282, %c2_283, %c0_284] : memref<20x24x4xf32, #tpu.memory_space<vmem>>, vector<4x16x4xf32>
    tpu.vector_store %arg4[%c14_282, %c2_283, %c0_284], %230 {strides = array<i32>} : memref<20x24x4xf32, #tpu.memory_space<vmem>>, vector<4x16x4xf32>,
    %c0_285 = arith.constant 0 : index
    %c0_286 = arith.constant 0 : index
    %c0_287 = arith.constant 0 : index
    %232 = vector.load %arg4[%c0_285, %c0_286, %c0_287] : memref<20x24x4xf32, #tpu.memory_space<vmem>>, vector<4x24x4xf32>
    %c1_288 = arith.constant 1 : index
    %c0_289 = arith.constant 0 : index
    %c0_290 = arith.constant 0 : index
    %233 = vector.load %arg4[%c1_288, %c0_289, %c0_290] : memref<20x24x4xf32, #tpu.memory_space<vmem>>, vector<4x24x4xf32>
    %234 = arith.maximumf %232, %233 : vector<4x24x4xf32>
    %c2_291 = arith.constant 2 : index
    %c0_292 = arith.constant 0 : index
    %c0_293 = arith.constant 0 : index
    %235 = vector.load %arg4[%c2_291, %c0_292, %c0_293] : memref<20x24x4xf32, #tpu.memory_space<vmem>>, vector<4x24x4xf32>
    %236 = arith.maximumf %234, %235 : vector<4x24x4xf32>
    %c3_294 = arith.constant 3 : index
    %c0_295 = arith.constant 0 : index
    %c0_296 = arith.constant 0 : index
    %237 = vector.load %arg4[%c3_294, %c0_295, %c0_296] : memref<20x24x4xf32, #tpu.memory_space<vmem>>, vector<4x24x4xf32>
    %238 = arith.maximumf %236, %237 : vector<4x24x4xf32>
    %c4_297 = arith.constant 4 : index
    %c0_298 = arith.constant 0 : index
    %c0_299 = arith.constant 0 : index
    %239 = vector.load %arg4[%c4_297, %c0_298, %c0_299] : memref<20x24x4xf32, #tpu.memory_space<vmem>>, vector<4x24x4xf32>
    %240 = arith.maximumf %238, %239 : vector<4x24x4xf32>
    %241 = vector.extract_strided_slice %240 {offsets = [0, 0, 0], sizes = [4, 16, 4], strides = [1, 1, 1]} : vector<4x24x4xf32> to vector<4x16x4xf32>
    %242 = vector.extract_strided_slice %240 {offsets = [0, 1, 0], sizes = [4, 16, 4], strides = [1, 1, 1]} : vector<4x24x4xf32> to vector<4x16x4xf32>
    %243 = arith.maximumf %241, %242 : vector<4x16x4xf32>
    %244 = vector.extract_strided_slice %240 {offsets = [0, 2, 0], sizes = [4, 16, 4], strides = [1, 1, 1]} : vector<4x24x4xf32> to vector<4x16x4xf32>
    %245 = arith.maximumf %243, %244 : vector<4x16x4xf32>
    %246 = vector.extract_strided_slice %240 {offsets = [0, 3, 0], sizes = [4, 16, 4], strides = [1, 1, 1]} : vector<4x24x4xf32> to vector<4x16x4xf32>
    %247 = arith.maximumf %245, %246 : vector<4x16x4xf32>
    %248 = vector.extract_strided_slice %240 {offsets = [0, 4, 0], sizes = [4, 16, 4], strides = [1, 1, 1]} : vector<4x24x4xf32> to vector<4x16x4xf32>
    %249 = arith.maximumf %247, %248 : vector<4x16x4xf32>
    %c0_300 = arith.constant 0 : index
    %c3_301 = arith.constant 3 : index
    %c0_302 = arith.constant 0 : index
    %c0_303 = arith.constant 0 : index
    %c0_304 = arith.constant 0 : index
    %250 = vector.load %arg3[%c0_300, %c3_301, %c0_302, %c0_303, %c0_304] : memref<1x4x16x16x4xf32, #tpu.memory_space<vmem>>, vector<1x1x4x16x4xf32>
    %251 = vector.shape_cast %250 : vector<1x1x4x16x4xf32> to vector<4x16x4xf32>
    %252 = vector.shape_cast %249 : vector<4x16x4xf32> to vector<1x1x4x16x4xf32>
    tpu.vector_store %arg3[%c0_300, %c3_301, %c0_302, %c0_303, %c0_304], %252 {strides = array<i32>} : memref<1x4x16x16x4xf32, #tpu.memory_space<vmem>>, vector<1x1x4x16x4xf32>,
    %c4_305 = arith.constant 4 : index
    %c0_306 = arith.constant 0 : index
    %c0_307 = arith.constant 0 : index
    %253 = vector.load %arg4[%c4_305, %c0_306, %c0_307] : memref<20x24x4xf32, #tpu.memory_space<vmem>>, vector<4x24x4xf32>
    %c5_308 = arith.constant 5 : index
    %c0_309 = arith.constant 0 : index
    %c0_310 = arith.constant 0 : index
    %254 = vector.load %arg4[%c5_308, %c0_309, %c0_310] : memref<20x24x4xf32, #tpu.memory_space<vmem>>, vector<4x24x4xf32>
    %255 = arith.maximumf %253, %254 : vector<4x24x4xf32>
    %c6_311 = arith.constant 6 : index
    %c0_312 = arith.constant 0 : index
    %c0_313 = arith.constant 0 : index
    %256 = vector.load %arg4[%c6_311, %c0_312, %c0_313] : memref<20x24x4xf32, #tpu.memory_space<vmem>>, vector<4x24x4xf32>
    %257 = arith.maximumf %255, %256 : vector<4x24x4xf32>
    %c7_314 = arith.constant 7 : index
    %c0_315 = arith.constant 0 : index
    %c0_316 = arith.constant 0 : index
    %258 = vector.load %arg4[%c7_314, %c0_315, %c0_316] : memref<20x24x4xf32, #tpu.memory_space<vmem>>, vector<4x24x4xf32>
    %259 = arith.maximumf %257, %258 : vector<4x24x4xf32>
    %c8_317 = arith.constant 8 : index
    %c0_318 = arith.constant 0 : index
    %c0_319 = arith.constant 0 : index
    %260 = vector.load %arg4[%c8_317, %c0_318, %c0_319] : memref<20x24x4xf32, #tpu.memory_space<vmem>>, vector<4x24x4xf32>
    %261 = arith.maximumf %259, %260 : vector<4x24x4xf32>
    %262 = vector.extract_strided_slice %261 {offsets = [0, 0, 0], sizes = [4, 16, 4], strides = [1, 1, 1]} : vector<4x24x4xf32> to vector<4x16x4xf32>
    %263 = vector.extract_strided_slice %261 {offsets = [0, 1, 0], sizes = [4, 16, 4], strides = [1, 1, 1]} : vector<4x24x4xf32> to vector<4x16x4xf32>
    %264 = arith.maximumf %262, %263 : vector<4x16x4xf32>
    %265 = vector.extract_strided_slice %261 {offsets = [0, 2, 0], sizes = [4, 16, 4], strides = [1, 1, 1]} : vector<4x24x4xf32> to vector<4x16x4xf32>
    %266 = arith.maximumf %264, %265 : vector<4x16x4xf32>
    %267 = vector.extract_strided_slice %261 {offsets = [0, 3, 0], sizes = [4, 16, 4], strides = [1, 1, 1]} : vector<4x24x4xf32> to vector<4x16x4xf32>
    %268 = arith.maximumf %266, %267 : vector<4x16x4xf32>
    %269 = vector.extract_strided_slice %261 {offsets = [0, 4, 0], sizes = [4, 16, 4], strides = [1, 1, 1]} : vector<4x24x4xf32> to vector<4x16x4xf32>
    %270 = arith.maximumf %268, %269 : vector<4x16x4xf32>
    %c0_320 = arith.constant 0 : index
    %c3_321 = arith.constant 3 : index
    %c4_322 = arith.constant 4 : index
    %c0_323 = arith.constant 0 : index
    %c0_324 = arith.constant 0 : index
    %271 = vector.load %arg3[%c0_320, %c3_321, %c4_322, %c0_323, %c0_324] : memref<1x4x16x16x4xf32, #tpu.memory_space<vmem>>, vector<1x1x4x16x4xf32>
    %272 = vector.shape_cast %271 : vector<1x1x4x16x4xf32> to vector<4x16x4xf32>
    %273 = vector.shape_cast %270 : vector<4x16x4xf32> to vector<1x1x4x16x4xf32>
    tpu.vector_store %arg3[%c0_320, %c3_321, %c4_322, %c0_323, %c0_324], %273 {strides = array<i32>} : memref<1x4x16x16x4xf32, #tpu.memory_space<vmem>>, vector<1x1x4x16x4xf32>,
    %c8_325 = arith.constant 8 : index
    %c0_326 = arith.constant 0 : index
    %c0_327 = arith.constant 0 : index
    %274 = vector.load %arg4[%c8_325, %c0_326, %c0_327] : memref<20x24x4xf32, #tpu.memory_space<vmem>>, vector<4x24x4xf32>
    %c9_328 = arith.constant 9 : index
    %c0_329 = arith.constant 0 : index
    %c0_330 = arith.constant 0 : index
    %275 = vector.load %arg4[%c9_328, %c0_329, %c0_330] : memref<20x24x4xf32, #tpu.memory_space<vmem>>, vector<4x24x4xf32>
    %276 = arith.maximumf %274, %275 : vector<4x24x4xf32>
    %c10_331 = arith.constant 10 : index
    %c0_332 = arith.constant 0 : index
    %c0_333 = arith.constant 0 : index
    %277 = vector.load %arg4[%c10_331, %c0_332, %c0_333] : memref<20x24x4xf32, #tpu.memory_space<vmem>>, vector<4x24x4xf32>
    %278 = arith.maximumf %276, %277 : vector<4x24x4xf32>
    %c11_334 = arith.constant 11 : index
    %c0_335 = arith.constant 0 : index
    %c0_336 = arith.constant 0 : index
    %279 = vector.load %arg4[%c11_334, %c0_335, %c0_336] : memref<20x24x4xf32, #tpu.memory_space<vmem>>, vector<4x24x4xf32>
    %280 = arith.maximumf %278, %279 : vector<4x24x4xf32>
    %c12_337 = arith.constant 12 : index
    %c0_338 = arith.constant 0 : index
    %c0_339 = arith.constant 0 : index
    %281 = vector.load %arg4[%c12_337, %c0_338, %c0_339] : memref<20x24x4xf32, #tpu.memory_space<vmem>>, vector<4x24x4xf32>
    %282 = arith.maximumf %280, %281 : vector<4x24x4xf32>
    %283 = vector.extract_strided_slice %282 {offsets = [0, 0, 0], sizes = [4, 16, 4], strides = [1, 1, 1]} : vector<4x24x4xf32> to vector<4x16x4xf32>
    %284 = vector.extract_strided_slice %282 {offsets = [0, 1, 0], sizes = [4, 16, 4], strides = [1, 1, 1]} : vector<4x24x4xf32> to vector<4x16x4xf32>
    %285 = arith.maximumf %283, %284 : vector<4x16x4xf32>
    %286 = vector.extract_strided_slice %282 {offsets = [0, 2, 0], sizes = [4, 16, 4], strides = [1, 1, 1]} : vector<4x24x4xf32> to vector<4x16x4xf32>
    %287 = arith.maximumf %285, %286 : vector<4x16x4xf32>
    %288 = vector.extract_strided_slice %282 {offsets = [0, 3, 0], sizes = [4, 16, 4], strides = [1, 1, 1]} : vector<4x24x4xf32> to vector<4x16x4xf32>
    %289 = arith.maximumf %287, %288 : vector<4x16x4xf32>
    %290 = vector.extract_strided_slice %282 {offsets = [0, 4, 0], sizes = [4, 16, 4], strides = [1, 1, 1]} : vector<4x24x4xf32> to vector<4x16x4xf32>
    %291 = arith.maximumf %289, %290 : vector<4x16x4xf32>
    %c0_340 = arith.constant 0 : index
    %c3_341 = arith.constant 3 : index
    %c8_342 = arith.constant 8 : index
    %c0_343 = arith.constant 0 : index
    %c0_344 = arith.constant 0 : index
    %292 = vector.load %arg3[%c0_340, %c3_341, %c8_342, %c0_343, %c0_344] : memref<1x4x16x16x4xf32, #tpu.memory_space<vmem>>, vector<1x1x4x16x4xf32>
    %293 = vector.shape_cast %292 : vector<1x1x4x16x4xf32> to vector<4x16x4xf32>
    %294 = vector.shape_cast %291 : vector<4x16x4xf32> to vector<1x1x4x16x4xf32>
    tpu.vector_store %arg3[%c0_340, %c3_341, %c8_342, %c0_343, %c0_344], %294 {strides = array<i32>} : memref<1x4x16x16x4xf32, #tpu.memory_space<vmem>>, vector<1x1x4x16x4xf32>,
    %c12_345 = arith.constant 12 : index
    %c0_346 = arith.constant 0 : index
    %c0_347 = arith.constant 0 : index
    %295 = vector.load %arg4[%c12_345, %c0_346, %c0_347] : memref<20x24x4xf32, #tpu.memory_space<vmem>>, vector<4x24x4xf32>
    %c13_348 = arith.constant 13 : index
    %c0_349 = arith.constant 0 : index
    %c0_350 = arith.constant 0 : index
    %296 = vector.load %arg4[%c13_348, %c0_349, %c0_350] : memref<20x24x4xf32, #tpu.memory_space<vmem>>, vector<4x24x4xf32>
    %297 = arith.maximumf %295, %296 : vector<4x24x4xf32>
    %c14_351 = arith.constant 14 : index
    %c0_352 = arith.constant 0 : index
    %c0_353 = arith.constant 0 : index
    %298 = vector.load %arg4[%c14_351, %c0_352, %c0_353] : memref<20x24x4xf32, #tpu.memory_space<vmem>>, vector<4x24x4xf32>
    %299 = arith.maximumf %297, %298 : vector<4x24x4xf32>
    %c15_354 = arith.constant 15 : index
    %c0_355 = arith.constant 0 : index
    %c0_356 = arith.constant 0 : index
    %300 = vector.load %arg4[%c15_354, %c0_355, %c0_356] : memref<20x24x4xf32, #tpu.memory_space<vmem>>, vector<4x24x4xf32>
    %301 = arith.maximumf %299, %300 : vector<4x24x4xf32>
    %c16_357 = arith.constant 16 : index
    %c0_358 = arith.constant 0 : index
    %c0_359 = arith.constant 0 : index
    %302 = vector.load %arg4[%c16_357, %c0_358, %c0_359] : memref<20x24x4xf32, #tpu.memory_space<vmem>>, vector<4x24x4xf32>
    %303 = arith.maximumf %301, %302 : vector<4x24x4xf32>
    %304 = vector.extract_strided_slice %303 {offsets = [0, 0, 0], sizes = [4, 16, 4], strides = [1, 1, 1]} : vector<4x24x4xf32> to vector<4x16x4xf32>
    %305 = vector.extract_strided_slice %303 {offsets = [0, 1, 0], sizes = [4, 16, 4], strides = [1, 1, 1]} : vector<4x24x4xf32> to vector<4x16x4xf32>
    %306 = arith.maximumf %304, %305 : vector<4x16x4xf32>
    %307 = vector.extract_strided_slice %303 {offsets = [0, 2, 0], sizes = [4, 16, 4], strides = [1, 1, 1]} : vector<4x24x4xf32> to vector<4x16x4xf32>
    %308 = arith.maximumf %306, %307 : vector<4x16x4xf32>
    %309 = vector.extract_strided_slice %303 {offsets = [0, 3, 0], sizes = [4, 16, 4], strides = [1, 1, 1]} : vector<4x24x4xf32> to vector<4x16x4xf32>
    %310 = arith.maximumf %308, %309 : vector<4x16x4xf32>
    %311 = vector.extract_strided_slice %303 {offsets = [0, 4, 0], sizes = [4, 16, 4], strides = [1, 1, 1]} : vector<4x24x4xf32> to vector<4x16x4xf32>
    %312 = arith.maximumf %310, %311 : vector<4x16x4xf32>
    %c0_360 = arith.constant 0 : index
    %c3_361 = arith.constant 3 : index
    %c12_362 = arith.constant 12 : index
    %c0_363 = arith.constant 0 : index
    %c0_364 = arith.constant 0 : index
    %313 = vector.load %arg3[%c0_360, %c3_361, %c12_362, %c0_363, %c0_364] : memref<1x4x16x16x4xf32, #tpu.memory_space<vmem>>, vector<1x1x4x16x4xf32>
    %314 = vector.shape_cast %313 : vector<1x1x4x16x4xf32> to vector<4x16x4xf32>
    %315 = vector.shape_cast %312 : vector<4x16x4xf32> to vector<1x1x4x16x4xf32>
    tpu.vector_store %arg3[%c0_360, %c3_361, %c12_362, %c0_363, %c0_364], %315 {strides = array<i32>} : memref<1x4x16x16x4xf32, #tpu.memory_space<vmem>>, vector<1x1x4x16x4xf32>,
    return
  }
  func.func @transform_0(%arg0: i32, %arg1: i32) -> (i32, i32, i32, i32) {
    %c0_i32 = arith.constant 0 : i32
    %c0_i32_0 = arith.constant 0 : i32
    %c0_i32_1 = arith.constant 0 : i32
    return %arg0, %c0_i32, %c0_i32_0, %arg1 : i32, i32, i32, i32
  }
  func.func @transform_1(%arg0: i32, %arg1: i32) -> (i32, i32, i32, i32, i32) {
    %c0_i32 = arith.constant 0 : i32
    %c0_i32_0 = arith.constant 0 : i32
    %c0_i32_1 = arith.constant 0 : i32
    %c0_i32_2 = arith.constant 0 : i32
    return %arg0, %c0_i32, %c0_i32_0, %c0_i32_1, %arg1 : i32, i32, i32, i32, i32
  }
}

</mosaic_0001>

<llo_original>
// kernel: tpu_custom_call.1
$region0: #{tpu_custom_call.1}
  #allocation0 [shape = 'u32[]', space=smem, size = 0x4, offset = 0x4, fixed_abs, tag = 'smem constant byte address 0x4 - core index']
  #allocation1 [shape = 'u32[144,128]{1,0:T(1,128)}', space=vmem, size = 0x12000, scoped, tag = 'internal scratch']
  #allocation2 [shape = 'f32[20,24,4]{2,1,0:T(8,128)}', space=vmem, size = 0x3c000, scoped, tag = 'scratch operand']
  %s0 = inlined_call_operand.vmem [shape: f32[2,16,16,4], index: 0, kind: input, shape index: {}]
  %s1 = inlined_call_operand.vmem [shape: f32[2,4,16,16,4], index: 1, kind: output, shape index: {}]
  %s2 = sld [smem:[#allocation0]]
  $region37: #{tpu_custom_call.1} parent=0
    _
  %s4 = ssub.s32 1, %s2
  %s5 = scalar_select 0, %s4, %s2
  loop: start=0, step=1, limit=4
  $region2: #{tpu_custom_call.1} parent=0 // loop_pre_header
    _
  $region3: #{tpu_custom_call.1} parent=0 // loop_header
    %s7 = sphi 0, %s11
    %p8 = scmp.ge.s32.totalorder %s7, 4
    %s14 = sphi 0, %s26
    %s15 = sphi 0, %s22
    %s16 = sphi 0, %s14
    %s17 = sphi 0, %s15
    %s18 = sphi 0, %s16
    %s19 = sphi 0, %s17
    %s31 = sphi 0, %s33
    %s34 = sphi 0, %s31
    %s35 = sphi 0, %s34
    %s51 = sphi 0, %s35
    %s59 = sphi 0, %s61
    %s62 = sphi 0, %s59
    %s63 = sphi 0, %s62
    %s79 = sphi 0, %s63
  $region4: #{tpu_custom_call.1} parent=0 // loop_header_branch
    %10 = sbr.rel (%p8) target = $region8
  $region5: #{tpu_custom_call.1} parent=0 // loop_body
    %s12 = ssub.s32 %s7, 1
    %s13 = ssub.s32 %s7, 2
    %s20 = sadd.s32 1, %s15
    %p21 = scmp.ge.s32.totalorder %s20, 1
    %s22 = scalar_select %p21, 0, %s20
    %s23 = sadd.s32 1, %s14
    %s24 = scalar_select %p21, %s23, %s14
    %p25 = scmp.ge.s32.totalorder %s24, 2
    %s26 = scalar_select %p25, 0, %s24
    %s27 = ssub.s32 %s14, %s26
    %s28 = ssub.s32 %s15, %s22
    %s29 = sor.u32 %s27, %s28
    %p30 = scmp.eq.s32.totalorder %s29, 0
    %s32 = sadd.s32 %s31, 1
    %s33 = scalar_select %p30, %s31, %s32
    %p36 = pneg %p30
    %p37 = scmp.eq.s32.totalorder %s7, 1
    %p38 = por %p36, %p37
    %p39 = scmp.ne.s32.totalorder %s31, %s34
    %p40 = scmp.eq.s32.totalorder %s7, 0
    %p41 = por %p39, %p40
    %p42 = scmp.ne.s32.totalorder %s31, %s34
    %p43 = scmp.eq.s32.totalorder %s12, 1
    %p44 = por %p42, %p43
    %p45 = scmp.ne.s32.totalorder %s34, %s35
    %p46 = scmp.eq.s32.totalorder %s12, 0
    %p47 = por %p45, %p46
    %p48 = scmp.ne.s32.totalorder %s34, %s35
    %p49 = scmp.eq.s32.totalorder %s13, 1
    %p50 = por %p48, %p49
    %p52 = scmp.ne.s32.totalorder %s35, %s51
    %p53 = scmp.eq.s32.totalorder %s13, 0
    %p54 = por %p52, %p53
    %s55 = ssub.s32 %s14, %s26
    %s56 = ssub.s32 %s15, %s22
    %s57 = sor.u32 %s55, %s56
    %p58 = scmp.eq.s32.totalorder %s57, 0
    %s60 = sadd.s32 %s59, 1
    %s61 = scalar_select %p58, %s59, %s60
    %p64 = pneg %p58
    %p65 = scmp.eq.s32.totalorder %s7, 1
    %p66 = por %p64, %p65
    %p67 = scmp.ne.s32.totalorder %s59, %s62
    %p68 = scmp.eq.s32.totalorder %s7, 0
    %p69 = por %p67, %p68
    %p70 = scmp.ne.s32.totalorder %s59, %s62
    %p71 = scmp.eq.s32.totalorder %s12, 1
    %p72 = por %p70, %p71
    %p73 = scmp.ne.s32.totalorder %s62, %s63
    %p74 = scmp.eq.s32.totalorder %s12, 0
    %p75 = por %p73, %p74
    %p76 = scmp.ne.s32.totalorder %s62, %s63
    %p77 = scmp.eq.s32.totalorder %s13, 1
    %p78 = por %p76, %p77
    %p80 = scmp.ne.s32.totalorder %s63, %s79
    %p81 = scmp.eq.s32.totalorder %s13, 0
    %p82 = por %p80, %p81
    %p83 = scmp.le.s32.totalorder 1, %s7
    %p84 = scmp.lt.s32.totalorder %s7, 3
    %p85 = pnand %p83, %p84
    %p86 = pneg %p85
    // Predicated region
    $region9: #{tpu_custom_call.1} parent=5 // pred_check
      _
    $region10: #{tpu_custom_call.1} parent=5 // pred_check_branch
      %88 = sbr.rel (%p85) target = $region12
    $region11: #{tpu_custom_call.1} parent=5 // pred_region
      %s89 = ssub.s32 %s7, 1
    $region12: #{tpu_custom_call.1} parent=5 // pred_fallthru
      _
    %p90 = scmp.lt.s32.totalorder %s7, 2
    // Predicated region
    $region13: #{tpu_custom_call.1} parent=5 // pred_check
      %p91 = pneg %p90
    $region14: #{tpu_custom_call.1} parent=5 // pred_check_branch
      %93 = sbr.rel (%p91) target = $region16
    $region15: #{tpu_custom_call.1} parent=5 // pred_region
      // Predicated region
      $region17: #{tpu_custom_call.1} parent=15 // pred_check
        %p94 = pneg %p41
      $region18: #{tpu_custom_call.1} parent=15 // pred_check_branch
        %96 = sbr.rel (%p94) target = $region20
      $region19: #{tpu_custom_call.1} parent=15 // pred_region
        %p97 = scmp.lt.s32.totalorder %s14, 1
        %s98 = scalar_select %p97, %s14, 1
        %p99 = scmp.lt.s32.totalorder %s15, 0
        %s100 = scalar_select %p99, %s15, 0
        %s101 = smul.addr %s98, 32
        %s102 = sadd.s32 %s100, %s101
        %s103 = smul.addr %s102, 8
        %s104 = scalar_lea.vmem %s0, %s103
      $region20: #{tpu_custom_call.1} parent=15 // pred_fallthru
        _
    $region16: #{tpu_custom_call.1} parent=5 // pred_fallthru
      _
    %p105 = scmp.le.s32.totalorder 1, %s7
    %p106 = scmp.lt.s32.totalorder %s7, 3
    %p107 = pnand %p105, %p106
    %p108 = pneg %p107
    // Predicated region
    $region21: #{tpu_custom_call.1} parent=5 // pred_check
      _
    $region22: #{tpu_custom_call.1} parent=5 // pred_check_branch
      %110 = sbr.rel (%p107) target = $region24
    $region23: #{tpu_custom_call.1} parent=5 // pred_region
      %s111 = ssub.s32 %s7, 1
      %p112 = scmp.lt.s32.totalorder %s16, 1
      %s113 = scalar_select %p112, %s16, 1
      %p114 = scmp.lt.s32.totalorder %s17, 0
      %s115 = scalar_select %p114, %s17, 0
      %s116 = smul.addr %s113, 32
      %s117 = sadd.s32 %s115, %s116
      %s118 = smul.addr %s117, 8
      %s119 = scalar_lea.vmem %s0, %s118
      %p120 = pneg %p47
      %p121 = pneg %p44
      %p122 = pneg %p75
      %p123 = pneg %p72
      %p124 = scmp.lt.s32.totalorder %s16, 1
      %s125 = scalar_select %p124, %s16, 1
      %p126 = scmp.lt.s32.totalorder %s17, 0
      %s127 = scalar_select %p126, %s17, 0
      %s128 = smul.addr %s125, 128
      %s129 = sadd.s32 %s127, %s128
      %s130 = smul.addr %s129, 8
      %s131 = scalar_lea.vmem %s1, %s130
      %p132 = scmp.lt.s32.totalorder %s16, 1
      %s133 = scalar_select %p132, %s16, 1
      %p134 = scmp.lt.s32.totalorder %s17, 0
      %s135 = scalar_select %p134, %s17, 0
      %s136 = smul.addr %s133, 32
      %s137 = sadd.s32 %s135, %s136
      %s138 = smul.addr %s137, 8
      %s139 = scalar_lea.vmem %s0, %s138
      %p140 = scmp.lt.s32.totalorder %s16, 1
      %s141 = scalar_select %p140, %s16, 1
      %p142 = scmp.lt.s32.totalorder %s17, 0
      %s143 = scalar_select %p142, %s17, 0
      %s144 = smul.addr %s141, 128
      %s145 = sadd.s32 %s143, %s144
      %s146 = smul.addr %s145, 8
      %s147 = scalar_lea.vmem %s1, %s146
      %vm148 = vcmask 31744
      %149 = vst.msk [vmem:[#allocation2] sm:$0xff] %vm148, -inf
      %150 = vst.msk [vmem:[#allocation2 + $0x8] sm:$0xff] %vm148, -inf
      %151 = vst.msk [vmem:[#allocation2 + $0x10] sm:$0xff] %vm148, -inf
      %152 = vst.msk [vmem:[#allocation2 + $0x18] sm:$0xff] %vm148, -inf
      %153 = vst.msk [vmem:[#allocation2 + $0x20] sm:$0xff] %vm148, -inf
      %154 = vst.msk [vmem:[#allocation2 + $0x28] sm:$0xff] %vm148, -inf
      %s155 = scalar_lea.vmem [#allocation2], 432
      %156 = vst.msk [vmem:[%s155] sm:$0xff] %vm148, -inf
      %157 = vst.msk [vmem:[%s155 + $0x8] sm:$0xff] %vm148, -inf
      %158 = vst.msk [vmem:[%s155 + $0x10] sm:$0xff] %vm148, -inf
      %159 = vst.msk [vmem:[%s155 + $0x18] sm:$0xff] %vm148, -inf
      %160 = vst.msk [vmem:[%s155 + $0x20] sm:$0xff] %vm148, -inf
      %161 = vst.msk [vmem:[%s155 + $0x28] sm:$0xff] %vm148, -inf
      %s162 = scalar_lea.vmem [#allocation2], 48
      %vm163 = vcmask 25600
      %164 = vst.msk [vmem:[%s162] sm:$0x3] %vm163, -inf
      %165 = vst.msk [vmem:[%s162 + $0x18] sm:$0x3] %vm163, -inf
      %166 = vst.msk [vmem:[%s162 + $0x30] sm:$0x3] %vm163, -inf
      %167 = vst.msk [vmem:[%s162 + $0x48] sm:$0x3] %vm163, -inf
      %168 = vst.msk [vmem:[%s162 + $0x60] sm:$0x3] %vm163, -inf
      %169 = vst.msk [vmem:[%s162 + $0x78] sm:$0x3] %vm163, -inf
      %170 = vst.msk [vmem:[%s162 + $0x90] sm:$0x3] %vm163, -inf
      %171 = vst.msk [vmem:[%s162 + $0xa8] sm:$0x3] %vm163, -inf
      %172 = vst.msk [vmem:[%s162 + $0xc0] sm:$0x3] %vm163, -inf
      %173 = vst.msk [vmem:[%s162 + $0xd8] sm:$0x3] %vm163, -inf
      %174 = vst.msk [vmem:[%s162 + $0xf0] sm:$0x3] %vm163, -inf
      %175 = vst.msk [vmem:[%s162 + $0x108] sm:$0x3] %vm163, -inf
      %176 = vst.msk [vmem:[%s162 + $0x120] sm:$0x3] %vm163, -inf
      %177 = vst.msk [vmem:[%s162 + $0x138] sm:$0x3] %vm163, -inf
      %178 = vst.msk [vmem:[%s162 + $0x150] sm:$0x3] %vm163, -inf
      %179 = vst.msk [vmem:[%s162 + $0x168] sm:$0x3] %vm163, -inf
      %vm180 = vcmask 29696
      %181 = vst.msk [vmem:[%s162 + $0x12] sm:$0x3f] %vm180, -inf
      %182 = vst.msk [vmem:[%s162 + $0x2a] sm:$0x3f] %vm180, -inf
      %183 = vst.msk [vmem:[%s162 + $0x42] sm:$0x3f] %vm180, -inf
      %184 = vst.msk [vmem:[%s162 + $0x5a] sm:$0x3f] %vm180, -inf
      %185 = vst.msk [vmem:[%s162 + $0x72] sm:$0x3f] %vm180, -inf
      %186 = vst.msk [vmem:[%s162 + $0x8a] sm:$0x3f] %vm180, -inf
      %187 = vst.msk [vmem:[%s162 + $0xa2] sm:$0x3f] %vm180, -inf
      %188 = vst.msk [vmem:[%s162 + $0xba] sm:$0x3f] %vm180, -inf
      %189 = vst.msk [vmem:[%s162 + $0xd2] sm:$0x3f] %vm180, -inf
      %190 = vst.msk [vmem:[%s162 + $0xea] sm:$0x3f] %vm180, -inf
      %191 = vst.msk [vmem:[%s162 + $0x102] sm:$0x3f] %vm180, -inf
      %192 = vst.msk [vmem:[%s162 + $0x11a] sm:$0x3f] %vm180, -inf
      %193 = vst.msk [vmem:[%s162 + $0x132] sm:$0x3f] %vm180, -inf
      %194 = vst.msk [vmem:[%s162 + $0x14a] sm:$0x3f] %vm180, -inf
      %195 = vst.msk [vmem:[%s162 + $0x162] sm:$0x3f] %vm180, -inf
      %196 = vst.msk [vmem:[%s162 + $0x17a] sm:$0x3f] %vm180, -inf
      %v197 = vld [vmem:[%s139] sm:$0xff]
      %v198 = vld [vmem:[%s139 + $0x8] sm:$0xff]
      %v199 = vld [vmem:[%s139 + $0x10] sm:$0xff]
      %v200 = vld [vmem:[%s139 + $0x18] sm:$0xff]
      %v201 = vld [vmem:[%s139 + $0x20] sm:$0xff]
      %v202 = vld [vmem:[%s139 + $0x28] sm:$0xff]
      %v203 = vld [vmem:[%s139 + $0x30] sm:$0xff]
      %v204 = vld [vmem:[%s139 + $0x38] sm:$0xff]
      %205 = vst.msk [vmem:[%s147] sm:$0xff] %vm148, %v197
      %206 = vst.msk [vmem:[%s147 + $0x8] sm:$0xff] %vm148, %v198
      %207 = vst.msk [vmem:[%s147 + $0x10] sm:$0xff] %vm148, %v199
      %208 = vst.msk [vmem:[%s147 + $0x18] sm:$0xff] %vm148, %v200
      %209 = vst.msk [vmem:[%s147 + $0x20] sm:$0xff] %vm148, %v201
      %210 = vst.msk [vmem:[%s147 + $0x28] sm:$0xff] %vm148, %v202
      %211 = vst.msk [vmem:[%s147 + $0x30] sm:$0xff] %vm148, %v203
      %212 = vst.msk [vmem:[%s147 + $0x38] sm:$0xff] %vm148, %v204
      %s213 = scalar_lea.vmem %s139, 64
      %v214 = vld [vmem:[%s213] sm:$0xff]
      %v215 = vld [vmem:[%s213 + $0x8] sm:$0xff]
      %v216 = vld [vmem:[%s213 + $0x10] sm:$0xff]
      %v217 = vld [vmem:[%s213 + $0x18] sm:$0xff]
      %v218 = vld [vmem:[%s213 + $0x20] sm:$0xff]
      %v219 = vld [vmem:[%s213 + $0x28] sm:$0xff]
      %v220 = vld [vmem:[%s213 + $0x30] sm:$0xff]
      %v221 = vld [vmem:[%s213 + $0x38] sm:$0xff]
      %s222 = scalar_lea.vmem %s147, 64
      %223 = vst.msk [vmem:[%s222] sm:$0xff] %vm148, %v214
      %224 = vst.msk [vmem:[%s222 + $0x8] sm:$0xff] %vm148, %v215
      %225 = vst.msk [vmem:[%s222 + $0x10] sm:$0xff] %vm148, %v216
      %226 = vst.msk [vmem:[%s222 + $0x18] sm:$0xff] %vm148, %v217
      %227 = vst.msk [vmem:[%s222 + $0x20] sm:$0xff] %vm148, %v218
      %228 = vst.msk [vmem:[%s222 + $0x28] sm:$0xff] %vm148, %v219
      %229 = vst.msk [vmem:[%s222 + $0x30] sm:$0xff] %vm148, %v220
      %230 = vst.msk [vmem:[%s222 + $0x38] sm:$0xff] %vm148, %v221
      %s231 = scalar_lea.vmem %s139, 128
      %v232 = vld [vmem:[%s231] sm:$0xff]
      %v233 = vld [vmem:[%s231 + $0x8] sm:$0xff]
      %v234 = vld [vmem:[%s231 + $0x10] sm:$0xff]
      %v235 = vld [vmem:[%s231 + $0x18] sm:$0xff]
      %v236 = vld [vmem:[%s231 + $0x20] sm:$0xff]
      %v237 = vld [vmem:[%s231 + $0x28] sm:$0xff]
      %v238 = vld [vmem:[%s231 + $0x30] sm:$0xff]
      %v239 = vld [vmem:[%s231 + $0x38] sm:$0xff]
      %s240 = scalar_lea.vmem %s147, 128
      %241 = vst.msk [vmem:[%s240] sm:$0xff] %vm148, %v232
      %242 = vst.msk [vmem:[%s240 + $0x8] sm:$0xff] %vm148, %v233
      %243 = vst.msk [vmem:[%s240 + $0x10] sm:$0xff] %vm148, %v234
      %244 = vst.msk [vmem:[%s240 + $0x18] sm:$0xff] %vm148, %v235
      %245 = vst.msk [vmem:[%s240 + $0x20] sm:$0xff] %vm148, %v236
      %246 = vst.msk [vmem:[%s240 + $0x28] sm:$0xff] %vm148, %v237
      %247 = vst.msk [vmem:[%s240 + $0x30] sm:$0xff] %vm148, %v238
      %248 = vst.msk [vmem:[%s240 + $0x38] sm:$0xff] %vm148, %v239
      %s249 = scalar_lea.vmem %s139, 192
      %v250 = vld [vmem:[%s249] sm:$0xff]
      %v251 = vld [vmem:[%s249 + $0x8] sm:$0xff]
      %v252 = vld [vmem:[%s249 + $0x10] sm:$0xff]
      %v253 = vld [vmem:[%s249 + $0x18] sm:$0xff]
      %v254 = vld [vmem:[%s249 + $0x20] sm:$0xff]
      %v255 = vld [vmem:[%s249 + $0x28] sm:$0xff]
      %v256 = vld [vmem:[%s249 + $0x30] sm:$0xff]
      %v257 = vld [vmem:[%s249 + $0x38] sm:$0xff]
      %s258 = scalar_lea.vmem %s147, 192
      %259 = vst.msk [vmem:[%s258] sm:$0xff] %vm148, %v250
      %260 = vst.msk [vmem:[%s258 + $0x8] sm:$0xff] %vm148, %v251
      %261 = vst.msk [vmem:[%s258 + $0x10] sm:$0xff] %vm148, %v252
      %262 = vst.msk [vmem:[%s258 + $0x18] sm:$0xff] %vm148, %v253
      %263 = vst.msk [vmem:[%s258 + $0x20] sm:$0xff] %vm148, %v254
      %264 = vst.msk [vmem:[%s258 + $0x28] sm:$0xff] %vm148, %v255
      %265 = vst.msk [vmem:[%s258 + $0x30] sm:$0xff] %vm148, %v256
      %266 = vst.msk [vmem:[%s258 + $0x38] sm:$0xff] %vm148, %v257
      %v267 = vld [vmem:[%s139] sm:$0xff]
      %v268 = vld [vmem:[%s139 + $0x8] sm:$0xff]
      %v269 = vld [vmem:[%s139 + $0x10] sm:$0xff]
      %v270 = vld [vmem:[%s139 + $0x18] sm:$0xff]
      %v271 = vld [vmem:[%s139 + $0x20] sm:$0xff]
      %v272 = vld [vmem:[%s139 + $0x28] sm:$0xff]
      %v273 = vld [vmem:[%s139 + $0x30] sm:$0xff]
      %v274 = vld [vmem:[%s139 + $0x38] sm:$0xff]
      %275 = vst.msk [vmem:[%s162 + $0x2] sm:$0xff] %vm148, %v267
      %276 = vst.msk [vmem:[%s162 + $0xa] sm:$0xff] %vm148, %v268
      %277 = vst.msk [vmem:[%s162 + $0x1a] sm:$0xff] %vm148, %v269
      %278 = vst.msk [vmem:[%s162 + $0x22] sm:$0xff] %vm148, %v270
      %279 = vst.msk [vmem:[%s162 + $0x32] sm:$0xff] %vm148, %v271
      %280 = vst.msk [vmem:[%s162 + $0x3a] sm:$0xff] %vm148, %v272
      %281 = vst.msk [vmem:[%s162 + $0x4a] sm:$0xff] %vm148, %v273
      %282 = vst.msk [vmem:[%s162 + $0x52] sm:$0xff] %vm148, %v274
      %v283 = vld [vmem:[%s213] sm:$0xff]
      %v284 = vld [vmem:[%s213 + $0x8] sm:$0xff]
      %v285 = vld [vmem:[%s213 + $0x10] sm:$0xff]
      %v286 = vld [vmem:[%s213 + $0x18] sm:$0xff]
      %v287 = vld [vmem:[%s213 + $0x20] sm:$0xff]
      %v288 = vld [vmem:[%s213 + $0x28] sm:$0xff]
      %v289 = vld [vmem:[%s213 + $0x30] sm:$0xff]
      %v290 = vld [vmem:[%s213 + $0x38] sm:$0xff]
      %s291 = scalar_lea.vmem [#allocation2], 144
      %292 = vst.msk [vmem:[%s291 + $0x2] sm:$0xff] %vm148, %v283
      %293 = vst.msk [vmem:[%s291 + $0xa] sm:$0xff] %vm148, %v284
      %294 = vst.msk [vmem:[%s291 + $0x1a] sm:$0xff] %vm148, %v285
      %295 = vst.msk [vmem:[%s291 + $0x22] sm:$0xff] %vm148, %v286
      %296 = vst.msk [vmem:[%s291 + $0x32] sm:$0xff] %vm148, %v287
      %297 = vst.msk [vmem:[%s291 + $0x3a] sm:$0xff] %vm148, %v288
      %298 = vst.msk [vmem:[%s291 + $0x4a] sm:$0xff] %vm148, %v289
      %299 = vst.msk [vmem:[%s291 + $0x52] sm:$0xff] %vm148, %v290
      %v300 = vld [vmem:[%s231] sm:$0xff]
      %v301 = vld [vmem:[%s231 + $0x8] sm:$0xff]
      %v302 = vld [vmem:[%s231 + $0x10] sm:$0xff]
      %v303 = vld [vmem:[%s231 + $0x18] sm:$0xff]
      %v304 = vld [vmem:[%s231 + $0x20] sm:$0xff]
      %v305 = vld [vmem:[%s231 + $0x28] sm:$0xff]
      %v306 = vld [vmem:[%s231 + $0x30] sm:$0xff]
      %v307 = vld [vmem:[%s231 + $0x38] sm:$0xff]
      %s308 = scalar_lea.vmem [#allocation2], 240
      %309 = vst.msk [vmem:[%s308 + $0x2] sm:$0xff] %vm148, %v300
      %310 = vst.msk [vmem:[%s308 + $0xa] sm:$0xff] %vm148, %v301
      %311 = vst.msk [vmem:[%s308 + $0x1a] sm:$0xff] %vm148, %v302
      %312 = vst.msk [vmem:[%s308 + $0x22] sm:$0xff] %vm148, %v303
      %313 = vst.msk [vmem:[%s308 + $0x32] sm:$0xff] %vm148, %v304
      %314 = vst.msk [vmem:[%s308 + $0x3a] sm:$0xff] %vm148, %v305
      %315 = vst.msk [vmem:[%s308 + $0x4a] sm:$0xff] %vm148, %v306
      %316 = vst.msk [vmem:[%s308 + $0x52] sm:$0xff] %vm148, %v307
      %v317 = vld [vmem:[%s249] sm:$0xff]
      %v318 = vld [vmem:[%s249 + $0x8] sm:$0xff]
      %v319 = vld [vmem:[%s249 + $0x10] sm:$0xff]
      %v320 = vld [vmem:[%s249 + $0x18] sm:$0xff]
      %v321 = vld [vmem:[%s249 + $0x20] sm:$0xff]
      %v322 = vld [vmem:[%s249 + $0x28] sm:$0xff]
      %v323 = vld [vmem:[%s249 + $0x30] sm:$0xff]
      %v324 = vld [vmem:[%s249 + $0x38] sm:$0xff]
      %s325 = scalar_lea.vmem [#allocation2], 336
      %326 = vst.msk [vmem:[%s325 + $0x2] sm:$0xff] %vm148, %v317
      %327 = vst.msk [vmem:[%s325 + $0xa] sm:$0xff] %vm148, %v318
      %328 = vst.msk [vmem:[%s325 + $0x1a] sm:$0xff] %vm148, %v319
      %329 = vst.msk [vmem:[%s325 + $0x22] sm:$0xff] %vm148, %v320
      %330 = vst.msk [vmem:[%s325 + $0x32] sm:$0xff] %vm148, %v321
      %331 = vst.msk [vmem:[%s325 + $0x3a] sm:$0xff] %vm148, %v322
      %332 = vst.msk [vmem:[%s325 + $0x4a] sm:$0xff] %vm148, %v323
      %333 = vst.msk [vmem:[%s325 + $0x52] sm:$0xff] %vm148, %v324
      %v334 = vld [vmem:[#allocation2] sm:$0xff]
      %v335 = vld [vmem:[#allocation2 + $0x8] sm:$0xff]
      %v336 = vld [vmem:[#allocation2 + $0x10] sm:$0xff]
      %v337 = vld [vmem:[#allocation2 + $0x18] sm:$0xff]
      %v338 = vld [vmem:[#allocation2 + $0x20] sm:$0xff]
      %v339 = vld [vmem:[#allocation2 + $0x28] sm:$0xff]
      %v340 = vld [vmem:[#allocation2 + $0x30] sm:$0xff]
      %v341 = vld [vmem:[#allocation2 + $0x38] sm:$0xff]
      %v342 = vld [vmem:[#allocation2 + $0x40] sm:$0xff]
      %v343 = vld [vmem:[#allocation2 + $0x48] sm:$0xff]
      %v344 = vld [vmem:[#allocation2 + $0x50] sm:$0xff]
      %v345 = vld [vmem:[#allocation2 + $0x58] sm:$0xff]
      %s346 = scalar_lea.vmem [#allocation2], 24
      %v347 = vld [vmem:[%s346] sm:$0xff]
      %v348 = vld [vmem:[%s346 + $0x8] sm:$0xff]
      %v349 = vld [vmem:[%s346 + $0x10] sm:$0xff]
      %v350 = vld [vmem:[%s346 + $0x18] sm:$0xff]
      %v351 = vld [vmem:[%s346 + $0x20] sm:$0xff]
      %v352 = vld [vmem:[%s346 + $0x28] sm:$0xff]
      %v353 = vld [vmem:[%s346 + $0x30] sm:$0xff]
      %v354 = vld [vmem:[%s346 + $0x38] sm:$0xff]
      %v355 = vld [vmem:[%s346 + $0x40] sm:$0xff]
      %v356 = vld [vmem:[%s346 + $0x48] sm:$0xff]
      %v357 = vld [vmem:[%s346 + $0x50] sm:$0xff]
      %v358 = vld [vmem:[%s346 + $0x58] sm:$0xff]
      %v359 = vmax.f32 %v334, %v347
      %v360 = vmax.f32 %v335, %v348
      %v361 = vmax.f32 %v336, %v349
      %v362 = vmax.f32 %v337, %v350
      %v363 = vmax.f32 %v338, %v351
      %v364 = vmax.f32 %v339, %v352
      %v365 = vmax.f32 %v340, %v353
      %v366 = vmax.f32 %v341, %v354
      %v367 = vmax.f32 %v342, %v355
      %v368 = vmax.f32 %v343, %v356
      %v369 = vmax.f32 %v344, %v357
      %v370 = vmax.f32 %v345, %v358
      %v371 = vld [vmem:[%s162] sm:$0xff]
      %v372 = vld [vmem:[%s162 + $0x8] sm:$0xff]
      %v373 = vld [vmem:[%s162 + $0x10] sm:$0xff]
      %v374 = vld [vmem:[%s162 + $0x18] sm:$0xff]
      %v375 = vld [vmem:[%s162 + $0x20] sm:$0xff]
      %v376 = vld [vmem:[%s162 + $0x28] sm:$0xff]
      %v377 = vld [vmem:[%s162 + $0x30] sm:$0xff]
      %v378 = vld [vmem:[%s162 + $0x38] sm:$0xff]
      %v379 = vld [vmem:[%s162 + $0x40] sm:$0xff]
      %v380 = vld [vmem:[%s162 + $0x48] sm:$0xff]
      %v381 = vld [vmem:[%s162 + $0x50] sm:$0xff]
      %v382 = vld [vmem:[%s162 + $0x58] sm:$0xff]
      %v383 = vmax.f32 %v359, %v371
      %v384 = vmax.f32 %v360, %v372
      %v385 = vmax.f32 %v361, %v373
      %v386 = vmax.f32 %v362, %v374
      %v387 = vmax.f32 %v363, %v375
      %v388 = vmax.f32 %v364, %v376
      %v389 = vmax.f32 %v365, %v377
      %v390 = vmax.f32 %v366, %v378
      %v391 = vmax.f32 %v367, %v379
      %v392 = vmax.f32 %v368, %v380
      %v393 = vmax.f32 %v369, %v381
      %v394 = vmax.f32 %v370, %v382
      %s395 = scalar_lea.vmem [#allocation2], 72
      %v396 = vld [vmem:[%s395] sm:$0xff]
      %v397 = vld [vmem:[%s395 + $0x8] sm:$0xff]
      %v398 = vld [vmem:[%s395 + $0x10] sm:$0xff]
      %v399 = vld [vmem:[%s395 + $0x18] sm:$0xff]
      %v400 = vld [vmem:[%s395 + $0x20] sm:$0xff]
      %v401 = vld [vmem:[%s395 + $0x28] sm:$0xff]
      %v402 = vld [vmem:[%s395 + $0x30] sm:$0xff]
      %v403 = vld [vmem:[%s395 + $0x38] sm:$0xff]
      %v404 = vld [vmem:[%s395 + $0x40] sm:$0xff]
      %v405 = vld [vmem:[%s395 + $0x48] sm:$0xff]
      %v406 = vld [vmem:[%s395 + $0x50] sm:$0xff]
      %v407 = vld [vmem:[%s395 + $0x58] sm:$0xff]
      %v408 = vmax.f32 %v383, %v396
      %v409 = vmax.f32 %v384, %v397
      %v410 = vmax.f32 %v385, %v398
      %v411 = vmax.f32 %v386, %v399
      %v412 = vmax.f32 %v387, %v400
      %v413 = vmax.f32 %v388, %v401
      %v414 = vmax.f32 %v389, %v402
      %v415 = vmax.f32 %v390, %v403
      %v416 = vmax.f32 %v391, %v404
      %v417 = vmax.f32 %v392, %v405
      %v418 = vmax.f32 %v393, %v406
      %v419 = vmax.f32 %v394, %v407
      %s420 = scalar_lea.vmem [#allocation2], 96
      %v421 = vld [vmem:[%s420] sm:$0xff]
      %v422 = vld [vmem:[%s420 + $0x8] sm:$0xff]
      %v423 = vld [vmem:[%s420 + $0x10] sm:$0xff]
      %v424 = vld [vmem:[%s420 + $0x18] sm:$0xff]
      %v425 = vld [vmem:[%s420 + $0x20] sm:$0xff]
      %v426 = vld [vmem:[%s420 + $0x28] sm:$0xff]
      %v427 = vld [vmem:[%s420 + $0x30] sm:$0xff]
      %v428 = vld [vmem:[%s420 + $0x38] sm:$0xff]
      %v429 = vld [vmem:[%s420 + $0x40] sm:$0xff]
      %v430 = vld [vmem:[%s420 + $0x48] sm:$0xff]
      %v431 = vld [vmem:[%s420 + $0x50] sm:$0xff]
      %v432 = vld [vmem:[%s420 + $0x58] sm:$0xff]
      %v433 = vmax.f32 %v408, %v421
      %v434 = vmax.f32 %v409, %v422
      %v435 = vmax.f32 %v410, %v423
      %v436 = vmax.f32 %v411, %v424
      %v437 = vmax.f32 %v412, %v425
      %v438 = vmax.f32 %v413, %v426
      %v439 = vmax.f32 %v414, %v427
      %v440 = vmax.f32 %v415, %v428
      %v441 = vmax.f32 %v416, %v429
      %v442 = vmax.f32 %v417, %v430
      %v443 = vmax.f32 %v418, %v431
      %v444 = vmax.f32 %v419, %v432
      %vm457 = vcmask 1046528
      %v458 = vrot.slane %v433, 1
      %v459 = vrot.slane %v434, 1
      %v460 = vsel %vm457, %v458, %v459
      %v461 = vrot.slane %v435, 1
      %v462 = vsel %vm457, %v459, %v461
      %v463 = vrot.slane %v436, 1
      %v464 = vrot.slane %v437, 1
      %v465 = vsel %vm457, %v463, %v464
      %v466 = vrot.slane %v438, 1
      %v467 = vsel %vm457, %v464, %v466
      %v468 = vrot.slane %v439, 1
      %v469 = vrot.slane %v440, 1
      %v470 = vsel %vm457, %v468, %v469
      %v471 = vrot.slane %v441, 1
      %v472 = vsel %vm457, %v469, %v471
      %v473 = vrot.slane %v442, 1
      %v474 = vrot.slane %v443, 1
      %v475 = vsel %vm457, %v473, %v474
      %v476 = vrot.slane %v444, 1
      %v477 = vsel %vm457, %v474, %v476
      %v486 = vmax.f32 %v433, %v460
      %v487 = vmax.f32 %v434, %v462
      %v488 = vmax.f32 %v436, %v465
      %v489 = vmax.f32 %v437, %v467
      %v490 = vmax.f32 %v439, %v470
      %v491 = vmax.f32 %v440, %v472
      %v492 = vmax.f32 %v442, %v475
      %v493 = vmax.f32 %v443, %v477
      %vm494 = vcmask 1045504
      %v495 = vrot.slane %v433, 2
      %v496 = vrot.slane %v434, 2
      %v497 = vsel %vm494, %v495, %v496
      %v498 = vrot.slane %v435, 2
      %v499 = vsel %vm494, %v496, %v498
      %v500 = vrot.slane %v436, 2
      %v501 = vrot.slane %v437, 2
      %v502 = vsel %vm494, %v500, %v501
      %v503 = vrot.slane %v438, 2
      %v504 = vsel %vm494, %v501, %v503
      %v505 = vrot.slane %v439, 2
      %v506 = vrot.slane %v440, 2
      %v507 = vsel %vm494, %v505, %v506
      %v508 = vrot.slane %v441, 2
      %v509 = vsel %vm494, %v506, %v508
      %v510 = vrot.slane %v442, 2
      %v511 = vrot.slane %v443, 2
      %v512 = vsel %vm494, %v510, %v511
      %v513 = vrot.slane %v444, 2
      %v514 = vsel %vm494, %v511, %v513
      %v523 = vmax.f32 %v486, %v497
      %v524 = vmax.f32 %v487, %v499
      %v525 = vmax.f32 %v488, %v502
      %v526 = vmax.f32 %v489, %v504
      %v527 = vmax.f32 %v490, %v507
      %v528 = vmax.f32 %v491, %v509
      %v529 = vmax.f32 %v492, %v512
      %v530 = vmax.f32 %v493, %v514
      %vm531 = vcmask 1044480
      %v532 = vrot.slane %v433, 3
      %v533 = vrot.slane %v434, 3
      %v534 = vsel %vm531, %v532, %v533
      %v535 = vrot.slane %v435, 3
      %v536 = vsel %vm531, %v533, %v535
      %v537 = vrot.slane %v436, 3
      %v538 = vrot.slane %v437, 3
      %v539 = vsel %vm531, %v537, %v538
      %v540 = vrot.slane %v438, 3
      %v541 = vsel %vm531, %v538, %v540
      %v542 = vrot.slane %v439, 3
      %v543 = vrot.slane %v440, 3
      %v544 = vsel %vm531, %v542, %v543
      %v545 = vrot.slane %v441, 3
      %v546 = vsel %vm531, %v543, %v545
      %v547 = vrot.slane %v442, 3
      %v548 = vrot.slane %v443, 3
      %v549 = vsel %vm531, %v547, %v548
      %v550 = vrot.slane %v444, 3
      %v551 = vsel %vm531, %v548, %v550
      %v560 = vmax.f32 %v523, %v534
      %v561 = vmax.f32 %v524, %v536
      %v562 = vmax.f32 %v525, %v539
      %v563 = vmax.f32 %v526, %v541
      %v564 = vmax.f32 %v527, %v544
      %v565 = vmax.f32 %v528, %v546
      %v566 = vmax.f32 %v529, %v549
      %v567 = vmax.f32 %v530, %v551
      %vm568 = vcmask 1043456
      %v569 = vrot.slane %v433, 4
      %v570 = vrot.slane %v434, 4
      %v571 = vsel %vm568, %v569, %v570
      %v572 = vrot.slane %v435, 4
      %v573 = vsel %vm568, %v570, %v572
      %v574 = vrot.slane %v436, 4
      %v575 = vrot.slane %v437, 4
      %v576 = vsel %vm568, %v574, %v575
      %v577 = vrot.slane %v438, 4
      %v578 = vsel %vm568, %v575, %v577
      %v579 = vrot.slane %v439, 4
      %v580 = vrot.slane %v440, 4
      %v581 = vsel %vm568, %v579, %v580
      %v582 = vrot.slane %v441, 4
      %v583 = vsel %vm568, %v580, %v582
      %v584 = vrot.slane %v442, 4
      %v585 = vrot.slane %v443, 4
      %v586 = vsel %vm568, %v584, %v585
      %v587 = vrot.slane %v444, 4
      %v588 = vsel %vm568, %v585, %v587
      %v597 = vmax.f32 %v560, %v571
      %v598 = vmax.f32 %v561, %v573
      %v599 = vmax.f32 %v562, %v576
      %v600 = vmax.f32 %v563, %v578
      %v601 = vmax.f32 %v564, %v581
      %v602 = vmax.f32 %v565, %v583
      %v603 = vmax.f32 %v566, %v586
      %v604 = vmax.f32 %v567, %v588
      %s605 = scalar_lea.vmem %s147, 256
      %606 = vst.msk [vmem:[%s605] sm:$0xff] %vm148, %v597
      %607 = vst.msk [vmem:[%s605 + $0x8] sm:$0xff] %vm148, %v598
      %608 = vst.msk [vmem:[%s605 + $0x10] sm:$0xff] %vm148, %v599
      %609 = vst.msk [vmem:[%s605 + $0x18] sm:$0xff] %vm148, %v600
      %610 = vst.msk [vmem:[%s605 + $0x20] sm:$0xff] %vm148, %v601
      %611 = vst.msk [vmem:[%s605 + $0x28] sm:$0xff] %vm148, %v602
      %612 = vst.msk [vmem:[%s605 + $0x30] sm:$0xff] %vm148, %v603
      %613 = vst.msk [vmem:[%s605 + $0x38] sm:$0xff] %vm148, %v604
      %v614 = vld [vmem:[%s420] sm:$0xff]
      %v615 = vld [vmem:[%s420 + $0x8] sm:$0xff]
      %v616 = vld [vmem:[%s420 + $0x10] sm:$0xff]
      %v617 = vld [vmem:[%s420 + $0x18] sm:$0xff]
      %v618 = vld [vmem:[%s420 + $0x20] sm:$0xff]
      %v619 = vld [vmem:[%s420 + $0x28] sm:$0xff]
      %v620 = vld [vmem:[%s420 + $0x30] sm:$0xff]
      %v621 = vld [vmem:[%s420 + $0x38] sm:$0xff]
      %v622 = vld [vmem:[%s420 + $0x40] sm:$0xff]
      %v623 = vld [vmem:[%s420 + $0x48] sm:$0xff]
      %v624 = vld [vmem:[%s420 + $0x50] sm:$0xff]
      %v625 = vld [vmem:[%s420 + $0x58] sm:$0xff]
      %s626 = scalar_lea.vmem [#allocation2], 120
      %v627 = vld [vmem:[%s626] sm:$0xff]
      %v628 = vld [vmem:[%s626 + $0x8] sm:$0xff]
      %v629 = vld [vmem:[%s626 + $0x10] sm:$0xff]
      %v630 = vld [vmem:[%s626 + $0x18] sm:$0xff]
      %v631 = vld [vmem:[%s626 + $0x20] sm:$0xff]
      %v632 = vld [vmem:[%s626 + $0x28] sm:$0xff]
      %v633 = vld [vmem:[%s626 + $0x30] sm:$0xff]
      %v634 = vld [vmem:[%s626 + $0x38] sm:$0xff]
      %v635 = vld [vmem:[%s626 + $0x40] sm:$0xff]
      %v636 = vld [vmem:[%s626 + $0x48] sm:$0xff]
      %v637 = vld [vmem:[%s626 + $0x50] sm:$0xff]
      %v638 = vld [vmem:[%s626 + $0x58] sm:$0xff]
      %v639 = vmax.f32 %v614, %v627
      %v640 = vmax.f32 %v615, %v628
      %v641 = vmax.f32 %v616, %v629
      %v642 = vmax.f32 %v617, %v630
      %v643 = vmax.f32 %v618, %v631
      %v644 = vmax.f32 %v619, %v632
      %v645 = vmax.f32 %v620, %v633
      %v646 = vmax.f32 %v621, %v634
      %v647 = vmax.f32 %v622, %v635
      %v648 = vmax.f32 %v623, %v636
      %v649 = vmax.f32 %v624, %v637
      %v650 = vmax.f32 %v625, %v638
      %v651 = vld [vmem:[%s291] sm:$0xff]
      %v652 = vld [vmem:[%s291 + $0x8] sm:$0xff]
      %v653 = vld [vmem:[%s291 + $0x10] sm:$0xff]
      %v654 = vld [vmem:[%s291 + $0x18] sm:$0xff]
      %v655 = vld [vmem:[%s291 + $0x20] sm:$0xff]
      %v656 = vld [vmem:[%s291 + $0x28] sm:$0xff]
      %v657 = vld [vmem:[%s291 + $0x30] sm:$0xff]
      %v658 = vld [vmem:[%s291 + $0x38] sm:$0xff]
      %v659 = vld [vmem:[%s291 + $0x40] sm:$0xff]
      %v660 = vld [vmem:[%s291 + $0x48] sm:$0xff]
      %v661 = vld [vmem:[%s291 + $0x50] sm:$0xff]
      %v662 = vld [vmem:[%s291 + $0x58] sm:$0xff]
      %v663 = vmax.f32 %v639, %v651
      %v664 = vmax.f32 %v640, %v652
      %v665 = vmax.f32 %v641, %v653
      %v666 = vmax.f32 %v642, %v654
      %v667 = vmax.f32 %v643, %v655
      %v668 = vmax.f32 %v644, %v656
      %v669 = vmax.f32 %v645, %v657
      %v670 = vmax.f32 %v646, %v658
      %v671 = vmax.f32 %v647, %v659
      %v672 = vmax.f32 %v648, %v660
      %v673 = vmax.f32 %v649, %v661
      %v674 = vmax.f32 %v650, %v662
      %s675 = scalar_lea.vmem [#allocation2], 168
      %v676 = vld [vmem:[%s675] sm:$0xff]
      %v677 = vld [vmem:[%s675 + $0x8] sm:$0xff]
      %v678 = vld [vmem:[%s675 + $0x10] sm:$0xff]
      %v679 = vld [vmem:[%s675 + $0x18] sm:$0xff]
      %v680 = vld [vmem:[%s675 + $0x20] sm:$0xff]
      %v681 = vld [vmem:[%s675 + $0x28] sm:$0xff]
      %v682 = vld [vmem:[%s675 + $0x30] sm:$0xff]
      %v683 = vld [vmem:[%s675 + $0x38] sm:$0xff]
      %v684 = vld [vmem:[%s675 + $0x40] sm:$0xff]
      %v685 = vld [vmem:[%s675 + $0x48] sm:$0xff]
      %v686 = vld [vmem:[%s675 + $0x50] sm:$0xff]
      %v687 = vld [vmem:[%s675 + $0x58] sm:$0xff]
      %v688 = vmax.f32 %v663, %v676
      %v689 = vmax.f32 %v664, %v677
      %v690 = vmax.f32 %v665, %v678
      %v691 = vmax.f32 %v666, %v679
      %v692 = vmax.f32 %v667, %v680
      %v693 = vmax.f32 %v668, %v681
      %v694 = vmax.f32 %v669, %v682
      %v695 = vmax.f32 %v670, %v683
      %v696 = vmax.f32 %v671, %v684
      %v697 = vmax.f32 %v672, %v685
      %v698 = vmax.f32 %v673, %v686
      %v699 = vmax.f32 %v674, %v687
      %s700 = scalar_lea.vmem [#allocation2], 192
      %v701 = vld [vmem:[%s700] sm:$0xff]
      %v702 = vld [vmem:[%s700 + $0x8] sm:$0xff]
      %v703 = vld [vmem:[%s700 + $0x10] sm:$0xff]
      %v704 = vld [vmem:[%s700 + $0x18] sm:$0xff]
      %v705 = vld [vmem:[%s700 + $0x20] sm:$0xff]
      %v706 = vld [vmem:[%s700 + $0x28] sm:$0xff]
      %v707 = vld [vmem:[%s700 + $0x30] sm:$0xff]
      %v708 = vld [vmem:[%s700 + $0x38] sm:$0xff]
      %v709 = vld [vmem:[%s700 + $0x40] sm:$0xff]
      %v710 = vld [vmem:[%s700 + $0x48] sm:$0xff]
      %v711 = vld [vmem:[%s700 + $0x50] sm:$0xff]
      %v712 = vld [vmem:[%s700 + $0x58] sm:$0xff]
      %v713 = vmax.f32 %v688, %v701
      %v714 = vmax.f32 %v689, %v702
      %v715 = vmax.f32 %v690, %v703
      %v716 = vmax.f32 %v691, %v704
      %v717 = vmax.f32 %v692, %v705
      %v718 = vmax.f32 %v693, %v706
      %v719 = vmax.f32 %v694, %v707
      %v720 = vmax.f32 %v695, %v708
      %v721 = vmax.f32 %v696, %v709
      %v722 = vmax.f32 %v697, %v710
      %v723 = vmax.f32 %v698, %v711
      %v724 = vmax.f32 %v699, %v712
      %v737 = vrot.slane %v713, 1
      %v738 = vrot.slane %v714, 1
      %v739 = vsel %vm457, %v737, %v738
      %v740 = vrot.slane %v715, 1
      %v741 = vsel %vm457, %v738, %v740
      %v742 = vrot.slane %v716, 1
      %v743 = vrot.slane %v717, 1
      %v744 = vsel %vm457, %v742, %v743
      %v745 = vrot.slane %v718, 1
      %v746 = vsel %vm457, %v743, %v745
      %v747 = vrot.slane %v719, 1
      %v748 = vrot.slane %v720, 1
      %v749 = vsel %vm457, %v747, %v748
      %v750 = vrot.slane %v721, 1
      %v751 = vsel %vm457, %v748, %v750
      %v752 = vrot.slane %v722, 1
      %v753 = vrot.slane %v723, 1
      %v754 = vsel %vm457, %v752, %v753
      %v755 = vrot.slane %v724, 1
      %v756 = vsel %vm457, %v753, %v755
      %v765 = vmax.f32 %v713, %v739
      %v766 = vmax.f32 %v714, %v741
      %v767 = vmax.f32 %v716, %v744
      %v768 = vmax.f32 %v717, %v746
      %v769 = vmax.f32 %v719, %v749
      %v770 = vmax.f32 %v720, %v751
      %v771 = vmax.f32 %v722, %v754
      %v772 = vmax.f32 %v723, %v756
      %v773 = vrot.slane %v713, 2
      %v774 = vrot.slane %v714, 2
      %v775 = vsel %vm494, %v773, %v774
      %v776 = vrot.slane %v715, 2
      %v777 = vsel %vm494, %v774, %v776
      %v778 = vrot.slane %v716, 2
      %v779 = vrot.slane %v717, 2
      %v780 = vsel %vm494, %v778, %v779
      %v781 = vrot.slane %v718, 2
      %v782 = vsel %vm494, %v779, %v781
      %v783 = vrot.slane %v719, 2
      %v784 = vrot.slane %v720, 2
      %v785 = vsel %vm494, %v783, %v784
      %v786 = vrot.slane %v721, 2
      %v787 = vsel %vm494, %v784, %v786
      %v788 = vrot.slane %v722, 2
      %v789 = vrot.slane %v723, 2
      %v790 = vsel %vm494, %v788, %v789
      %v791 = vrot.slane %v724, 2
      %v792 = vsel %vm494, %v789, %v791
      %v801 = vmax.f32 %v765, %v775
      %v802 = vmax.f32 %v766, %v777
      %v803 = vmax.f32 %v767, %v780
      %v804 = vmax.f32 %v768, %v782
      %v805 = vmax.f32 %v769, %v785
      %v806 = vmax.f32 %v770, %v787
      %v807 = vmax.f32 %v771, %v790
      %v808 = vmax.f32 %v772, %v792
      %v809 = vrot.slane %v713, 3
      %v810 = vrot.slane %v714, 3
      %v811 = vsel %vm531, %v809, %v810
      %v812 = vrot.slane %v715, 3
      %v813 = vsel %vm531, %v810, %v812
      %v814 = vrot.slane %v716, 3
      %v815 = vrot.slane %v717, 3
      %v816 = vsel %vm531, %v814, %v815
      %v817 = vrot.slane %v718, 3
      %v818 = vsel %vm531, %v815, %v817
      %v819 = vrot.slane %v719, 3
      %v820 = vrot.slane %v720, 3
      %v821 = vsel %vm531, %v819, %v820
      %v822 = vrot.slane %v721, 3
      %v823 = vsel %vm531, %v820, %v822
      %v824 = vrot.slane %v722, 3
      %v825 = vrot.slane %v723, 3
      %v826 = vsel %vm531, %v824, %v825
      %v827 = vrot.slane %v724, 3
      %v828 = vsel %vm531, %v825, %v827
      %v837 = vmax.f32 %v801, %v811
      %v838 = vmax.f32 %v802, %v813
      %v839 = vmax.f32 %v803, %v816
      %v840 = vmax.f32 %v804, %v818
      %v841 = vmax.f32 %v805, %v821
      %v842 = vmax.f32 %v806, %v823
      %v843 = vmax.f32 %v807, %v826
      %v844 = vmax.f32 %v808, %v828
      %v845 = vrot.slane %v713, 4
      %v846 = vrot.slane %v714, 4
      %v847 = vsel %vm568, %v845, %v846
      %v848 = vrot.slane %v715, 4
      %v849 = vsel %vm568, %v846, %v848
      %v850 = vrot.slane %v716, 4
      %v851 = vrot.slane %v717, 4
      %v852 = vsel %vm568, %v850, %v851
      %v853 = vrot.slane %v718, 4
      %v854 = vsel %vm568, %v851, %v853
      %v855 = vrot.slane %v719, 4
      %v856 = vrot.slane %v720, 4
      %v857 = vsel %vm568, %v855, %v856
      %v858 = vrot.slane %v721, 4
      %v859 = vsel %vm568, %v856, %v858
      %v860 = vrot.slane %v722, 4
      %v861 = vrot.slane %v723, 4
      %v862 = vsel %vm568, %v860, %v861
      %v863 = vrot.slane %v724, 4
      %v864 = vsel %vm568, %v861, %v863
      %v873 = vmax.f32 %v837, %v847
      %v874 = vmax.f32 %v838, %v849
      %v875 = vmax.f32 %v839, %v852
      %v876 = vmax.f32 %v840, %v854
      %v877 = vmax.f32 %v841, %v857
      %v878 = vmax.f32 %v842, %v859
      %v879 = vmax.f32 %v843, %v862
      %v880 = vmax.f32 %v844, %v864
      %s881 = scalar_lea.vmem %s147, 320
      %882 = vst.msk [vmem:[%s881] sm:$0xff] %vm148, %v873
      %883 = vst.msk [vmem:[%s881 + $0x8] sm:$0xff] %vm148, %v874
      %884 = vst.msk [vmem:[%s881 + $0x10] sm:$0xff] %vm148, %v875
      %885 = vst.msk [vmem:[%s881 + $0x18] sm:$0xff] %vm148, %v876
      %886 = vst.msk [vmem:[%s881 + $0x20] sm:$0xff] %vm148, %v877
      %887 = vst.msk [vmem:[%s881 + $0x28] sm:$0xff] %vm148, %v878
      %888 = vst.msk [vmem:[%s881 + $0x30] sm:$0xff] %vm148, %v879
      %889 = vst.msk [vmem:[%s881 + $0x38] sm:$0xff] %vm148, %v880
      %v890 = vld [vmem:[%s700] sm:$0xff]
      %v891 = vld [vmem:[%s700 + $0x8] sm:$0xff]
      %v892 = vld [vmem:[%s700 + $0x10] sm:$0xff]
      %v893 = vld [vmem:[%s700 + $0x18] sm:$0xff]
      %v894 = vld [vmem:[%s700 + $0x20] sm:$0xff]
      %v895 = vld [vmem:[%s700 + $0x28] sm:$0xff]
      %v896 = vld [vmem:[%s700 + $0x30] sm:$0xff]
      %v897 = vld [vmem:[%s700 + $0x38] sm:$0xff]
      %v898 = vld [vmem:[%s700 + $0x40] sm:$0xff]
      %v899 = vld [vmem:[%s700 + $0x48] sm:$0xff]
      %v900 = vld [vmem:[%s700 + $0x50] sm:$0xff]
      %v901 = vld [vmem:[%s700 + $0x58] sm:$0xff]
      %s902 = scalar_lea.vmem [#allocation2], 216
      %v903 = vld [vmem:[%s902] sm:$0xff]
      %v904 = vld [vmem:[%s902 + $0x8] sm:$0xff]
      %v905 = vld [vmem:[%s902 + $0x10] sm:$0xff]
      %v906 = vld [vmem:[%s902 + $0x18] sm:$0xff]
      %v907 = vld [vmem:[%s902 + $0x20] sm:$0xff]
      %v908 = vld [vmem:[%s902 + $0x28] sm:$0xff]
      %v909 = vld [vmem:[%s902 + $0x30] sm:$0xff]
      %v910 = vld [vmem:[%s902 + $0x38] sm:$0xff]
      %v911 = vld [vmem:[%s902 + $0x40] sm:$0xff]
      %v912 = vld [vmem:[%s902 + $0x48] sm:$0xff]
      %v913 = vld [vmem:[%s902 + $0x50] sm:$0xff]
      %v914 = vld [vmem:[%s902 + $0x58] sm:$0xff]
      %v915 = vmax.f32 %v890, %v903
      %v916 = vmax.f32 %v891, %v904
      %v917 = vmax.f32 %v892, %v905
      %v918 = vmax.f32 %v893, %v906
      %v919 = vmax.f32 %v894, %v907
      %v920 = vmax.f32 %v895, %v908
      %v921 = vmax.f32 %v896, %v909
      %v922 = vmax.f32 %v897, %v910
      %v923 = vmax.f32 %v898, %v911
      %v924 = vmax.f32 %v899, %v912
      %v925 = vmax.f32 %v900, %v913
      %v926 = vmax.f32 %v901, %v914
      %v927 = vld [vmem:[%s308] sm:$0xff]
      %v928 = vld [vmem:[%s308 + $0x8] sm:$0xff]
      %v929 = vld [vmem:[%s308 + $0x10] sm:$0xff]
      %v930 = vld [vmem:[%s308 + $0x18] sm:$0xff]
      %v931 = vld [vmem:[%s308 + $0x20] sm:$0xff]
      %v932 = vld [vmem:[%s308 + $0x28] sm:$0xff]
      %v933 = vld [vmem:[%s308 + $0x30] sm:$0xff]
      %v934 = vld [vmem:[%s308 + $0x38] sm:$0xff]
      %v935 = vld [vmem:[%s308 + $0x40] sm:$0xff]
      %v936 = vld [vmem:[%s308 + $0x48] sm:$0xff]
      %v937 = vld [vmem:[%s308 + $0x50] sm:$0xff]
      %v938 = vld [vmem:[%s308 + $0x58] sm:$0xff]
      %v939 = vmax.f32 %v915, %v927
      %v940 = vmax.f32 %v916, %v928
      %v941 = vmax.f32 %v917, %v929
      %v942 = vmax.f32 %v918, %v930
      %v943 = vmax.f32 %v919, %v931
      %v944 = vmax.f32 %v920, %v932
      %v945 = vmax.f32 %v921, %v933
      %v946 = vmax.f32 %v922, %v934
      %v947 = vmax.f32 %v923, %v935
      %v948 = vmax.f32 %v924, %v936
      %v949 = vmax.f32 %v925, %v937
      %v950 = vmax.f32 %v926, %v938
      %s951 = scalar_lea.vmem [#allocation2], 264
      %v952 = vld [vmem:[%s951] sm:$0xff]
      %v953 = vld [vmem:[%s951 + $0x8] sm:$0xff]
      %v954 = vld [vmem:[%s951 + $0x10] sm:$0xff]
      %v955 = vld [vmem:[%s951 + $0x18] sm:$0xff]
      %v956 = vld [vmem:[%s951 + $0x20] sm:$0xff]
      %v957 = vld [vmem:[%s951 + $0x28] sm:$0xff]
      %v958 = vld [vmem:[%s951 + $0x30] sm:$0xff]
      %v959 = vld [vmem:[%s951 + $0x38] sm:$0xff]
      %v960 = vld [vmem:[%s951 + $0x40] sm:$0xff]
      %v961 = vld [vmem:[%s951 + $0x48] sm:$0xff]
      %v962 = vld [vmem:[%s951 + $0x50] sm:$0xff]
      %v963 = vld [vmem:[%s951 + $0x58] sm:$0xff]
      %v964 = vmax.f32 %v939, %v952
      %v965 = vmax.f32 %v940, %v953
      %v966 = vmax.f32 %v941, %v954
      %v967 = vmax.f32 %v942, %v955
      %v968 = vmax.f32 %v943, %v956
      %v969 = vmax.f32 %v944, %v957
      %v970 = vmax.f32 %v945, %v958
      %v971 = vmax.f32 %v946, %v959
      %v972 = vmax.f32 %v947, %v960
      %v973 = vmax.f32 %v948, %v961
      %v974 = vmax.f32 %v949, %v962
      %v975 = vmax.f32 %v950, %v963
      %s976 = scalar_lea.vmem [#allocation2], 288
      %v977 = vld [vmem:[%s976] sm:$0xff]
      %v978 = vld [vmem:[%s976 + $0x8] sm:$0xff]
      %v979 = vld [vmem:[%s976 + $0x10] sm:$0xff]
      %v980 = vld [vmem:[%s976 + $0x18] sm:$0xff]
      %v981 = vld [vmem:[%s976 + $0x20] sm:$0xff]
      %v982 = vld [vmem:[%s976 + $0x28] sm:$0xff]
      %v983 = vld [vmem:[%s976 + $0x30] sm:$0xff]
      %v984 = vld [vmem:[%s976 + $0x38] sm:$0xff]
      %v985 = vld [vmem:[%s976 + $0x40] sm:$0xff]
      %v986 = vld [vmem:[%s976 + $0x48] sm:$0xff]
      %v987 = vld [vmem:[%s976 + $0x50] sm:$0xff]
      %v988 = vld [vmem:[%s976 + $0x58] sm:$0xff]
      %v989 = vmax.f32 %v964, %v977
      %v990 = vmax.f32 %v965, %v978
      %v991 = vmax.f32 %v966, %v979
      %v992 = vmax.f32 %v967, %v980
      %v993 = vmax.f32 %v968, %v981
      %v994 = vmax.f32 %v969, %v982
      %v995 = vmax.f32 %v970, %v983
      %v996 = vmax.f32 %v971, %v984
      %v997 = vmax.f32 %v972, %v985
      %v998 = vmax.f32 %v973, %v986
      %v999 = vmax.f32 %v974, %v987
      %v1000 = vmax.f32 %v975, %v988
      %v1013 = vrot.slane %v989, 1
      %v1014 = vrot.slane %v990, 1
      %v1015 = vsel %vm457, %v1013, %v1014
      %v1016 = vrot.slane %v991, 1
      %v1017 = vsel %vm457, %v1014, %v1016
      %v1018 = vrot.slane %v992, 1
      %v1019 = vrot.slane %v993, 1
      %v1020 = vsel %vm457, %v1018, %v1019
      %v1021 = vrot.slane %v994, 1
      %v1022 = vsel %vm457, %v1019, %v1021
      %v1023 = vrot.slane %v995, 1
      %v1024 = vrot.slane %v996, 1
      %v1025 = vsel %vm457, %v1023, %v1024
      %v1026 = vrot.slane %v997, 1
      %v1027 = vsel %vm457, %v1024, %v1026
      %v1028 = vrot.slane %v998, 1
      %v1029 = vrot.slane %v999, 1
      %v1030 = vsel %vm457, %v1028, %v1029
      %v1031 = vrot.slane %v1000, 1
      %v1032 = vsel %vm457, %v1029, %v1031
      %v1041 = vmax.f32 %v989, %v1015
      %v1042 = vmax.f32 %v990, %v1017
      %v1043 = vmax.f32 %v992, %v1020
      %v1044 = vmax.f32 %v993, %v1022
      %v1045 = vmax.f32 %v995, %v1025
      %v1046 = vmax.f32 %v996, %v1027
      %v1047 = vmax.f32 %v998, %v1030
      %v1048 = vmax.f32 %v999, %v1032
      %v1049 = vrot.slane %v989, 2
      %v1050 = vrot.slane %v990, 2
      %v1051 = vsel %vm494, %v1049, %v1050
      %v1052 = vrot.slane %v991, 2
      %v1053 = vsel %vm494, %v1050, %v1052
      %v1054 = vrot.slane %v992, 2
      %v1055 = vrot.slane %v993, 2
      %v1056 = vsel %vm494, %v1054, %v1055
      %v1057 = vrot.slane %v994, 2
      %v1058 = vsel %vm494, %v1055, %v1057
      %v1059 = vrot.slane %v995, 2
      %v1060 = vrot.slane %v996, 2
      %v1061 = vsel %vm494, %v1059, %v1060
      %v1062 = vrot.slane %v997, 2
      %v1063 = vsel %vm494, %v1060, %v1062
      %v1064 = vrot.slane %v998, 2
      %v1065 = vrot.slane %v999, 2
      %v1066 = vsel %vm494, %v1064, %v1065
      %v1067 = vrot.slane %v1000, 2
      %v1068 = vsel %vm494, %v1065, %v1067
      %v1077 = vmax.f32 %v1041, %v1051
      %v1078 = vmax.f32 %v1042, %v1053
      %v1079 = vmax.f32 %v1043, %v1056
      %v1080 = vmax.f32 %v1044, %v1058
      %v1081 = vmax.f32 %v1045, %v1061
      %v1082 = vmax.f32 %v1046, %v1063
      %v1083 = vmax.f32 %v1047, %v1066
      %v1084 = vmax.f32 %v1048, %v1068
      %v1085 = vrot.slane %v989, 3
      %v1086 = vrot.slane %v990, 3
      %v1087 = vsel %vm531, %v1085, %v1086
      %v1088 = vrot.slane %v991, 3
      %v1089 = vsel %vm531, %v1086, %v1088
      %v1090 = vrot.slane %v992, 3
      %v1091 = vrot.slane %v993, 3
      %v1092 = vsel %vm531, %v1090, %v1091
      %v1093 = vrot.slane %v994, 3
      %v1094 = vsel %vm531, %v1091, %v1093
      %v1095 = vrot.slane %v995, 3
      %v1096 = vrot.slane %v996, 3
      %v1097 = vsel %vm531, %v1095, %v1096
      %v1098 = vrot.slane %v997, 3
      %v1099 = vsel %vm531, %v1096, %v1098
      %v1100 = vrot.slane %v998, 3
      %v1101 = vrot.slane %v999, 3
      %v1102 = vsel %vm531, %v1100, %v1101
      %v1103 = vrot.slane %v1000, 3
      %v1104 = vsel %vm531, %v1101, %v1103
      %v1113 = vmax.f32 %v1077, %v1087
      %v1114 = vmax.f32 %v1078, %v1089
      %v1115 = vmax.f32 %v1079, %v1092
      %v1116 = vmax.f32 %v1080, %v1094
      %v1117 = vmax.f32 %v1081, %v1097
      %v1118 = vmax.f32 %v1082, %v1099
      %v1119 = vmax.f32 %v1083, %v1102
      %v1120 = vmax.f32 %v1084, %v1104
      %v1121 = vrot.slane %v989, 4
      %v1122 = vrot.slane %v990, 4
      %v1123 = vsel %vm568, %v1121, %v1122
      %v1124 = vrot.slane %v991, 4
      %v1125 = vsel %vm568, %v1122, %v1124
      %v1126 = vrot.slane %v992, 4
      %v1127 = vrot.slane %v993, 4
      %v1128 = vsel %vm568, %v1126, %v1127
      %v1129 = vrot.slane %v994, 4
      %v1130 = vsel %vm568, %v1127, %v1129
      %v1131 = vrot.slane %v995, 4
      %v1132 = vrot.slane %v996, 4
      %v1133 = vsel %vm568, %v1131, %v1132
      %v1134 = vrot.slane %v997, 4
      %v1135 = vsel %vm568, %v1132, %v1134
      %v1136 = vrot.slane %v998, 4
      %v1137 = vrot.slane %v999, 4
      %v1138 = vsel %vm568, %v1136, %v1137
      %v1139 = vrot.slane %v1000, 4
      %v1140 = vsel %vm568, %v1137, %v1139
      %v1149 = vmax.f32 %v1113, %v1123
      %v1150 = vmax.f32 %v1114, %v1125
      %v1151 = vmax.f32 %v1115, %v1128
      %v1152 = vmax.f32 %v1116, %v1130
      %v1153 = vmax.f32 %v1117, %v1133
      %v1154 = vmax.f32 %v1118, %v1135
      %v1155 = vmax.f32 %v1119, %v1138
      %v1156 = vmax.f32 %v1120, %v1140
      %s1157 = scalar_lea.vmem %s147, 384
      %1158 = vst.msk [vmem:[%s1157] sm:$0xff] %vm148, %v1149
      %1159 = vst.msk [vmem:[%s1157 + $0x8] sm:$0xff] %vm148, %v1150
      %1160 = vst.msk [vmem:[%s1157 + $0x10] sm:$0xff] %vm148, %v1151
      %1161 = vst.msk [vmem:[%s1157 + $0x18] sm:$0xff] %vm148, %v1152
      %1162 = vst.msk [vmem:[%s1157 + $0x20] sm:$0xff] %vm148, %v1153
      %1163 = vst.msk [vmem:[%s1157 + $0x28] sm:$0xff] %vm148, %v1154
      %1164 = vst.msk [vmem:[%s1157 + $0x30] sm:$0xff] %vm148, %v1155
      %1165 = vst.msk [vmem:[%s1157 + $0x38] sm:$0xff] %vm148, %v1156
      %v1166 = vld [vmem:[%s976] sm:$0xff]
      %v1167 = vld [vmem:[%s976 + $0x8] sm:$0xff]
      %v1168 = vld [vmem:[%s976 + $0x10] sm:$0xff]
      %v1169 = vld [vmem:[%s976 + $0x18] sm:$0xff]
      %v1170 = vld [vmem:[%s976 + $0x20] sm:$0xff]
      %v1171 = vld [vmem:[%s976 + $0x28] sm:$0xff]
      %v1172 = vld [vmem:[%s976 + $0x30] sm:$0xff]
      %v1173 = vld [vmem:[%s976 + $0x38] sm:$0xff]
      %v1174 = vld [vmem:[%s976 + $0x40] sm:$0xff]
      %v1175 = vld [vmem:[%s976 + $0x48] sm:$0xff]
      %v1176 = vld [vmem:[%s976 + $0x50] sm:$0xff]
      %v1177 = vld [vmem:[%s976 + $0x58] sm:$0xff]
      %s1178 = scalar_lea.vmem [#allocation2], 312
      %v1179 = vld [vmem:[%s1178] sm:$0xff]
      %v1180 = vld [vmem:[%s1178 + $0x8] sm:$0xff]
      %v1181 = vld [vmem:[%s1178 + $0x10] sm:$0xff]
      %v1182 = vld [vmem:[%s1178 + $0x18] sm:$0xff]
      %v1183 = vld [vmem:[%s1178 + $0x20] sm:$0xff]
      %v1184 = vld [vmem:[%s1178 + $0x28] sm:$0xff]
      %v1185 = vld [vmem:[%s1178 + $0x30] sm:$0xff]
      %v1186 = vld [vmem:[%s1178 + $0x38] sm:$0xff]
      %v1187 = vld [vmem:[%s1178 + $0x40] sm:$0xff]
      %v1188 = vld [vmem:[%s1178 + $0x48] sm:$0xff]
      %v1189 = vld [vmem:[%s1178 + $0x50] sm:$0xff]
      %v1190 = vld [vmem:[%s1178 + $0x58] sm:$0xff]
      %v1191 = vmax.f32 %v1166, %v1179
      %v1192 = vmax.f32 %v1167, %v1180
      %v1193 = vmax.f32 %v1168, %v1181
      %v1194 = vmax.f32 %v1169, %v1182
      %v1195 = vmax.f32 %v1170, %v1183
      %v1196 = vmax.f32 %v1171, %v1184
      %v1197 = vmax.f32 %v1172, %v1185
      %v1198 = vmax.f32 %v1173, %v1186
      %v1199 = vmax.f32 %v1174, %v1187
      %v1200 = vmax.f32 %v1175, %v1188
      %v1201 = vmax.f32 %v1176, %v1189
      %v1202 = vmax.f32 %v1177, %v1190
      %v1203 = vld [vmem:[%s325] sm:$0xff]
      %v1204 = vld [vmem:[%s325 + $0x8] sm:$0xff]
      %v1205 = vld [vmem:[%s325 + $0x10] sm:$0xff]
      %v1206 = vld [vmem:[%s325 + $0x18] sm:$0xff]
      %v1207 = vld [vmem:[%s325 + $0x20] sm:$0xff]
      %v1208 = vld [vmem:[%s325 + $0x28] sm:$0xff]
      %v1209 = vld [vmem:[%s325 + $0x30] sm:$0xff]
      %v1210 = vld [vmem:[%s325 + $0x38] sm:$0xff]
      %v1211 = vld [vmem:[%s325 + $0x40] sm:$0xff]
      %v1212 = vld [vmem:[%s325 + $0x48] sm:$0xff]
      %v1213 = vld [vmem:[%s325 + $0x50] sm:$0xff]
      %v1214 = vld [vmem:[%s325 + $0x58] sm:$0xff]
      %v1215 = vmax.f32 %v1191, %v1203
      %v1216 = vmax.f32 %v1192, %v1204
      %v1217 = vmax.f32 %v1193, %v1205
      %v1218 = vmax.f32 %v1194, %v1206
      %v1219 = vmax.f32 %v1195, %v1207
      %v1220 = vmax.f32 %v1196, %v1208
      %v1221 = vmax.f32 %v1197, %v1209
      %v1222 = vmax.f32 %v1198, %v1210
      %v1223 = vmax.f32 %v1199, %v1211
      %v1224 = vmax.f32 %v1200, %v1212
      %v1225 = vmax.f32 %v1201, %v1213
      %v1226 = vmax.f32 %v1202, %v1214
      %s1227 = scalar_lea.vmem [#allocation2], 360
      %v1228 = vld [vmem:[%s1227] sm:$0xff]
      %v1229 = vld [vmem:[%s1227 + $0x8] sm:$0xff]
      %v1230 = vld [vmem:[%s1227 + $0x10] sm:$0xff]
      %v1231 = vld [vmem:[%s1227 + $0x18] sm:$0xff]
      %v1232 = vld [vmem:[%s1227 + $0x20] sm:$0xff]
      %v1233 = vld [vmem:[%s1227 + $0x28] sm:$0xff]
      %v1234 = vld [vmem:[%s1227 + $0x30] sm:$0xff]
      %v1235 = vld [vmem:[%s1227 + $0x38] sm:$0xff]
      %v1236 = vld [vmem:[%s1227 + $0x40] sm:$0xff]
      %v1237 = vld [vmem:[%s1227 + $0x48] sm:$0xff]
      %v1238 = vld [vmem:[%s1227 + $0x50] sm:$0xff]
      %v1239 = vld [vmem:[%s1227 + $0x58] sm:$0xff]
      %v1240 = vmax.f32 %v1215, %v1228
      %v1241 = vmax.f32 %v1216, %v1229
      %v1242 = vmax.f32 %v1217, %v1230
      %v1243 = vmax.f32 %v1218, %v1231
      %v1244 = vmax.f32 %v1219, %v1232
      %v1245 = vmax.f32 %v1220, %v1233
      %v1246 = vmax.f32 %v1221, %v1234
      %v1247 = vmax.f32 %v1222, %v1235
      %v1248 = vmax.f32 %v1223, %v1236
      %v1249 = vmax.f32 %v1224, %v1237
      %v1250 = vmax.f32 %v1225, %v1238
      %v1251 = vmax.f32 %v1226, %v1239
      %s1252 = scalar_lea.vmem [#allocation2], 384
      %v1253 = vld [vmem:[%s1252] sm:$0xff]
      %v1254 = vld [vmem:[%s1252 + $0x8] sm:$0xff]
      %v1255 = vld [vmem:[%s1252 + $0x10] sm:$0xff]
      %v1256 = vld [vmem:[%s1252 + $0x18] sm:$0xff]
      %v1257 = vld [vmem:[%s1252 + $0x20] sm:$0xff]
      %v1258 = vld [vmem:[%s1252 + $0x28] sm:$0xff]
      %v1259 = vld [vmem:[%s1252 + $0x30] sm:$0xff]
      %v1260 = vld [vmem:[%s1252 + $0x38] sm:$0xff]
      %v1261 = vld [vmem:[%s1252 + $0x40] sm:$0xff]
      %v1262 = vld [vmem:[%s1252 + $0x48] sm:$0xff]
      %v1263 = vld [vmem:[%s1252 + $0x50] sm:$0xff]
      %v1264 = vld [vmem:[%s1252 + $0x58] sm:$0xff]
      %v1265 = vmax.f32 %v1240, %v1253
      %v1266 = vmax.f32 %v1241, %v1254
      %v1267 = vmax.f32 %v1242, %v1255
      %v1268 = vmax.f32 %v1243, %v1256
      %v1269 = vmax.f32 %v1244, %v1257
      %v1270 = vmax.f32 %v1245, %v1258
      %v1271 = vmax.f32 %v1246, %v1259
      %v1272 = vmax.f32 %v1247, %v1260
      %v1273 = vmax.f32 %v1248, %v1261
      %v1274 = vmax.f32 %v1249, %v1262
      %v1275 = vmax.f32 %v1250, %v1263
      %v1276 = vmax.f32 %v1251, %v1264
      %v1289 = vrot.slane %v1265, 1
      %v1290 = vrot.slane %v1266, 1
      %v1291 = vsel %vm457, %v1289, %v1290
      %v1292 = vrot.slane %v1267, 1
      %v1293 = vsel %vm457, %v1290, %v1292
      %v1294 = vrot.slane %v1268, 1
      %v1295 = vrot.slane %v1269, 1
      %v1296 = vsel %vm457, %v1294, %v1295
      %v1297 = vrot.slane %v1270, 1
      %v1298 = vsel %vm457, %v1295, %v1297
      %v1299 = vrot.slane %v1271, 1
      %v1300 = vrot.slane %v1272, 1
      %v1301 = vsel %vm457, %v1299, %v1300
      %v1302 = vrot.slane %v1273, 1
      %v1303 = vsel %vm457, %v1300, %v1302
      %v1304 = vrot.slane %v1274, 1
      %v1305 = vrot.slane %v1275, 1
      %v1306 = vsel %vm457, %v1304, %v1305
      %v1307 = vrot.slane %v1276, 1
      %v1308 = vsel %vm457, %v1305, %v1307
      %v1317 = vmax.f32 %v1265, %v1291
      %v1318 = vmax.f32 %v1266, %v1293
      %v1319 = vmax.f32 %v1268, %v1296
      %v1320 = vmax.f32 %v1269, %v1298
      %v1321 = vmax.f32 %v1271, %v1301
      %v1322 = vmax.f32 %v1272, %v1303
      %v1323 = vmax.f32 %v1274, %v1306
      %v1324 = vmax.f32 %v1275, %v1308
      %v1325 = vrot.slane %v1265, 2
      %v1326 = vrot.slane %v1266, 2
      %v1327 = vsel %vm494, %v1325, %v1326
      %v1328 = vrot.slane %v1267, 2
      %v1329 = vsel %vm494, %v1326, %v1328
      %v1330 = vrot.slane %v1268, 2
      %v1331 = vrot.slane %v1269, 2
      %v1332 = vsel %vm494, %v1330, %v1331
      %v1333 = vrot.slane %v1270, 2
      %v1334 = vsel %vm494, %v1331, %v1333
      %v1335 = vrot.slane %v1271, 2
      %v1336 = vrot.slane %v1272, 2
      %v1337 = vsel %vm494, %v1335, %v1336
      %v1338 = vrot.slane %v1273, 2
      %v1339 = vsel %vm494, %v1336, %v1338
      %v1340 = vrot.slane %v1274, 2
      %v1341 = vrot.slane %v1275, 2
      %v1342 = vsel %vm494, %v1340, %v1341
      %v1343 = vrot.slane %v1276, 2
      %v1344 = vsel %vm494, %v1341, %v1343
      %v1353 = vmax.f32 %v1317, %v1327
      %v1354 = vmax.f32 %v1318, %v1329
      %v1355 = vmax.f32 %v1319, %v1332
      %v1356 = vmax.f32 %v1320, %v1334
      %v1357 = vmax.f32 %v1321, %v1337
      %v1358 = vmax.f32 %v1322, %v1339
      %v1359 = vmax.f32 %v1323, %v1342
      %v1360 = vmax.f32 %v1324, %v1344
      %v1361 = vrot.slane %v1265, 3
      %v1362 = vrot.slane %v1266, 3
      %v1363 = vsel %vm531, %v1361, %v1362
      %v1364 = vrot.slane %v1267, 3
      %v1365 = vsel %vm531, %v1362, %v1364
      %v1366 = vrot.slane %v1268, 3
      %v1367 = vrot.slane %v1269, 3
      %v1368 = vsel %vm531, %v1366, %v1367
      %v1369 = vrot.slane %v1270, 3
      %v1370 = vsel %vm531, %v1367, %v1369
      %v1371 = vrot.slane %v1271, 3
      %v1372 = vrot.slane %v1272, 3
      %v1373 = vsel %vm531, %v1371, %v1372
      %v1374 = vrot.slane %v1273, 3
      %v1375 = vsel %vm531, %v1372, %v1374
      %v1376 = vrot.slane %v1274, 3
      %v1377 = vrot.slane %v1275, 3
      %v1378 = vsel %vm531, %v1376, %v1377
      %v1379 = vrot.slane %v1276, 3
      %v1380 = vsel %vm531, %v1377, %v1379
      %v1389 = vmax.f32 %v1353, %v1363
      %v1390 = vmax.f32 %v1354, %v1365
      %v1391 = vmax.f32 %v1355, %v1368
      %v1392 = vmax.f32 %v1356, %v1370
      %v1393 = vmax.f32 %v1357, %v1373
      %v1394 = vmax.f32 %v1358, %v1375
      %v1395 = vmax.f32 %v1359, %v1378
      %v1396 = vmax.f32 %v1360, %v1380
      %v1397 = vrot.slane %v1265, 4
      %v1398 = vrot.slane %v1266, 4
      %v1399 = vsel %vm568, %v1397, %v1398
      %v1400 = vrot.slane %v1267, 4
      %v1401 = vsel %vm568, %v1398, %v1400
      %v1402 = vrot.slane %v1268, 4
      %v1403 = vrot.slane %v1269, 4
      %v1404 = vsel %vm568, %v1402, %v1403
      %v1405 = vrot.slane %v1270, 4
      %v1406 = vsel %vm568, %v1403, %v1405
      %v1407 = vrot.slane %v1271, 4
      %v1408 = vrot.slane %v1272, 4
      %v1409 = vsel %vm568, %v1407, %v1408
      %v1410 = vrot.slane %v1273, 4
      %v1411 = vsel %vm568, %v1408, %v1410
      %v1412 = vrot.slane %v1274, 4
      %v1413 = vrot.slane %v1275, 4
      %v1414 = vsel %vm568, %v1412, %v1413
      %v1415 = vrot.slane %v1276, 4
      %v1416 = vsel %vm568, %v1413, %v1415
      %v1425 = vmax.f32 %v1389, %v1399
      %v1426 = vmax.f32 %v1390, %v1401
      %v1427 = vmax.f32 %v1391, %v1404
      %v1428 = vmax.f32 %v1392, %v1406
      %v1429 = vmax.f32 %v1393, %v1409
      %v1430 = vmax.f32 %v1394, %v1411
      %v1431 = vmax.f32 %v1395, %v1414
      %v1432 = vmax.f32 %v1396, %v1416
      %s1433 = scalar_lea.vmem %s147, 448
      %1434 = vst.msk [vmem:[%s1433] sm:$0xff] %vm148, %v1425
      %1435 = vst.msk [vmem:[%s1433 + $0x8] sm:$0xff] %vm148, %v1426
      %1436 = vst.msk [vmem:[%s1433 + $0x10] sm:$0xff] %vm148, %v1427
      %1437 = vst.msk [vmem:[%s1433 + $0x18] sm:$0xff] %vm148, %v1428
      %1438 = vst.msk [vmem:[%s1433 + $0x20] sm:$0xff] %vm148, %v1429
      %1439 = vst.msk [vmem:[%s1433 + $0x28] sm:$0xff] %vm148, %v1430
      %1440 = vst.msk [vmem:[%s1433 + $0x30] sm:$0xff] %vm148, %v1431
      %1441 = vst.msk [vmem:[%s1433 + $0x38] sm:$0xff] %vm148, %v1432
      %v1442 = vld [vmem:[%s605] sm:$0xff]
      %v1443 = vld [vmem:[%s605 + $0x8] sm:$0xff]
      %v1444 = vld [vmem:[%s605 + $0x10] sm:$0xff]
      %v1445 = vld [vmem:[%s605 + $0x18] sm:$0xff]
      %v1446 = vld [vmem:[%s605 + $0x20] sm:$0xff]
      %v1447 = vld [vmem:[%s605 + $0x28] sm:$0xff]
      %v1448 = vld [vmem:[%s605 + $0x30] sm:$0xff]
      %v1449 = vld [vmem:[%s605 + $0x38] sm:$0xff]
      %1450 = vst.msk [vmem:[%s162 + $0x2] sm:$0xff] %vm148, %v1442
      %1451 = vst.msk [vmem:[%s162 + $0xa] sm:$0xff] %vm148, %v1443
      %1452 = vst.msk [vmem:[%s162 + $0x1a] sm:$0xff] %vm148, %v1444
      %1453 = vst.msk [vmem:[%s162 + $0x22] sm:$0xff] %vm148, %v1445
      %1454 = vst.msk [vmem:[%s162 + $0x32] sm:$0xff] %vm148, %v1446
      %1455 = vst.msk [vmem:[%s162 + $0x3a] sm:$0xff] %vm148, %v1447
      %1456 = vst.msk [vmem:[%s162 + $0x4a] sm:$0xff] %vm148, %v1448
      %1457 = vst.msk [vmem:[%s162 + $0x52] sm:$0xff] %vm148, %v1449
      %v1458 = vld [vmem:[%s881] sm:$0xff]
      %v1459 = vld [vmem:[%s881 + $0x8] sm:$0xff]
      %v1460 = vld [vmem:[%s881 + $0x10] sm:$0xff]
      %v1461 = vld [vmem:[%s881 + $0x18] sm:$0xff]
      %v1462 = vld [vmem:[%s881 + $0x20] sm:$0xff]
      %v1463 = vld [vmem:[%s881 + $0x28] sm:$0xff]
      %v1464 = vld [vmem:[%s881 + $0x30] sm:$0xff]
      %v1465 = vld [vmem:[%s881 + $0x38] sm:$0xff]
      %1466 = vst.msk [vmem:[%s291 + $0x2] sm:$0xff] %vm148, %v1458
      %1467 = vst.msk [vmem:[%s291 + $0xa] sm:$0xff] %vm148, %v1459
      %1468 = vst.msk [vmem:[%s291 + $0x1a] sm:$0xff] %vm148, %v1460
      %1469 = vst.msk [vmem:[%s291 + $0x22] sm:$0xff] %vm148, %v1461
      %1470 = vst.msk [vmem:[%s291 + $0x32] sm:$0xff] %vm148, %v1462
      %1471 = vst.msk [vmem:[%s291 + $0x3a] sm:$0xff] %vm148, %v1463
      %1472 = vst.msk [vmem:[%s291 + $0x4a] sm:$0xff] %vm148, %v1464
      %1473 = vst.msk [vmem:[%s291 + $0x52] sm:$0xff] %vm148, %v1465
      %v1474 = vld [vmem:[%s1157] sm:$0xff]
      %v1475 = vld [vmem:[%s1157 + $0x8] sm:$0xff]
      %v1476 = vld [vmem:[%s1157 + $0x10] sm:$0xff]
      %v1477 = vld [vmem:[%s1157 + $0x18] sm:$0xff]
      %v1478 = vld [vmem:[%s1157 + $0x20] sm:$0xff]
      %v1479 = vld [vmem:[%s1157 + $0x28] sm:$0xff]
      %v1480 = vld [vmem:[%s1157 + $0x30] sm:$0xff]
      %v1481 = vld [vmem:[%s1157 + $0x38] sm:$0xff]
      %1482 = vst.msk [vmem:[%s308 + $0x2] sm:$0xff] %vm148, %v1474
      %1483 = vst.msk [vmem:[%s308 + $0xa] sm:$0xff] %vm148, %v1475
      %1484 = vst.msk [vmem:[%s308 + $0x1a] sm:$0xff] %vm148, %v1476
      %1485 = vst.msk [vmem:[%s308 + $0x22] sm:$0xff] %vm148, %v1477
      %1486 = vst.msk [vmem:[%s308 + $0x32] sm:$0xff] %vm148, %v1478
      %1487 = vst.msk [vmem:[%s308 + $0x3a] sm:$0xff] %vm148, %v1479
      %1488 = vst.msk [vmem:[%s308 + $0x4a] sm:$0xff] %vm148, %v1480
      %1489 = vst.msk [vmem:[%s308 + $0x52] sm:$0xff] %vm148, %v1481
      %v1490 = vld [vmem:[%s1433] sm:$0xff]
      %v1491 = vld [vmem:[%s1433 + $0x8] sm:$0xff]
      %v1492 = vld [vmem:[%s1433 + $0x10] sm:$0xff]
      %v1493 = vld [vmem:[%s1433 + $0x18] sm:$0xff]
      %v1494 = vld [vmem:[%s1433 + $0x20] sm:$0xff]
      %v1495 = vld [vmem:[%s1433 + $0x28] sm:$0xff]
      %v1496 = vld [vmem:[%s1433 + $0x30] sm:$0xff]
      %v1497 = vld [vmem:[%s1433 + $0x38] sm:$0xff]
      %1498 = vst.msk [vmem:[%s325 + $0x2] sm:$0xff] %vm148, %v1490
      %1499 = vst.msk [vmem:[%s325 + $0xa] sm:$0xff] %vm148, %v1491
      %1500 = vst.msk [vmem:[%s325 + $0x1a] sm:$0xff] %vm148, %v1492
      %1501 = vst.msk [vmem:[%s325 + $0x22] sm:$0xff] %vm148, %v1493
      %1502 = vst.msk [vmem:[%s325 + $0x32] sm:$0xff] %vm148, %v1494
      %1503 = vst.msk [vmem:[%s325 + $0x3a] sm:$0xff] %vm148, %v1495
      %1504 = vst.msk [vmem:[%s325 + $0x4a] sm:$0xff] %vm148, %v1496
      %1505 = vst.msk [vmem:[%s325 + $0x52] sm:$0xff] %vm148, %v1497
      %v1506 = vld [vmem:[#allocation2] sm:$0xff]
      %v1507 = vld [vmem:[#allocation2 + $0x8] sm:$0xff]
      %v1508 = vld [vmem:[#allocation2 + $0x10] sm:$0xff]
      %v1509 = vld [vmem:[#allocation2 + $0x18] sm:$0xff]
      %v1510 = vld [vmem:[#allocation2 + $0x20] sm:$0xff]
      %v1511 = vld [vmem:[#allocation2 + $0x28] sm:$0xff]
      %v1512 = vld [vmem:[#allocation2 + $0x30] sm:$0xff]
      %v1513 = vld [vmem:[#allocation2 + $0x38] sm:$0xff]
      %v1514 = vld [vmem:[#allocation2 + $0x40] sm:$0xff]
      %v1515 = vld [vmem:[#allocation2 + $0x48] sm:$0xff]
      %v1516 = vld [vmem:[#allocation2 + $0x50] sm:$0xff]
      %v1517 = vld [vmem:[#allocation2 + $0x58] sm:$0xff]
      %v1518 = vld [vmem:[%s346] sm:$0xff]
      %v1519 = vld [vmem:[%s346 + $0x8] sm:$0xff]
      %v1520 = vld [vmem:[%s346 + $0x10] sm:$0xff]
      %v1521 = vld [vmem:[%s346 + $0x18] sm:$0xff]
      %v1522 = vld [vmem:[%s346 + $0x20] sm:$0xff]
      %v1523 = vld [vmem:[%s346 + $0x28] sm:$0xff]
      %v1524 = vld [vmem:[%s346 + $0x30] sm:$0xff]
      %v1525 = vld [vmem:[%s346 + $0x38] sm:$0xff]
      %v1526 = vld [vmem:[%s346 + $0x40] sm:$0xff]
      %v1527 = vld [vmem:[%s346 + $0x48] sm:$0xff]
      %v1528 = vld [vmem:[%s346 + $0x50] sm:$0xff]
      %v1529 = vld [vmem:[%s346 + $0x58] sm:$0xff]
      %v1530 = vmax.f32 %v1506, %v1518
      %v1531 = vmax.f32 %v1507, %v1519
      %v1532 = vmax.f32 %v1508, %v1520
      %v1533 = vmax.f32 %v1509, %v1521
      %v1534 = vmax.f32 %v1510, %v1522
      %v1535 = vmax.f32 %v1511, %v1523
      %v1536 = vmax.f32 %v1512, %v1524
      %v1537 = vmax.f32 %v1513, %v1525
      %v1538 = vmax.f32 %v1514, %v1526
      %v1539 = vmax.f32 %v1515, %v1527
      %v1540 = vmax.f32 %v1516, %v1528
      %v1541 = vmax.f32 %v1517, %v1529
      %v1542 = vld [vmem:[%s162] sm:$0xff]
      %v1543 = vld [vmem:[%s162 + $0x8] sm:$0xff]
      %v1544 = vld [vmem:[%s162 + $0x10] sm:$0xff]
      %v1545 = vld [vmem:[%s162 + $0x18] sm:$0xff]
      %v1546 = vld [vmem:[%s162 + $0x20] sm:$0xff]
      %v1547 = vld [vmem:[%s162 + $0x28] sm:$0xff]
      %v1548 = vld [vmem:[%s162 + $0x30] sm:$0xff]
      %v1549 = vld [vmem:[%s162 + $0x38] sm:$0xff]
      %v1550 = vld [vmem:[%s162 + $0x40] sm:$0xff]
      %v1551 = vld [vmem:[%s162 + $0x48] sm:$0xff]
      %v1552 = vld [vmem:[%s162 + $0x50] sm:$0xff]
      %v1553 = vld [vmem:[%s162 + $0x58] sm:$0xff]
      %v1554 = vmax.f32 %v1530, %v1542
      %v1555 = vmax.f32 %v1531, %v1543
      %v1556 = vmax.f32 %v1532, %v1544
      %v1557 = vmax.f32 %v1533, %v1545
      %v1558 = vmax.f32 %v1534, %v1546
      %v1559 = vmax.f32 %v1535, %v1547
      %v1560 = vmax.f32 %v1536, %v1548
      %v1561 = vmax.f32 %v1537, %v1549
      %v1562 = vmax.f32 %v1538, %v1550
      %v1563 = vmax.f32 %v1539, %v1551
      %v1564 = vmax.f32 %v1540, %v1552
      %v1565 = vmax.f32 %v1541, %v1553
      %v1566 = vld [vmem:[%s395] sm:$0xff]
      %v1567 = vld [vmem:[%s395 + $0x8] sm:$0xff]
      %v1568 = vld [vmem:[%s395 + $0x10] sm:$0xff]
      %v1569 = vld [vmem:[%s395 + $0x18] sm:$0xff]
      %v1570 = vld [vmem:[%s395 + $0x20] sm:$0xff]
      %v1571 = vld [vmem:[%s395 + $0x28] sm:$0xff]
      %v1572 = vld [vmem:[%s395 + $0x30] sm:$0xff]
      %v1573 = vld [vmem:[%s395 + $0x38] sm:$0xff]
      %v1574 = vld [vmem:[%s395 + $0x40] sm:$0xff]
      %v1575 = vld [vmem:[%s395 + $0x48] sm:$0xff]
      %v1576 = vld [vmem:[%s395 + $0x50] sm:$0xff]
      %v1577 = vld [vmem:[%s395 + $0x58] sm:$0xff]
      %v1578 = vmax.f32 %v1554, %v1566
      %v1579 = vmax.f32 %v1555, %v1567
      %v1580 = vmax.f32 %v1556, %v1568
      %v1581 = vmax.f32 %v1557, %v1569
      %v1582 = vmax.f32 %v1558, %v1570
      %v1583 = vmax.f32 %v1559, %v1571
      %v1584 = vmax.f32 %v1560, %v1572
      %v1585 = vmax.f32 %v1561, %v1573
      %v1586 = vmax.f32 %v1562, %v1574
      %v1587 = vmax.f32 %v1563, %v1575
      %v1588 = vmax.f32 %v1564, %v1576
      %v1589 = vmax.f32 %v1565, %v1577
      %v1590 = vld [vmem:[%s420] sm:$0xff]
      %v1591 = vld [vmem:[%s420 + $0x8] sm:$0xff]
      %v1592 = vld [vmem:[%s420 + $0x10] sm:$0xff]
      %v1593 = vld [vmem:[%s420 + $0x18] sm:$0xff]
      %v1594 = vld [vmem:[%s420 + $0x20] sm:$0xff]
      %v1595 = vld [vmem:[%s420 + $0x28] sm:$0xff]
      %v1596 = vld [vmem:[%s420 + $0x30] sm:$0xff]
      %v1597 = vld [vmem:[%s420 + $0x38] sm:$0xff]
      %v1598 = vld [vmem:[%s420 + $0x40] sm:$0xff]
      %v1599 = vld [vmem:[%s420 + $0x48] sm:$0xff]
      %v1600 = vld [vmem:[%s420 + $0x50] sm:$0xff]
      %v1601 = vld [vmem:[%s420 + $0x58] sm:$0xff]
      %v1602 = vmax.f32 %v1578, %v1590
      %v1603 = vmax.f32 %v1579, %v1591
      %v1604 = vmax.f32 %v1580, %v1592
      %v1605 = vmax.f32 %v1581, %v1593
      %v1606 = vmax.f32 %v1582, %v1594
      %v1607 = vmax.f32 %v1583, %v1595
      %v1608 = vmax.f32 %v1584, %v1596
      %v1609 = vmax.f32 %v1585, %v1597
      %v1610 = vmax.f32 %v1586, %v1598
      %v1611 = vmax.f32 %v1587, %v1599
      %v1612 = vmax.f32 %v1588, %v1600
      %v1613 = vmax.f32 %v1589, %v1601
      %v1626 = vrot.slane %v1602, 1
      %v1627 = vrot.slane %v1603, 1
      %v1628 = vsel %vm457, %v1626, %v1627
      %v1629 = vrot.slane %v1604, 1
      %v1630 = vsel %vm457, %v1627, %v1629
      %v1631 = vrot.slane %v1605, 1
      %v1632 = vrot.slane %v1606, 1
      %v1633 = vsel %vm457, %v1631, %v1632
      %v1634 = vrot.slane %v1607, 1
      %v1635 = vsel %vm457, %v1632, %v1634
      %v1636 = vrot.slane %v1608, 1
      %v1637 = vrot.slane %v1609, 1
      %v1638 = vsel %vm457, %v1636, %v1637
      %v1639 = vrot.slane %v1610, 1
      %v1640 = vsel %vm457, %v1637, %v1639
      %v1641 = vrot.slane %v1611, 1
      %v1642 = vrot.slane %v1612, 1
      %v1643 = vsel %vm457, %v1641, %v1642
      %v1644 = vrot.slane %v1613, 1
      %v1645 = vsel %vm457, %v1642, %v1644
      %v1654 = vmax.f32 %v1602, %v1628
      %v1655 = vmax.f32 %v1603, %v1630
      %v1656 = vmax.f32 %v1605, %v1633
      %v1657 = vmax.f32 %v1606, %v1635
      %v1658 = vmax.f32 %v1608, %v1638
      %v1659 = vmax.f32 %v1609, %v1640
      %v1660 = vmax.f32 %v1611, %v1643
      %v1661 = vmax.f32 %v1612, %v1645
      %v1662 = vrot.slane %v1602, 2
      %v1663 = vrot.slane %v1603, 2
      %v1664 = vsel %vm494, %v1662, %v1663
      %v1665 = vrot.slane %v1604, 2
      %v1666 = vsel %vm494, %v1663, %v1665
      %v1667 = vrot.slane %v1605, 2
      %v1668 = vrot.slane %v1606, 2
      %v1669 = vsel %vm494, %v1667, %v1668
      %v1670 = vrot.slane %v1607, 2
      %v1671 = vsel %vm494, %v1668, %v1670
      %v1672 = vrot.slane %v1608, 2
      %v1673 = vrot.slane %v1609, 2
      %v1674 = vsel %vm494, %v1672, %v1673
      %v1675 = vrot.slane %v1610, 2
      %v1676 = vsel %vm494, %v1673, %v1675
      %v1677 = vrot.slane %v1611, 2
      %v1678 = vrot.slane %v1612, 2
      %v1679 = vsel %vm494, %v1677, %v1678
      %v1680 = vrot.slane %v1613, 2
      %v1681 = vsel %vm494, %v1678, %v1680
      %v1690 = vmax.f32 %v1654, %v1664
      %v1691 = vmax.f32 %v1655, %v1666
      %v1692 = vmax.f32 %v1656, %v1669
      %v1693 = vmax.f32 %v1657, %v1671
      %v1694 = vmax.f32 %v1658, %v1674
      %v1695 = vmax.f32 %v1659, %v1676
      %v1696 = vmax.f32 %v1660, %v1679
      %v1697 = vmax.f32 %v1661, %v1681
      %v1698 = vrot.slane %v1602, 3
      %v1699 = vrot.slane %v1603, 3
      %v1700 = vsel %vm531, %v1698, %v1699
      %v1701 = vrot.slane %v1604, 3
      %v1702 = vsel %vm531, %v1699, %v1701
      %v1703 = vrot.slane %v1605, 3
      %v1704 = vrot.slane %v1606, 3
      %v1705 = vsel %vm531, %v1703, %v1704
      %v1706 = vrot.slane %v1607, 3
      %v1707 = vsel %vm531, %v1704, %v1706
      %v1708 = vrot.slane %v1608, 3
      %v1709 = vrot.slane %v1609, 3
      %v1710 = vsel %vm531, %v1708, %v1709
      %v1711 = vrot.slane %v1610, 3
      %v1712 = vsel %vm531, %v1709, %v1711
      %v1713 = vrot.slane %v1611, 3
      %v1714 = vrot.slane %v1612, 3
      %v1715 = vsel %vm531, %v1713, %v1714
      %v1716 = vrot.slane %v1613, 3
      %v1717 = vsel %vm531, %v1714, %v1716
      %v1726 = vmax.f32 %v1690, %v1700
      %v1727 = vmax.f32 %v1691, %v1702
      %v1728 = vmax.f32 %v1692, %v1705
      %v1729 = vmax.f32 %v1693, %v1707
      %v1730 = vmax.f32 %v1694, %v1710
      %v1731 = vmax.f32 %v1695, %v1712
      %v1732 = vmax.f32 %v1696, %v1715
      %v1733 = vmax.f32 %v1697, %v1717
      %v1734 = vrot.slane %v1602, 4
      %v1735 = vrot.slane %v1603, 4
      %v1736 = vsel %vm568, %v1734, %v1735
      %v1737 = vrot.slane %v1604, 4
      %v1738 = vsel %vm568, %v1735, %v1737
      %v1739 = vrot.slane %v1605, 4
      %v1740 = vrot.slane %v1606, 4
      %v1741 = vsel %vm568, %v1739, %v1740
      %v1742 = vrot.slane %v1607, 4
      %v1743 = vsel %vm568, %v1740, %v1742
      %v1744 = vrot.slane %v1608, 4
      %v1745 = vrot.slane %v1609, 4
      %v1746 = vsel %vm568, %v1744, %v1745
      %v1747 = vrot.slane %v1610, 4
      %v1748 = vsel %vm568, %v1745, %v1747
      %v1749 = vrot.slane %v1611, 4
      %v1750 = vrot.slane %v1612, 4
      %v1751 = vsel %vm568, %v1749, %v1750
      %v1752 = vrot.slane %v1613, 4
      %v1753 = vsel %vm568, %v1750, %v1752
      %v1762 = vmax.f32 %v1726, %v1736
      %v1763 = vmax.f32 %v1727, %v1738
      %v1764 = vmax.f32 %v1728, %v1741
      %v1765 = vmax.f32 %v1729, %v1743
      %v1766 = vmax.f32 %v1730, %v1746
      %v1767 = vmax.f32 %v1731, %v1748
      %v1768 = vmax.f32 %v1732, %v1751
      %v1769 = vmax.f32 %v1733, %v1753
      %s1770 = scalar_lea.vmem %s147, 512
      %1771 = vst.msk [vmem:[%s1770] sm:$0xff] %vm148, %v1762
      %1772 = vst.msk [vmem:[%s1770 + $0x8] sm:$0xff] %vm148, %v1763
      %1773 = vst.msk [vmem:[%s1770 + $0x10] sm:$0xff] %vm148, %v1764
      %1774 = vst.msk [vmem:[%s1770 + $0x18] sm:$0xff] %vm148, %v1765
      %1775 = vst.msk [vmem:[%s1770 + $0x20] sm:$0xff] %vm148, %v1766
      %1776 = vst.msk [vmem:[%s1770 + $0x28] sm:$0xff] %vm148, %v1767
      %1777 = vst.msk [vmem:[%s1770 + $0x30] sm:$0xff] %vm148, %v1768
      %1778 = vst.msk [vmem:[%s1770 + $0x38] sm:$0xff] %vm148, %v1769
      %v1779 = vld [vmem:[%s420] sm:$0xff]
      %v1780 = vld [vmem:[%s420 + $0x8] sm:$0xff]
      %v1781 = vld [vmem:[%s420 + $0x10] sm:$0xff]
      %v1782 = vld [vmem:[%s420 + $0x18] sm:$0xff]
      %v1783 = vld [vmem:[%s420 + $0x20] sm:$0xff]
      %v1784 = vld [vmem:[%s420 + $0x28] sm:$0xff]
      %v1785 = vld [vmem:[%s420 + $0x30] sm:$0xff]
      %v1786 = vld [vmem:[%s420 + $0x38] sm:$0xff]
      %v1787 = vld [vmem:[%s420 + $0x40] sm:$0xff]
      %v1788 = vld [vmem:[%s420 + $0x48] sm:$0xff]
      %v1789 = vld [vmem:[%s420 + $0x50] sm:$0xff]
      %v1790 = vld [vmem:[%s420 + $0x58] sm:$0xff]
      %v1791 = vld [vmem:[%s626] sm:$0xff]
      %v1792 = vld [vmem:[%s626 + $0x8] sm:$0xff]
      %v1793 = vld [vmem:[%s626 + $0x10] sm:$0xff]
      %v1794 = vld [vmem:[%s626 + $0x18] sm:$0xff]
      %v1795 = vld [vmem:[%s626 + $0x20] sm:$0xff]
      %v1796 = vld [vmem:[%s626 + $0x28] sm:$0xff]
      %v1797 = vld [vmem:[%s626 + $0x30] sm:$0xff]
      %v1798 = vld [vmem:[%s626 + $0x38] sm:$0xff]
      %v1799 = vld [vmem:[%s626 + $0x40] sm:$0xff]
      %v1800 = vld [vmem:[%s626 + $0x48] sm:$0xff]
      %v1801 = vld [vmem:[%s626 + $0x50] sm:$0xff]
      %v1802 = vld [vmem:[%s626 + $0x58] sm:$0xff]
      %v1803 = vmax.f32 %v1779, %v1791
      %v1804 = vmax.f32 %v1780, %v1792
      %v1805 = vmax.f32 %v1781, %v1793
      %v1806 = vmax.f32 %v1782, %v1794
      %v1807 = vmax.f32 %v1783, %v1795
      %v1808 = vmax.f32 %v1784, %v1796
      %v1809 = vmax.f32 %v1785, %v1797
      %v1810 = vmax.f32 %v1786, %v1798
      %v1811 = vmax.f32 %v1787, %v1799
      %v1812 = vmax.f32 %v1788, %v1800
      %v1813 = vmax.f32 %v1789, %v1801
      %v1814 = vmax.f32 %v1790, %v1802
      %v1815 = vld [vmem:[%s291] sm:$0xff]
      %v1816 = vld [vmem:[%s291 + $0x8] sm:$0xff]
      %v1817 = vld [vmem:[%s291 + $0x10] sm:$0xff]
      %v1818 = vld [vmem:[%s291 + $0x18] sm:$0xff]
      %v1819 = vld [vmem:[%s291 + $0x20] sm:$0xff]
      %v1820 = vld [vmem:[%s291 + $0x28] sm:$0xff]
      %v1821 = vld [vmem:[%s291 + $0x30] sm:$0xff]
      %v1822 = vld [vmem:[%s291 + $0x38] sm:$0xff]
      %v1823 = vld [vmem:[%s291 + $0x40] sm:$0xff]
      %v1824 = vld [vmem:[%s291 + $0x48] sm:$0xff]
      %v1825 = vld [vmem:[%s291 + $0x50] sm:$0xff]
      %v1826 = vld [vmem:[%s291 + $0x58] sm:$0xff]
      %v1827 = vmax.f32 %v1803, %v1815
      %v1828 = vmax.f32 %v1804, %v1816
      %v1829 = vmax.f32 %v1805, %v1817
      %v1830 = vmax.f32 %v1806, %v1818
      %v1831 = vmax.f32 %v1807, %v1819
      %v1832 = vmax.f32 %v1808, %v1820
      %v1833 = vmax.f32 %v1809, %v1821
      %v1834 = vmax.f32 %v1810, %v1822
      %v1835 = vmax.f32 %v1811, %v1823
      %v1836 = vmax.f32 %v1812, %v1824
      %v1837 = vmax.f32 %v1813, %v1825
      %v1838 = vmax.f32 %v1814, %v1826
      %v1839 = vld [vmem:[%s675] sm:$0xff]
      %v1840 = vld [vmem:[%s675 + $0x8] sm:$0xff]
      %v1841 = vld [vmem:[%s675 + $0x10] sm:$0xff]
      %v1842 = vld [vmem:[%s675 + $0x18] sm:$0xff]
      %v1843 = vld [vmem:[%s675 + $0x20] sm:$0xff]
      %v1844 = vld [vmem:[%s675 + $0x28] sm:$0xff]
      %v1845 = vld [vmem:[%s675 + $0x30] sm:$0xff]
      %v1846 = vld [vmem:[%s675 + $0x38] sm:$0xff]
      %v1847 = vld [vmem:[%s675 + $0x40] sm:$0xff]
      %v1848 = vld [vmem:[%s675 + $0x48] sm:$0xff]
      %v1849 = vld [vmem:[%s675 + $0x50] sm:$0xff]
      %v1850 = vld [vmem:[%s675 + $0x58] sm:$0xff]
      %v1851 = vmax.f32 %v1827, %v1839
      %v1852 = vmax.f32 %v1828, %v1840
      %v1853 = vmax.f32 %v1829, %v1841
      %v1854 = vmax.f32 %v1830, %v1842
      %v1855 = vmax.f32 %v1831, %v1843
      %v1856 = vmax.f32 %v1832, %v1844
      %v1857 = vmax.f32 %v1833, %v1845
      %v1858 = vmax.f32 %v1834, %v1846
      %v1859 = vmax.f32 %v1835, %v1847
      %v1860 = vmax.f32 %v1836, %v1848
      %v1861 = vmax.f32 %v1837, %v1849
      %v1862 = vmax.f32 %v1838, %v1850
      %v1863 = vld [vmem:[%s700] sm:$0xff]
      %v1864 = vld [vmem:[%s700 + $0x8] sm:$0xff]
      %v1865 = vld [vmem:[%s700 + $0x10] sm:$0xff]
      %v1866 = vld [vmem:[%s700 + $0x18] sm:$0xff]
      %v1867 = vld [vmem:[%s700 + $0x20] sm:$0xff]
      %v1868 = vld [vmem:[%s700 + $0x28] sm:$0xff]
      %v1869 = vld [vmem:[%s700 + $0x30] sm:$0xff]
      %v1870 = vld [vmem:[%s700 + $0x38] sm:$0xff]
      %v1871 = vld [vmem:[%s700 + $0x40] sm:$0xff]
      %v1872 = vld [vmem:[%s700 + $0x48] sm:$0xff]
      %v1873 = vld [vmem:[%s700 + $0x50] sm:$0xff]
      %v1874 = vld [vmem:[%s700 + $0x58] sm:$0xff]
      %v1875 = vmax.f32 %v1851, %v1863
      %v1876 = vmax.f32 %v1852, %v1864
      %v1877 = vmax.f32 %v1853, %v1865
      %v1878 = vmax.f32 %v1854, %v1866
      %v1879 = vmax.f32 %v1855, %v1867
      %v1880 = vmax.f32 %v1856, %v1868
      %v1881 = vmax.f32 %v1857, %v1869
      %v1882 = vmax.f32 %v1858, %v1870
      %v1883 = vmax.f32 %v1859, %v1871
      %v1884 = vmax.f32 %v1860, %v1872
      %v1885 = vmax.f32 %v1861, %v1873
      %v1886 = vmax.f32 %v1862, %v1874
      %v1899 = vrot.slane %v1875, 1
      %v1900 = vrot.slane %v1876, 1
      %v1901 = vsel %vm457, %v1899, %v1900
      %v1902 = vrot.slane %v1877, 1
      %v1903 = vsel %vm457, %v1900, %v1902
      %v1904 = vrot.slane %v1878, 1
      %v1905 = vrot.slane %v1879, 1
      %v1906 = vsel %vm457, %v1904, %v1905
      %v1907 = vrot.slane %v1880, 1
      %v1908 = vsel %vm457, %v1905, %v1907
      %v1909 = vrot.slane %v1881, 1
      %v1910 = vrot.slane %v1882, 1
      %v1911 = vsel %vm457, %v1909, %v1910
      %v1912 = vrot.slane %v1883, 1
      %v1913 = vsel %vm457, %v1910, %v1912
      %v1914 = vrot.slane %v1884, 1
      %v1915 = vrot.slane %v1885, 1
      %v1916 = vsel %vm457, %v1914, %v1915
      %v1917 = vrot.slane %v1886, 1
      %v1918 = vsel %vm457, %v1915, %v1917
      %v1927 = vmax.f32 %v1875, %v1901
      %v1928 = vmax.f32 %v1876, %v1903
      %v1929 = vmax.f32 %v1878, %v1906
      %v1930 = vmax.f32 %v1879, %v1908
      %v1931 = vmax.f32 %v1881, %v1911
      %v1932 = vmax.f32 %v1882, %v1913
      %v1933 = vmax.f32 %v1884, %v1916
      %v1934 = vmax.f32 %v1885, %v1918
      %v1935 = vrot.slane %v1875, 2
      %v1936 = vrot.slane %v1876, 2
      %v1937 = vsel %vm494, %v1935, %v1936
      %v1938 = vrot.slane %v1877, 2
      %v1939 = vsel %vm494, %v1936, %v1938
      %v1940 = vrot.slane %v1878, 2
      %v1941 = vrot.slane %v1879, 2
      %v1942 = vsel %vm494, %v1940, %v1941
      %v1943 = vrot.slane %v1880, 2
      %v1944 = vsel %vm494, %v1941, %v1943
      %v1945 = vrot.slane %v1881, 2
      %v1946 = vrot.slane %v1882, 2
      %v1947 = vsel %vm494, %v1945, %v1946
      %v1948 = vrot.slane %v1883, 2
      %v1949 = vsel %vm494, %v1946, %v1948
      %v1950 = vrot.slane %v1884, 2
      %v1951 = vrot.slane %v1885, 2
      %v1952 = vsel %vm494, %v1950, %v1951
      %v1953 = vrot.slane %v1886, 2
      %v1954 = vsel %vm494, %v1951, %v1953
      %v1963 = vmax.f32 %v1927, %v1937
      %v1964 = vmax.f32 %v1928, %v1939
      %v1965 = vmax.f32 %v1929, %v1942
      %v1966 = vmax.f32 %v1930, %v1944
      %v1967 = vmax.f32 %v1931, %v1947
      %v1968 = vmax.f32 %v1932, %v1949
      %v1969 = vmax.f32 %v1933, %v1952
      %v1970 = vmax.f32 %v1934, %v1954
      %v1971 = vrot.slane %v1875, 3
      %v1972 = vrot.slane %v1876, 3
      %v1973 = vsel %vm531, %v1971, %v1972
      %v1974 = vrot.slane %v1877, 3
      %v1975 = vsel %vm531, %v1972, %v1974
      %v1976 = vrot.slane %v1878, 3
      %v1977 = vrot.slane %v1879, 3
      %v1978 = vsel %vm531, %v1976, %v1977
      %v1979 = vrot.slane %v1880, 3
      %v1980 = vsel %vm531, %v1977, %v1979
      %v1981 = vrot.slane %v1881, 3
      %v1982 = vrot.slane %v1882, 3
      %v1983 = vsel %vm531, %v1981, %v1982
      %v1984 = vrot.slane %v1883, 3
      %v1985 = vsel %vm531, %v1982, %v1984
      %v1986 = vrot.slane %v1884, 3
      %v1987 = vrot.slane %v1885, 3
      %v1988 = vsel %vm531, %v1986, %v1987
      %v1989 = vrot.slane %v1886, 3
      %v1990 = vsel %vm531, %v1987, %v1989
      %v1999 = vmax.f32 %v1963, %v1973
      %v2000 = vmax.f32 %v1964, %v1975
      %v2001 = vmax.f32 %v1965, %v1978
      %v2002 = vmax.f32 %v1966, %v1980
      %v2003 = vmax.f32 %v1967, %v1983
      %v2004 = vmax.f32 %v1968, %v1985
      %v2005 = vmax.f32 %v1969, %v1988
      %v2006 = vmax.f32 %v1970, %v1990
      %v2007 = vrot.slane %v1875, 4
      %v2008 = vrot.slane %v1876, 4
      %v2009 = vsel %vm568, %v2007, %v2008
      %v2010 = vrot.slane %v1877, 4
      %v2011 = vsel %vm568, %v2008, %v2010
      %v2012 = vrot.slane %v1878, 4
      %v2013 = vrot.slane %v1879, 4
      %v2014 = vsel %vm568, %v2012, %v2013
      %v2015 = vrot.slane %v1880, 4
      %v2016 = vsel %vm568, %v2013, %v2015
      %v2017 = vrot.slane %v1881, 4
      %v2018 = vrot.slane %v1882, 4
      %v2019 = vsel %vm568, %v2017, %v2018
      %v2020 = vrot.slane %v1883, 4
      %v2021 = vsel %vm568, %v2018, %v2020
      %v2022 = vrot.slane %v1884, 4
      %v2023 = vrot.slane %v1885, 4
      %v2024 = vsel %vm568, %v2022, %v2023
      %v2025 = vrot.slane %v1886, 4
      %v2026 = vsel %vm568, %v2023, %v2025
      %v2035 = vmax.f32 %v1999, %v2009
      %v2036 = vmax.f32 %v2000, %v2011
      %v2037 = vmax.f32 %v2001, %v2014
      %v2038 = vmax.f32 %v2002, %v2016
      %v2039 = vmax.f32 %v2003, %v2019
      %v2040 = vmax.f32 %v2004, %v2021
      %v2041 = vmax.f32 %v2005, %v2024
      %v2042 = vmax.f32 %v2006, %v2026
      %s2043 = scalar_lea.vmem %s147, 576
      %2044 = vst.msk [vmem:[%s2043] sm:$0xff] %vm148, %v2035
      %2045 = vst.msk [vmem:[%s2043 + $0x8] sm:$0xff] %vm148, %v2036
      %2046 = vst.msk [vmem:[%s2043 + $0x10] sm:$0xff] %vm148, %v2037
      %2047 = vst.msk [vmem:[%s2043 + $0x18] sm:$0xff] %vm148, %v2038
      %2048 = vst.msk [vmem:[%s2043 + $0x20] sm:$0xff] %vm148, %v2039
      %2049 = vst.msk [vmem:[%s2043 + $0x28] sm:$0xff] %vm148, %v2040
      %2050 = vst.msk [vmem:[%s2043 + $0x30] sm:$0xff] %vm148, %v2041
      %2051 = vst.msk [vmem:[%s2043 + $0x38] sm:$0xff] %vm148, %v2042
      %v2052 = vld [vmem:[%s700] sm:$0xff]
      %v2053 = vld [vmem:[%s700 + $0x8] sm:$0xff]
      %v2054 = vld [vmem:[%s700 + $0x10] sm:$0xff]
      %v2055 = vld [vmem:[%s700 + $0x18] sm:$0xff]
      %v2056 = vld [vmem:[%s700 + $0x20] sm:$0xff]
      %v2057 = vld [vmem:[%s700 + $0x28] sm:$0xff]
      %v2058 = vld [vmem:[%s700 + $0x30] sm:$0xff]
      %v2059 = vld [vmem:[%s700 + $0x38] sm:$0xff]
      %v2060 = vld [vmem:[%s700 + $0x40] sm:$0xff]
      %v2061 = vld [vmem:[%s700 + $0x48] sm:$0xff]
      %v2062 = vld [vmem:[%s700 + $0x50] sm:$0xff]
      %v2063 = vld [vmem:[%s700 + $0x58] sm:$0xff]
      %v2064 = vld [vmem:[%s902] sm:$0xff]
      %v2065 = vld [vmem:[%s902 + $0x8] sm:$0xff]
      %v2066 = vld [vmem:[%s902 + $0x10] sm:$0xff]
      %v2067 = vld [vmem:[%s902 + $0x18] sm:$0xff]
      %v2068 = vld [vmem:[%s902 + $0x20] sm:$0xff]
      %v2069 = vld [vmem:[%s902 + $0x28] sm:$0xff]
      %v2070 = vld [vmem:[%s902 + $0x30] sm:$0xff]
      %v2071 = vld [vmem:[%s902 + $0x38] sm:$0xff]
      %v2072 = vld [vmem:[%s902 + $0x40] sm:$0xff]
      %v2073 = vld [vmem:[%s902 + $0x48] sm:$0xff]
      %v2074 = vld [vmem:[%s902 + $0x50] sm:$0xff]
      %v2075 = vld [vmem:[%s902 + $0x58] sm:$0xff]
      %v2076 = vmax.f32 %v2052, %v2064
      %v2077 = vmax.f32 %v2053, %v2065
      %v2078 = vmax.f32 %v2054, %v2066
      %v2079 = vmax.f32 %v2055, %v2067
      %v2080 = vmax.f32 %v2056, %v2068
      %v2081 = vmax.f32 %v2057, %v2069
      %v2082 = vmax.f32 %v2058, %v2070
      %v2083 = vmax.f32 %v2059, %v2071
      %v2084 = vmax.f32 %v2060, %v2072
      %v2085 = vmax.f32 %v2061, %v2073
      %v2086 = vmax.f32 %v2062, %v2074
      %v2087 = vmax.f32 %v2063, %v2075
      %v2088 = vld [vmem:[%s308] sm:$0xff]
      %v2089 = vld [vmem:[%s308 + $0x8] sm:$0xff]
      %v2090 = vld [vmem:[%s308 + $0x10] sm:$0xff]
      %v2091 = vld [vmem:[%s308 + $0x18] sm:$0xff]
      %v2092 = vld [vmem:[%s308 + $0x20] sm:$0xff]
      %v2093 = vld [vmem:[%s308 + $0x28] sm:$0xff]
      %v2094 = vld [vmem:[%s308 + $0x30] sm:$0xff]
      %v2095 = vld [vmem:[%s308 + $0x38] sm:$0xff]
      %v2096 = vld [vmem:[%s308 + $0x40] sm:$0xff]
      %v2097 = vld [vmem:[%s308 + $0x48] sm:$0xff]
      %v2098 = vld [vmem:[%s308 + $0x50] sm:$0xff]
      %v2099 = vld [vmem:[%s308 + $0x58] sm:$0xff]
      %v2100 = vmax.f32 %v2076, %v2088
      %v2101 = vmax.f32 %v2077, %v2089
      %v2102 = vmax.f32 %v2078, %v2090
      %v2103 = vmax.f32 %v2079, %v2091
      %v2104 = vmax.f32 %v2080, %v2092
      %v2105 = vmax.f32 %v2081, %v2093
      %v2106 = vmax.f32 %v2082, %v2094
      %v2107 = vmax.f32 %v2083, %v2095
      %v2108 = vmax.f32 %v2084, %v2096
      %v2109 = vmax.f32 %v2085, %v2097
      %v2110 = vmax.f32 %v2086, %v2098
      %v2111 = vmax.f32 %v2087, %v2099
      %v2112 = vld [vmem:[%s951] sm:$0xff]
      %v2113 = vld [vmem:[%s951 + $0x8] sm:$0xff]
      %v2114 = vld [vmem:[%s951 + $0x10] sm:$0xff]
      %v2115 = vld [vmem:[%s951 + $0x18] sm:$0xff]
      %v2116 = vld [vmem:[%s951 + $0x20] sm:$0xff]
      %v2117 = vld [vmem:[%s951 + $0x28] sm:$0xff]
      %v2118 = vld [vmem:[%s951 + $0x30] sm:$0xff]
      %v2119 = vld [vmem:[%s951 + $0x38] sm:$0xff]
      %v2120 = vld [vmem:[%s951 + $0x40] sm:$0xff]
      %v2121 = vld [vmem:[%s951 + $0x48] sm:$0xff]
      %v2122 = vld [vmem:[%s951 + $0x50] sm:$0xff]
      %v2123 = vld [vmem:[%s951 + $0x58] sm:$0xff]
      %v2124 = vmax.f32 %v2100, %v2112
      %v2125 = vmax.f32 %v2101, %v2113
      %v2126 = vmax.f32 %v2102, %v2114
      %v2127 = vmax.f32 %v2103, %v2115
      %v2128 = vmax.f32 %v2104, %v2116
      %v2129 = vmax.f32 %v2105, %v2117
      %v2130 = vmax.f32 %v2106, %v2118
      %v2131 = vmax.f32 %v2107, %v2119
      %v2132 = vmax.f32 %v2108, %v2120
      %v2133 = vmax.f32 %v2109, %v2121
      %v2134 = vmax.f32 %v2110, %v2122
      %v2135 = vmax.f32 %v2111, %v2123
      %v2136 = vld [vmem:[%s976] sm:$0xff]
      %v2137 = vld [vmem:[%s976 + $0x8] sm:$0xff]
      %v2138 = vld [vmem:[%s976 + $0x10] sm:$0xff]
      %v2139 = vld [vmem:[%s976 + $0x18] sm:$0xff]
      %v2140 = vld [vmem:[%s976 + $0x20] sm:$0xff]
      %v2141 = vld [vmem:[%s976 + $0x28] sm:$0xff]
      %v2142 = vld [vmem:[%s976 + $0x30] sm:$0xff]
      %v2143 = vld [vmem:[%s976 + $0x38] sm:$0xff]
      %v2144 = vld [vmem:[%s976 + $0x40] sm:$0xff]
      %v2145 = vld [vmem:[%s976 + $0x48] sm:$0xff]
      %v2146 = vld [vmem:[%s976 + $0x50] sm:$0xff]
      %v2147 = vld [vmem:[%s976 + $0x58] sm:$0xff]
      %v2148 = vmax.f32 %v2124, %v2136
      %v2149 = vmax.f32 %v2125, %v2137
      %v2150 = vmax.f32 %v2126, %v2138
      %v2151 = vmax.f32 %v2127, %v2139
      %v2152 = vmax.f32 %v2128, %v2140
      %v2153 = vmax.f32 %v2129, %v2141
      %v2154 = vmax.f32 %v2130, %v2142
      %v2155 = vmax.f32 %v2131, %v2143
      %v2156 = vmax.f32 %v2132, %v2144
      %v2157 = vmax.f32 %v2133, %v2145
      %v2158 = vmax.f32 %v2134, %v2146
      %v2159 = vmax.f32 %v2135, %v2147
      %v2172 = vrot.slane %v2148, 1
      %v2173 = vrot.slane %v2149, 1
      %v2174 = vsel %vm457, %v2172, %v2173
      %v2175 = vrot.slane %v2150, 1
      %v2176 = vsel %vm457, %v2173, %v2175
      %v2177 = vrot.slane %v2151, 1
      %v2178 = vrot.slane %v2152, 1
      %v2179 = vsel %vm457, %v2177, %v2178
      %v2180 = vrot.slane %v2153, 1
      %v2181 = vsel %vm457, %v2178, %v2180
      %v2182 = vrot.slane %v2154, 1
      %v2183 = vrot.slane %v2155, 1
      %v2184 = vsel %vm457, %v2182, %v2183
      %v2185 = vrot.slane %v2156, 1
      %v2186 = vsel %vm457, %v2183, %v2185
      %v2187 = vrot.slane %v2157, 1
      %v2188 = vrot.slane %v2158, 1
      %v2189 = vsel %vm457, %v2187, %v2188
      %v2190 = vrot.slane %v2159, 1
      %v2191 = vsel %vm457, %v2188, %v2190
      %v2200 = vmax.f32 %v2148, %v2174
      %v2201 = vmax.f32 %v2149, %v2176
      %v2202 = vmax.f32 %v2151, %v2179
      %v2203 = vmax.f32 %v2152, %v2181
      %v2204 = vmax.f32 %v2154, %v2184
      %v2205 = vmax.f32 %v2155, %v2186
      %v2206 = vmax.f32 %v2157, %v2189
      %v2207 = vmax.f32 %v2158, %v2191
      %v2208 = vrot.slane %v2148, 2
      %v2209 = vrot.slane %v2149, 2
      %v2210 = vsel %vm494, %v2208, %v2209
      %v2211 = vrot.slane %v2150, 2
      %v2212 = vsel %vm494, %v2209, %v2211
      %v2213 = vrot.slane %v2151, 2
      %v2214 = vrot.slane %v2152, 2
      %v2215 = vsel %vm494, %v2213, %v2214
      %v2216 = vrot.slane %v2153, 2
      %v2217 = vsel %vm494, %v2214, %v2216
      %v2218 = vrot.slane %v2154, 2
      %v2219 = vrot.slane %v2155, 2
      %v2220 = vsel %vm494, %v2218, %v2219
      %v2221 = vrot.slane %v2156, 2
      %v2222 = vsel %vm494, %v2219, %v2221
      %v2223 = vrot.slane %v2157, 2
      %v2224 = vrot.slane %v2158, 2
      %v2225 = vsel %vm494, %v2223, %v2224
      %v2226 = vrot.slane %v2159, 2
      %v2227 = vsel %vm494, %v2224, %v2226
      %v2236 = vmax.f32 %v2200, %v2210
      %v2237 = vmax.f32 %v2201, %v2212
      %v2238 = vmax.f32 %v2202, %v2215
      %v2239 = vmax.f32 %v2203, %v2217
      %v2240 = vmax.f32 %v2204, %v2220
      %v2241 = vmax.f32 %v2205, %v2222
      %v2242 = vmax.f32 %v2206, %v2225
      %v2243 = vmax.f32 %v2207, %v2227
      %v2244 = vrot.slane %v2148, 3
      %v2245 = vrot.slane %v2149, 3
      %v2246 = vsel %vm531, %v2244, %v2245
      %v2247 = vrot.slane %v2150, 3
      %v2248 = vsel %vm531, %v2245, %v2247
      %v2249 = vrot.slane %v2151, 3
      %v2250 = vrot.slane %v2152, 3
      %v2251 = vsel %vm531, %v2249, %v2250
      %v2252 = vrot.slane %v2153, 3
      %v2253 = vsel %vm531, %v2250, %v2252
      %v2254 = vrot.slane %v2154, 3
      %v2255 = vrot.slane %v2155, 3
      %v2256 = vsel %vm531, %v2254, %v2255
      %v2257 = vrot.slane %v2156, 3
      %v2258 = vsel %vm531, %v2255, %v2257
      %v2259 = vrot.slane %v2157, 3
      %v2260 = vrot.slane %v2158, 3
      %v2261 = vsel %vm531, %v2259, %v2260
      %v2262 = vrot.slane %v2159, 3
      %v2263 = vsel %vm531, %v2260, %v2262
      %v2272 = vmax.f32 %v2236, %v2246
      %v2273 = vmax.f32 %v2237, %v2248
      %v2274 = vmax.f32 %v2238, %v2251
      %v2275 = vmax.f32 %v2239, %v2253
      %v2276 = vmax.f32 %v2240, %v2256
      %v2277 = vmax.f32 %v2241, %v2258
      %v2278 = vmax.f32 %v2242, %v2261
      %v2279 = vmax.f32 %v2243, %v2263
      %v2280 = vrot.slane %v2148, 4
      %v2281 = vrot.slane %v2149, 4
      %v2282 = vsel %vm568, %v2280, %v2281
      %v2283 = vrot.slane %v2150, 4
      %v2284 = vsel %vm568, %v2281, %v2283
      %v2285 = vrot.slane %v2151, 4
      %v2286 = vrot.slane %v2152, 4
      %v2287 = vsel %vm568, %v2285, %v2286
      %v2288 = vrot.slane %v2153, 4
      %v2289 = vsel %vm568, %v2286, %v2288
      %v2290 = vrot.slane %v2154, 4
      %v2291 = vrot.slane %v2155, 4
      %v2292 = vsel %vm568, %v2290, %v2291
      %v2293 = vrot.slane %v2156, 4
      %v2294 = vsel %vm568, %v2291, %v2293
      %v2295 = vrot.slane %v2157, 4
      %v2296 = vrot.slane %v2158, 4
      %v2297 = vsel %vm568, %v2295, %v2296
      %v2298 = vrot.slane %v2159, 4
      %v2299 = vsel %vm568, %v2296, %v2298
      %v2308 = vmax.f32 %v2272, %v2282
      %v2309 = vmax.f32 %v2273, %v2284
      %v2310 = vmax.f32 %v2274, %v2287
      %v2311 = vmax.f32 %v2275, %v2289
      %v2312 = vmax.f32 %v2276, %v2292
      %v2313 = vmax.f32 %v2277, %v2294
      %v2314 = vmax.f32 %v2278, %v2297
      %v2315 = vmax.f32 %v2279, %v2299
      %s2316 = scalar_lea.vmem %s147, 640
      %2317 = vst.msk [vmem:[%s2316] sm:$0xff] %vm148, %v2308
      %2318 = vst.msk [vmem:[%s2316 + $0x8] sm:$0xff] %vm148, %v2309
      %2319 = vst.msk [vmem:[%s2316 + $0x10] sm:$0xff] %vm148, %v2310
      %2320 = vst.msk [vmem:[%s2316 + $0x18] sm:$0xff] %vm148, %v2311
      %2321 = vst.msk [vmem:[%s2316 + $0x20] sm:$0xff] %vm148, %v2312
      %2322 = vst.msk [vmem:[%s2316 + $0x28] sm:$0xff] %vm148, %v2313
      %2323 = vst.msk [vmem:[%s2316 + $0x30] sm:$0xff] %vm148, %v2314
      %2324 = vst.msk [vmem:[%s2316 + $0x38] sm:$0xff] %vm148, %v2315
      %v2325 = vld [vmem:[%s976] sm:$0xff]
      %v2326 = vld [vmem:[%s976 + $0x8] sm:$0xff]
      %v2327 = vld [vmem:[%s976 + $0x10] sm:$0xff]
      %v2328 = vld [vmem:[%s976 + $0x18] sm:$0xff]
      %v2329 = vld [vmem:[%s976 + $0x20] sm:$0xff]
      %v2330 = vld [vmem:[%s976 + $0x28] sm:$0xff]
      %v2331 = vld [vmem:[%s976 + $0x30] sm:$0xff]
      %v2332 = vld [vmem:[%s976 + $0x38] sm:$0xff]
      %v2333 = vld [vmem:[%s976 + $0x40] sm:$0xff]
      %v2334 = vld [vmem:[%s976 + $0x48] sm:$0xff]
      %v2335 = vld [vmem:[%s976 + $0x50] sm:$0xff]
      %v2336 = vld [vmem:[%s976 + $0x58] sm:$0xff]
      %v2337 = vld [vmem:[%s1178] sm:$0xff]
      %v2338 = vld [vmem:[%s1178 + $0x8] sm:$0xff]
      %v2339 = vld [vmem:[%s1178 + $0x10] sm:$0xff]
      %v2340 = vld [vmem:[%s1178 + $0x18] sm:$0xff]
      %v2341 = vld [vmem:[%s1178 + $0x20] sm:$0xff]
      %v2342 = vld [vmem:[%s1178 + $0x28] sm:$0xff]
      %v2343 = vld [vmem:[%s1178 + $0x30] sm:$0xff]
      %v2344 = vld [vmem:[%s1178 + $0x38] sm:$0xff]
      %v2345 = vld [vmem:[%s1178 + $0x40] sm:$0xff]
      %v2346 = vld [vmem:[%s1178 + $0x48] sm:$0xff]
      %v2347 = vld [vmem:[%s1178 + $0x50] sm:$0xff]
      %v2348 = vld [vmem:[%s1178 + $0x58] sm:$0xff]
      %v2349 = vmax.f32 %v2325, %v2337
      %v2350 = vmax.f32 %v2326, %v2338
      %v2351 = vmax.f32 %v2327, %v2339
      %v2352 = vmax.f32 %v2328, %v2340
      %v2353 = vmax.f32 %v2329, %v2341
      %v2354 = vmax.f32 %v2330, %v2342
      %v2355 = vmax.f32 %v2331, %v2343
      %v2356 = vmax.f32 %v2332, %v2344
      %v2357 = vmax.f32 %v2333, %v2345
      %v2358 = vmax.f32 %v2334, %v2346
      %v2359 = vmax.f32 %v2335, %v2347
      %v2360 = vmax.f32 %v2336, %v2348
      %v2361 = vld [vmem:[%s325] sm:$0xff]
      %v2362 = vld [vmem:[%s325 + $0x8] sm:$0xff]
      %v2363 = vld [vmem:[%s325 + $0x10] sm:$0xff]
      %v2364 = vld [vmem:[%s325 + $0x18] sm:$0xff]
      %v2365 = vld [vmem:[%s325 + $0x20] sm:$0xff]
      %v2366 = vld [vmem:[%s325 + $0x28] sm:$0xff]
      %v2367 = vld [vmem:[%s325 + $0x30] sm:$0xff]
      %v2368 = vld [vmem:[%s325 + $0x38] sm:$0xff]
      %v2369 = vld [vmem:[%s325 + $0x40] sm:$0xff]
      %v2370 = vld [vmem:[%s325 + $0x48] sm:$0xff]
      %v2371 = vld [vmem:[%s325 + $0x50] sm:$0xff]
      %v2372 = vld [vmem:[%s325 + $0x58] sm:$0xff]
      %v2373 = vmax.f32 %v2349, %v2361
      %v2374 = vmax.f32 %v2350, %v2362
      %v2375 = vmax.f32 %v2351, %v2363
      %v2376 = vmax.f32 %v2352, %v2364
      %v2377 = vmax.f32 %v2353, %v2365
      %v2378 = vmax.f32 %v2354, %v2366
      %v2379 = vmax.f32 %v2355, %v2367
      %v2380 = vmax.f32 %v2356, %v2368
      %v2381 = vmax.f32 %v2357, %v2369
      %v2382 = vmax.f32 %v2358, %v2370
      %v2383 = vmax.f32 %v2359, %v2371
      %v2384 = vmax.f32 %v2360, %v2372
      %v2385 = vld [vmem:[%s1227] sm:$0xff]
      %v2386 = vld [vmem:[%s1227 + $0x8] sm:$0xff]
      %v2387 = vld [vmem:[%s1227 + $0x10] sm:$0xff]
      %v2388 = vld [vmem:[%s1227 + $0x18] sm:$0xff]
      %v2389 = vld [vmem:[%s1227 + $0x20] sm:$0xff]
      %v2390 = vld [vmem:[%s1227 + $0x28] sm:$0xff]
      %v2391 = vld [vmem:[%s1227 + $0x30] sm:$0xff]
      %v2392 = vld [vmem:[%s1227 + $0x38] sm:$0xff]
      %v2393 = vld [vmem:[%s1227 + $0x40] sm:$0xff]
      %v2394 = vld [vmem:[%s1227 + $0x48] sm:$0xff]
      %v2395 = vld [vmem:[%s1227 + $0x50] sm:$0xff]
      %v2396 = vld [vmem:[%s1227 + $0x58] sm:$0xff]
      %v2397 = vmax.f32 %v2373, %v2385
      %v2398 = vmax.f32 %v2374, %v2386
      %v2399 = vmax.f32 %v2375, %v2387
      %v2400 = vmax.f32 %v2376, %v2388
      %v2401 = vmax.f32 %v2377, %v2389
      %v2402 = vmax.f32 %v2378, %v2390
      %v2403 = vmax.f32 %v2379, %v2391
      %v2404 = vmax.f32 %v2380, %v2392
      %v2405 = vmax.f32 %v2381, %v2393
      %v2406 = vmax.f32 %v2382, %v2394
      %v2407 = vmax.f32 %v2383, %v2395
      %v2408 = vmax.f32 %v2384, %v2396
      %v2409 = vld [vmem:[%s1252] sm:$0xff]
      %v2410 = vld [vmem:[%s1252 + $0x8] sm:$0xff]
      %v2411 = vld [vmem:[%s1252 + $0x10] sm:$0xff]
      %v2412 = vld [vmem:[%s1252 + $0x18] sm:$0xff]
      %v2413 = vld [vmem:[%s1252 + $0x20] sm:$0xff]
      %v2414 = vld [vmem:[%s1252 + $0x28] sm:$0xff]
      %v2415 = vld [vmem:[%s1252 + $0x30] sm:$0xff]
      %v2416 = vld [vmem:[%s1252 + $0x38] sm:$0xff]
      %v2417 = vld [vmem:[%s1252 + $0x40] sm:$0xff]
      %v2418 = vld [vmem:[%s1252 + $0x48] sm:$0xff]
      %v2419 = vld [vmem:[%s1252 + $0x50] sm:$0xff]
      %v2420 = vld [vmem:[%s1252 + $0x58] sm:$0xff]
      %v2421 = vmax.f32 %v2397, %v2409
      %v2422 = vmax.f32 %v2398, %v2410
      %v2423 = vmax.f32 %v2399, %v2411
      %v2424 = vmax.f32 %v2400, %v2412
      %v2425 = vmax.f32 %v2401, %v2413
      %v2426 = vmax.f32 %v2402, %v2414
      %v2427 = vmax.f32 %v2403, %v2415
      %v2428 = vmax.f32 %v2404, %v2416
      %v2429 = vmax.f32 %v2405, %v2417
      %v2430 = vmax.f32 %v2406, %v2418
      %v2431 = vmax.f32 %v2407, %v2419
      %v2432 = vmax.f32 %v2408, %v2420
      %v2445 = vrot.slane %v2421, 1
      %v2446 = vrot.slane %v2422, 1
      %v2447 = vsel %vm457, %v2445, %v2446
      %v2448 = vrot.slane %v2423, 1
      %v2449 = vsel %vm457, %v2446, %v2448
      %v2450 = vrot.slane %v2424, 1
      %v2451 = vrot.slane %v2425, 1
      %v2452 = vsel %vm457, %v2450, %v2451
      %v2453 = vrot.slane %v2426, 1
      %v2454 = vsel %vm457, %v2451, %v2453
      %v2455 = vrot.slane %v2427, 1
      %v2456 = vrot.slane %v2428, 1
      %v2457 = vsel %vm457, %v2455, %v2456
      %v2458 = vrot.slane %v2429, 1
      %v2459 = vsel %vm457, %v2456, %v2458
      %v2460 = vrot.slane %v2430, 1
      %v2461 = vrot.slane %v2431, 1
      %v2462 = vsel %vm457, %v2460, %v2461
      %v2463 = vrot.slane %v2432, 1
      %v2464 = vsel %vm457, %v2461, %v2463
      %v2473 = vmax.f32 %v2421, %v2447
      %v2474 = vmax.f32 %v2422, %v2449
      %v2475 = vmax.f32 %v2424, %v2452
      %v2476 = vmax.f32 %v2425, %v2454
      %v2477 = vmax.f32 %v2427, %v2457
      %v2478 = vmax.f32 %v2428, %v2459
      %v2479 = vmax.f32 %v2430, %v2462
      %v2480 = vmax.f32 %v2431, %v2464
      %v2481 = vrot.slane %v2421, 2
      %v2482 = vrot.slane %v2422, 2
      %v2483 = vsel %vm494, %v2481, %v2482
      %v2484 = vrot.slane %v2423, 2
      %v2485 = vsel %vm494, %v2482, %v2484
      %v2486 = vrot.slane %v2424, 2
      %v2487 = vrot.slane %v2425, 2
      %v2488 = vsel %vm494, %v2486, %v2487
      %v2489 = vrot.slane %v2426, 2
      %v2490 = vsel %vm494, %v2487, %v2489
      %v2491 = vrot.slane %v2427, 2
      %v2492 = vrot.slane %v2428, 2
      %v2493 = vsel %vm494, %v2491, %v2492
      %v2494 = vrot.slane %v2429, 2
      %v2495 = vsel %vm494, %v2492, %v2494
      %v2496 = vrot.slane %v2430, 2
      %v2497 = vrot.slane %v2431, 2
      %v2498 = vsel %vm494, %v2496, %v2497
      %v2499 = vrot.slane %v2432, 2
      %v2500 = vsel %vm494, %v2497, %v2499
      %v2509 = vmax.f32 %v2473, %v2483
      %v2510 = vmax.f32 %v2474, %v2485
      %v2511 = vmax.f32 %v2475, %v2488
      %v2512 = vmax.f32 %v2476, %v2490
      %v2513 = vmax.f32 %v2477, %v2493
      %v2514 = vmax.f32 %v2478, %v2495
      %v2515 = vmax.f32 %v2479, %v2498
      %v2516 = vmax.f32 %v2480, %v2500
      %v2517 = vrot.slane %v2421, 3
      %v2518 = vrot.slane %v2422, 3
      %v2519 = vsel %vm531, %v2517, %v2518
      %v2520 = vrot.slane %v2423, 3
      %v2521 = vsel %vm531, %v2518, %v2520
      %v2522 = vrot.slane %v2424, 3
      %v2523 = vrot.slane %v2425, 3
      %v2524 = vsel %vm531, %v2522, %v2523
      %v2525 = vrot.slane %v2426, 3
      %v2526 = vsel %vm531, %v2523, %v2525
      %v2527 = vrot.slane %v2427, 3
      %v2528 = vrot.slane %v2428, 3
      %v2529 = vsel %vm531, %v2527, %v2528
      %v2530 = vrot.slane %v2429, 3
      %v2531 = vsel %vm531, %v2528, %v2530
      %v2532 = vrot.slane %v2430, 3
      %v2533 = vrot.slane %v2431, 3
      %v2534 = vsel %vm531, %v2532, %v2533
      %v2535 = vrot.slane %v2432, 3
      %v2536 = vsel %vm531, %v2533, %v2535
      %v2545 = vmax.f32 %v2509, %v2519
      %v2546 = vmax.f32 %v2510, %v2521
      %v2547 = vmax.f32 %v2511, %v2524
      %v2548 = vmax.f32 %v2512, %v2526
      %v2549 = vmax.f32 %v2513, %v2529
      %v2550 = vmax.f32 %v2514, %v2531
      %v2551 = vmax.f32 %v2515, %v2534
      %v2552 = vmax.f32 %v2516, %v2536
      %v2553 = vrot.slane %v2421, 4
      %v2554 = vrot.slane %v2422, 4
      %v2555 = vsel %vm568, %v2553, %v2554
      %v2556 = vrot.slane %v2423, 4
      %v2557 = vsel %vm568, %v2554, %v2556
      %v2558 = vrot.slane %v2424, 4
      %v2559 = vrot.slane %v2425, 4
      %v2560 = vsel %vm568, %v2558, %v2559
      %v2561 = vrot.slane %v2426, 4
      %v2562 = vsel %vm568, %v2559, %v2561
      %v2563 = vrot.slane %v2427, 4
      %v2564 = vrot.slane %v2428, 4
      %v2565 = vsel %vm568, %v2563, %v2564
      %v2566 = vrot.slane %v2429, 4
      %v2567 = vsel %vm568, %v2564, %v2566
      %v2568 = vrot.slane %v2430, 4
      %v2569 = vrot.slane %v2431, 4
      %v2570 = vsel %vm568, %v2568, %v2569
      %v2571 = vrot.slane %v2432, 4
      %v2572 = vsel %vm568, %v2569, %v2571
      %v2581 = vmax.f32 %v2545, %v2555
      %v2582 = vmax.f32 %v2546, %v2557
      %v2583 = vmax.f32 %v2547, %v2560
      %v2584 = vmax.f32 %v2548, %v2562
      %v2585 = vmax.f32 %v2549, %v2565
      %v2586 = vmax.f32 %v2550, %v2567
      %v2587 = vmax.f32 %v2551, %v2570
      %v2588 = vmax.f32 %v2552, %v2572
      %s2589 = scalar_lea.vmem %s147, 704
      %2590 = vst.msk [vmem:[%s2589] sm:$0xff] %vm148, %v2581
      %2591 = vst.msk [vmem:[%s2589 + $0x8] sm:$0xff] %vm148, %v2582
      %2592 = vst.msk [vmem:[%s2589 + $0x10] sm:$0xff] %vm148, %v2583
      %2593 = vst.msk [vmem:[%s2589 + $0x18] sm:$0xff] %vm148, %v2584
      %2594 = vst.msk [vmem:[%s2589 + $0x20] sm:$0xff] %vm148, %v2585
      %2595 = vst.msk [vmem:[%s2589 + $0x28] sm:$0xff] %vm148, %v2586
      %2596 = vst.msk [vmem:[%s2589 + $0x30] sm:$0xff] %vm148, %v2587
      %2597 = vst.msk [vmem:[%s2589 + $0x38] sm:$0xff] %vm148, %v2588
      %v2598 = vld [vmem:[%s1770] sm:$0xff]
      %v2599 = vld [vmem:[%s1770 + $0x8] sm:$0xff]
      %v2600 = vld [vmem:[%s1770 + $0x10] sm:$0xff]
      %v2601 = vld [vmem:[%s1770 + $0x18] sm:$0xff]
      %v2602 = vld [vmem:[%s1770 + $0x20] sm:$0xff]
      %v2603 = vld [vmem:[%s1770 + $0x28] sm:$0xff]
      %v2604 = vld [vmem:[%s1770 + $0x30] sm:$0xff]
      %v2605 = vld [vmem:[%s1770 + $0x38] sm:$0xff]
      %2606 = vst.msk [vmem:[%s162 + $0x2] sm:$0xff] %vm148, %v2598
      %2607 = vst.msk [vmem:[%s162 + $0xa] sm:$0xff] %vm148, %v2599
      %2608 = vst.msk [vmem:[%s162 + $0x1a] sm:$0xff] %vm148, %v2600
      %2609 = vst.msk [vmem:[%s162 + $0x22] sm:$0xff] %vm148, %v2601
      %2610 = vst.msk [vmem:[%s162 + $0x32] sm:$0xff] %vm148, %v2602
      %2611 = vst.msk [vmem:[%s162 + $0x3a] sm:$0xff] %vm148, %v2603
      %2612 = vst.msk [vmem:[%s162 + $0x4a] sm:$0xff] %vm148, %v2604
      %2613 = vst.msk [vmem:[%s162 + $0x52] sm:$0xff] %vm148, %v2605
      %v2614 = vld [vmem:[%s2043] sm:$0xff]
      %v2615 = vld [vmem:[%s2043 + $0x8] sm:$0xff]
      %v2616 = vld [vmem:[%s2043 + $0x10] sm:$0xff]
      %v2617 = vld [vmem:[%s2043 + $0x18] sm:$0xff]
      %v2618 = vld [vmem:[%s2043 + $0x20] sm:$0xff]
      %v2619 = vld [vmem:[%s2043 + $0x28] sm:$0xff]
      %v2620 = vld [vmem:[%s2043 + $0x30] sm:$0xff]
      %v2621 = vld [vmem:[%s2043 + $0x38] sm:$0xff]
      %2622 = vst.msk [vmem:[%s291 + $0x2] sm:$0xff] %vm148, %v2614
      %2623 = vst.msk [vmem:[%s291 + $0xa] sm:$0xff] %vm148, %v2615
      %2624 = vst.msk [vmem:[%s291 + $0x1a] sm:$0xff] %vm148, %v2616
      %2625 = vst.msk [vmem:[%s291 + $0x22] sm:$0xff] %vm148, %v2617
      %2626 = vst.msk [vmem:[%s291 + $0x32] sm:$0xff] %vm148, %v2618
      %2627 = vst.msk [vmem:[%s291 + $0x3a] sm:$0xff] %vm148, %v2619
      %2628 = vst.msk [vmem:[%s291 + $0x4a] sm:$0xff] %vm148, %v2620
      %2629 = vst.msk [vmem:[%s291 + $0x52] sm:$0xff] %vm148, %v2621
      %v2630 = vld [vmem:[%s2316] sm:$0xff]
      %v2631 = vld [vmem:[%s2316 + $0x8] sm:$0xff]
      %v2632 = vld [vmem:[%s2316 + $0x10] sm:$0xff]
      %v2633 = vld [vmem:[%s2316 + $0x18] sm:$0xff]
      %v2634 = vld [vmem:[%s2316 + $0x20] sm:$0xff]
      %v2635 = vld [vmem:[%s2316 + $0x28] sm:$0xff]
      %v2636 = vld [vmem:[%s2316 + $0x30] sm:$0xff]
      %v2637 = vld [vmem:[%s2316 + $0x38] sm:$0xff]
      %2638 = vst.msk [vmem:[%s308 + $0x2] sm:$0xff] %vm148, %v2630
      %2639 = vst.msk [vmem:[%s308 + $0xa] sm:$0xff] %vm148, %v2631
      %2640 = vst.msk [vmem:[%s308 + $0x1a] sm:$0xff] %vm148, %v2632
      %2641 = vst.msk [vmem:[%s308 + $0x22] sm:$0xff] %vm148, %v2633
      %2642 = vst.msk [vmem:[%s308 + $0x32] sm:$0xff] %vm148, %v2634
      %2643 = vst.msk [vmem:[%s308 + $0x3a] sm:$0xff] %vm148, %v2635
      %2644 = vst.msk [vmem:[%s308 + $0x4a] sm:$0xff] %vm148, %v2636
      %2645 = vst.msk [vmem:[%s308 + $0x52] sm:$0xff] %vm148, %v2637
      %v2646 = vld [vmem:[%s2589] sm:$0xff]
      %v2647 = vld [vmem:[%s2589 + $0x8] sm:$0xff]
      %v2648 = vld [vmem:[%s2589 + $0x10] sm:$0xff]
      %v2649 = vld [vmem:[%s2589 + $0x18] sm:$0xff]
      %v2650 = vld [vmem:[%s2589 + $0x20] sm:$0xff]
      %v2651 = vld [vmem:[%s2589 + $0x28] sm:$0xff]
      %v2652 = vld [vmem:[%s2589 + $0x30] sm:$0xff]
      %v2653 = vld [vmem:[%s2589 + $0x38] sm:$0xff]
      %2654 = vst.msk [vmem:[%s325 + $0x2] sm:$0xff] %vm148, %v2646
      %2655 = vst.msk [vmem:[%s325 + $0xa] sm:$0xff] %vm148, %v2647
      %2656 = vst.msk [vmem:[%s325 + $0x1a] sm:$0xff] %vm148, %v2648
      %2657 = vst.msk [vmem:[%s325 + $0x22] sm:$0xff] %vm148, %v2649
      %2658 = vst.msk [vmem:[%s325 + $0x32] sm:$0xff] %vm148, %v2650
      %2659 = vst.msk [vmem:[%s325 + $0x3a] sm:$0xff] %vm148, %v2651
      %2660 = vst.msk [vmem:[%s325 + $0x4a] sm:$0xff] %vm148, %v2652
      %2661 = vst.msk [vmem:[%s325 + $0x52] sm:$0xff] %vm148, %v2653
      %v2662 = vld [vmem:[#allocation2] sm:$0xff]
      %v2663 = vld [vmem:[#allocation2 + $0x8] sm:$0xff]
      %v2664 = vld [vmem:[#allocation2 + $0x10] sm:$0xff]
      %v2665 = vld [vmem:[#allocation2 + $0x18] sm:$0xff]
      %v2666 = vld [vmem:[#allocation2 + $0x20] sm:$0xff]
      %v2667 = vld [vmem:[#allocation2 + $0x28] sm:$0xff]
      %v2668 = vld [vmem:[#allocation2 + $0x30] sm:$0xff]
      %v2669 = vld [vmem:[#allocation2 + $0x38] sm:$0xff]
      %v2670 = vld [vmem:[#allocation2 + $0x40] sm:$0xff]
      %v2671 = vld [vmem:[#allocation2 + $0x48] sm:$0xff]
      %v2672 = vld [vmem:[#allocation2 + $0x50] sm:$0xff]
      %v2673 = vld [vmem:[#allocation2 + $0x58] sm:$0xff]
      %v2674 = vld [vmem:[%s346] sm:$0xff]
      %v2675 = vld [vmem:[%s346 + $0x8] sm:$0xff]
      %v2676 = vld [vmem:[%s346 + $0x10] sm:$0xff]
      %v2677 = vld [vmem:[%s346 + $0x18] sm:$0xff]
      %v2678 = vld [vmem:[%s346 + $0x20] sm:$0xff]
      %v2679 = vld [vmem:[%s346 + $0x28] sm:$0xff]
      %v2680 = vld [vmem:[%s346 + $0x30] sm:$0xff]
      %v2681 = vld [vmem:[%s346 + $0x38] sm:$0xff]
      %v2682 = vld [vmem:[%s346 + $0x40] sm:$0xff]
      %v2683 = vld [vmem:[%s346 + $0x48] sm:$0xff]
      %v2684 = vld [vmem:[%s346 + $0x50] sm:$0xff]
      %v2685 = vld [vmem:[%s346 + $0x58] sm:$0xff]
      %v2686 = vmax.f32 %v2662, %v2674
      %v2687 = vmax.f32 %v2663, %v2675
      %v2688 = vmax.f32 %v2664, %v2676
      %v2689 = vmax.f32 %v2665, %v2677
      %v2690 = vmax.f32 %v2666, %v2678
      %v2691 = vmax.f32 %v2667, %v2679
      %v2692 = vmax.f32 %v2668, %v2680
      %v2693 = vmax.f32 %v2669, %v2681
      %v2694 = vmax.f32 %v2670, %v2682
      %v2695 = vmax.f32 %v2671, %v2683
      %v2696 = vmax.f32 %v2672, %v2684
      %v2697 = vmax.f32 %v2673, %v2685
      %v2698 = vld [vmem:[%s162] sm:$0xff]
      %v2699 = vld [vmem:[%s162 + $0x8] sm:$0xff]
      %v2700 = vld [vmem:[%s162 + $0x10] sm:$0xff]
      %v2701 = vld [vmem:[%s162 + $0x18] sm:$0xff]
      %v2702 = vld [vmem:[%s162 + $0x20] sm:$0xff]
      %v2703 = vld [vmem:[%s162 + $0x28] sm:$0xff]
      %v2704 = vld [vmem:[%s162 + $0x30] sm:$0xff]
      %v2705 = vld [vmem:[%s162 + $0x38] sm:$0xff]
      %v2706 = vld [vmem:[%s162 + $0x40] sm:$0xff]
      %v2707 = vld [vmem:[%s162 + $0x48] sm:$0xff]
      %v2708 = vld [vmem:[%s162 + $0x50] sm:$0xff]
      %v2709 = vld [vmem:[%s162 + $0x58] sm:$0xff]
      %v2710 = vmax.f32 %v2686, %v2698
      %v2711 = vmax.f32 %v2687, %v2699
      %v2712 = vmax.f32 %v2688, %v2700
      %v2713 = vmax.f32 %v2689, %v2701
      %v2714 = vmax.f32 %v2690, %v2702
      %v2715 = vmax.f32 %v2691, %v2703
      %v2716 = vmax.f32 %v2692, %v2704
      %v2717 = vmax.f32 %v2693, %v2705
      %v2718 = vmax.f32 %v2694, %v2706
      %v2719 = vmax.f32 %v2695, %v2707
      %v2720 = vmax.f32 %v2696, %v2708
      %v2721 = vmax.f32 %v2697, %v2709
      %v2722 = vld [vmem:[%s395] sm:$0xff]
      %v2723 = vld [vmem:[%s395 + $0x8] sm:$0xff]
      %v2724 = vld [vmem:[%s395 + $0x10] sm:$0xff]
      %v2725 = vld [vmem:[%s395 + $0x18] sm:$0xff]
      %v2726 = vld [vmem:[%s395 + $0x20] sm:$0xff]
      %v2727 = vld [vmem:[%s395 + $0x28] sm:$0xff]
      %v2728 = vld [vmem:[%s395 + $0x30] sm:$0xff]
      %v2729 = vld [vmem:[%s395 + $0x38] sm:$0xff]
      %v2730 = vld [vmem:[%s395 + $0x40] sm:$0xff]
      %v2731 = vld [vmem:[%s395 + $0x48] sm:$0xff]
      %v2732 = vld [vmem:[%s395 + $0x50] sm:$0xff]
      %v2733 = vld [vmem:[%s395 + $0x58] sm:$0xff]
      %v2734 = vmax.f32 %v2710, %v2722
      %v2735 = vmax.f32 %v2711, %v2723
      %v2736 = vmax.f32 %v2712, %v2724
      %v2737 = vmax.f32 %v2713, %v2725
      %v2738 = vmax.f32 %v2714, %v2726
      %v2739 = vmax.f32 %v2715, %v2727
      %v2740 = vmax.f32 %v2716, %v2728
      %v2741 = vmax.f32 %v2717, %v2729
      %v2742 = vmax.f32 %v2718, %v2730
      %v2743 = vmax.f32 %v2719, %v2731
      %v2744 = vmax.f32 %v2720, %v2732
      %v2745 = vmax.f32 %v2721, %v2733
      %v2746 = vld [vmem:[%s420] sm:$0xff]
      %v2747 = vld [vmem:[%s420 + $0x8] sm:$0xff]
      %v2748 = vld [vmem:[%s420 + $0x10] sm:$0xff]
      %v2749 = vld [vmem:[%s420 + $0x18] sm:$0xff]
      %v2750 = vld [vmem:[%s420 + $0x20] sm:$0xff]
      %v2751 = vld [vmem:[%s420 + $0x28] sm:$0xff]
      %v2752 = vld [vmem:[%s420 + $0x30] sm:$0xff]
      %v2753 = vld [vmem:[%s420 + $0x38] sm:$0xff]
      %v2754 = vld [vmem:[%s420 + $0x40] sm:$0xff]
      %v2755 = vld [vmem:[%s420 + $0x48] sm:$0xff]
      %v2756 = vld [vmem:[%s420 + $0x50] sm:$0xff]
      %v2757 = vld [vmem:[%s420 + $0x58] sm:$0xff]
      %v2758 = vmax.f32 %v2734, %v2746
      %v2759 = vmax.f32 %v2735, %v2747
      %v2760 = vmax.f32 %v2736, %v2748
      %v2761 = vmax.f32 %v2737, %v2749
      %v2762 = vmax.f32 %v2738, %v2750
      %v2763 = vmax.f32 %v2739, %v2751
      %v2764 = vmax.f32 %v2740, %v2752
      %v2765 = vmax.f32 %v2741, %v2753
      %v2766 = vmax.f32 %v2742, %v2754
      %v2767 = vmax.f32 %v2743, %v2755
      %v2768 = vmax.f32 %v2744, %v2756
      %v2769 = vmax.f32 %v2745, %v2757
      %v2782 = vrot.slane %v2758, 1
      %v2783 = vrot.slane %v2759, 1
      %v2784 = vsel %vm457, %v2782, %v2783
      %v2785 = vrot.slane %v2760, 1
      %v2786 = vsel %vm457, %v2783, %v2785
      %v2787 = vrot.slane %v2761, 1
      %v2788 = vrot.slane %v2762, 1
      %v2789 = vsel %vm457, %v2787, %v2788
      %v2790 = vrot.slane %v2763, 1
      %v2791 = vsel %vm457, %v2788, %v2790
      %v2792 = vrot.slane %v2764, 1
      %v2793 = vrot.slane %v2765, 1
      %v2794 = vsel %vm457, %v2792, %v2793
      %v2795 = vrot.slane %v2766, 1
      %v2796 = vsel %vm457, %v2793, %v2795
      %v2797 = vrot.slane %v2767, 1
      %v2798 = vrot.slane %v2768, 1
      %v2799 = vsel %vm457, %v2797, %v2798
      %v2800 = vrot.slane %v2769, 1
      %v2801 = vsel %vm457, %v2798, %v2800
      %v2810 = vmax.f32 %v2758, %v2784
      %v2811 = vmax.f32 %v2759, %v2786
      %v2812 = vmax.f32 %v2761, %v2789
      %v2813 = vmax.f32 %v2762, %v2791
      %v2814 = vmax.f32 %v2764, %v2794
      %v2815 = vmax.f32 %v2765, %v2796
      %v2816 = vmax.f32 %v2767, %v2799
      %v2817 = vmax.f32 %v2768, %v2801
      %v2818 = vrot.slane %v2758, 2
      %v2819 = vrot.slane %v2759, 2
      %v2820 = vsel %vm494, %v2818, %v2819
      %v2821 = vrot.slane %v2760, 2
      %v2822 = vsel %vm494, %v2819, %v2821
      %v2823 = vrot.slane %v2761, 2
      %v2824 = vrot.slane %v2762, 2
      %v2825 = vsel %vm494, %v2823, %v2824
      %v2826 = vrot.slane %v2763, 2
      %v2827 = vsel %vm494, %v2824, %v2826
      %v2828 = vrot.slane %v2764, 2
      %v2829 = vrot.slane %v2765, 2
      %v2830 = vsel %vm494, %v2828, %v2829
      %v2831 = vrot.slane %v2766, 2
      %v2832 = vsel %vm494, %v2829, %v2831
      %v2833 = vrot.slane %v2767, 2
      %v2834 = vrot.slane %v2768, 2
      %v2835 = vsel %vm494, %v2833, %v2834
      %v2836 = vrot.slane %v2769, 2
      %v2837 = vsel %vm494, %v2834, %v2836
      %v2846 = vmax.f32 %v2810, %v2820
      %v2847 = vmax.f32 %v2811, %v2822
      %v2848 = vmax.f32 %v2812, %v2825
      %v2849 = vmax.f32 %v2813, %v2827
      %v2850 = vmax.f32 %v2814, %v2830
      %v2851 = vmax.f32 %v2815, %v2832
      %v2852 = vmax.f32 %v2816, %v2835
      %v2853 = vmax.f32 %v2817, %v2837
      %v2854 = vrot.slane %v2758, 3
      %v2855 = vrot.slane %v2759, 3
      %v2856 = vsel %vm531, %v2854, %v2855
      %v2857 = vrot.slane %v2760, 3
      %v2858 = vsel %vm531, %v2855, %v2857
      %v2859 = vrot.slane %v2761, 3
      %v2860 = vrot.slane %v2762, 3
      %v2861 = vsel %vm531, %v2859, %v2860
      %v2862 = vrot.slane %v2763, 3
      %v2863 = vsel %vm531, %v2860, %v2862
      %v2864 = vrot.slane %v2764, 3
      %v2865 = vrot.slane %v2765, 3
      %v2866 = vsel %vm531, %v2864, %v2865
      %v2867 = vrot.slane %v2766, 3
      %v2868 = vsel %vm531, %v2865, %v2867
      %v2869 = vrot.slane %v2767, 3
      %v2870 = vrot.slane %v2768, 3
      %v2871 = vsel %vm531, %v2869, %v2870
      %v2872 = vrot.slane %v2769, 3
      %v2873 = vsel %vm531, %v2870, %v2872
      %v2882 = vmax.f32 %v2846, %v2856
      %v2883 = vmax.f32 %v2847, %v2858
      %v2884 = vmax.f32 %v2848, %v2861
      %v2885 = vmax.f32 %v2849, %v2863
      %v2886 = vmax.f32 %v2850, %v2866
      %v2887 = vmax.f32 %v2851, %v2868
      %v2888 = vmax.f32 %v2852, %v2871
      %v2889 = vmax.f32 %v2853, %v2873
      %v2890 = vrot.slane %v2758, 4
      %v2891 = vrot.slane %v2759, 4
      %v2892 = vsel %vm568, %v2890, %v2891
      %v2893 = vrot.slane %v2760, 4
      %v2894 = vsel %vm568, %v2891, %v2893
      %v2895 = vrot.slane %v2761, 4
      %v2896 = vrot.slane %v2762, 4
      %v2897 = vsel %vm568, %v2895, %v2896
      %v2898 = vrot.slane %v2763, 4
      %v2899 = vsel %vm568, %v2896, %v2898
      %v2900 = vrot.slane %v2764, 4
      %v2901 = vrot.slane %v2765, 4
      %v2902 = vsel %vm568, %v2900, %v2901
      %v2903 = vrot.slane %v2766, 4
      %v2904 = vsel %vm568, %v2901, %v2903
      %v2905 = vrot.slane %v2767, 4
      %v2906 = vrot.slane %v2768, 4
      %v2907 = vsel %vm568, %v2905, %v2906
      %v2908 = vrot.slane %v2769, 4
      %v2909 = vsel %vm568, %v2906, %v2908
      %v2918 = vmax.f32 %v2882, %v2892
      %v2919 = vmax.f32 %v2883, %v2894
      %v2920 = vmax.f32 %v2884, %v2897
      %v2921 = vmax.f32 %v2885, %v2899
      %v2922 = vmax.f32 %v2886, %v2902
      %v2923 = vmax.f32 %v2887, %v2904
      %v2924 = vmax.f32 %v2888, %v2907
      %v2925 = vmax.f32 %v2889, %v2909
      %s2926 = scalar_lea.vmem %s147, 768
      %2927 = vst.msk [vmem:[%s2926] sm:$0xff] %vm148, %v2918
      %2928 = vst.msk [vmem:[%s2926 + $0x8] sm:$0xff] %vm148, %v2919
      %2929 = vst.msk [vmem:[%s2926 + $0x10] sm:$0xff] %vm148, %v2920
      %2930 = vst.msk [vmem:[%s2926 + $0x18] sm:$0xff] %vm148, %v2921
      %2931 = vst.msk [vmem:[%s2926 + $0x20] sm:$0xff] %vm148, %v2922
      %2932 = vst.msk [vmem:[%s2926 + $0x28] sm:$0xff] %vm148, %v2923
      %2933 = vst.msk [vmem:[%s2926 + $0x30] sm:$0xff] %vm148, %v2924
      %2934 = vst.msk [vmem:[%s2926 + $0x38] sm:$0xff] %vm148, %v2925
      %v2935 = vld [vmem:[%s420] sm:$0xff]
      %v2936 = vld [vmem:[%s420 + $0x8] sm:$0xff]
      %v2937 = vld [vmem:[%s420 + $0x10] sm:$0xff]
      %v2938 = vld [vmem:[%s420 + $0x18] sm:$0xff]
      %v2939 = vld [vmem:[%s420 + $0x20] sm:$0xff]
      %v2940 = vld [vmem:[%s420 + $0x28] sm:$0xff]
      %v2941 = vld [vmem:[%s420 + $0x30] sm:$0xff]
      %v2942 = vld [vmem:[%s420 + $0x38] sm:$0xff]
      %v2943 = vld [vmem:[%s420 + $0x40] sm:$0xff]
      %v2944 = vld [vmem:[%s420 + $0x48] sm:$0xff]
      %v2945 = vld [vmem:[%s420 + $0x50] sm:$0xff]
      %v2946 = vld [vmem:[%s420 + $0x58] sm:$0xff]
      %v2947 = vld [vmem:[%s626] sm:$0xff]
      %v2948 = vld [vmem:[%s626 + $0x8] sm:$0xff]
      %v2949 = vld [vmem:[%s626 + $0x10] sm:$0xff]
      %v2950 = vld [vmem:[%s626 + $0x18] sm:$0xff]
      %v2951 = vld [vmem:[%s626 + $0x20] sm:$0xff]
      %v2952 = vld [vmem:[%s626 + $0x28] sm:$0xff]
      %v2953 = vld [vmem:[%s626 + $0x30] sm:$0xff]
      %v2954 = vld [vmem:[%s626 + $0x38] sm:$0xff]
      %v2955 = vld [vmem:[%s626 + $0x40] sm:$0xff]
      %v2956 = vld [vmem:[%s626 + $0x48] sm:$0xff]
      %v2957 = vld [vmem:[%s626 + $0x50] sm:$0xff]
      %v2958 = vld [vmem:[%s626 + $0x58] sm:$0xff]
      %v2959 = vmax.f32 %v2935, %v2947
      %v2960 = vmax.f32 %v2936, %v2948
      %v2961 = vmax.f32 %v2937, %v2949
      %v2962 = vmax.f32 %v2938, %v2950
      %v2963 = vmax.f32 %v2939, %v2951
      %v2964 = vmax.f32 %v2940, %v2952
      %v2965 = vmax.f32 %v2941, %v2953
      %v2966 = vmax.f32 %v2942, %v2954
      %v2967 = vmax.f32 %v2943, %v2955
      %v2968 = vmax.f32 %v2944, %v2956
      %v2969 = vmax.f32 %v2945, %v2957
      %v2970 = vmax.f32 %v2946, %v2958
      %v2971 = vld [vmem:[%s291] sm:$0xff]
      %v2972 = vld [vmem:[%s291 + $0x8] sm:$0xff]
      %v2973 = vld [vmem:[%s291 + $0x10] sm:$0xff]
      %v2974 = vld [vmem:[%s291 + $0x18] sm:$0xff]
      %v2975 = vld [vmem:[%s291 + $0x20] sm:$0xff]
      %v2976 = vld [vmem:[%s291 + $0x28] sm:$0xff]
      %v2977 = vld [vmem:[%s291 + $0x30] sm:$0xff]
      %v2978 = vld [vmem:[%s291 + $0x38] sm:$0xff]
      %v2979 = vld [vmem:[%s291 + $0x40] sm:$0xff]
      %v2980 = vld [vmem:[%s291 + $0x48] sm:$0xff]
      %v2981 = vld [vmem:[%s291 + $0x50] sm:$0xff]
      %v2982 = vld [vmem:[%s291 + $0x58] sm:$0xff]
      %v2983 = vmax.f32 %v2959, %v2971
      %v2984 = vmax.f32 %v2960, %v2972
      %v2985 = vmax.f32 %v2961, %v2973
      %v2986 = vmax.f32 %v2962, %v2974
      %v2987 = vmax.f32 %v2963, %v2975
      %v2988 = vmax.f32 %v2964, %v2976
      %v2989 = vmax.f32 %v2965, %v2977
      %v2990 = vmax.f32 %v2966, %v2978
      %v2991 = vmax.f32 %v2967, %v2979
      %v2992 = vmax.f32 %v2968, %v2980
      %v2993 = vmax.f32 %v2969, %v2981
      %v2994 = vmax.f32 %v2970, %v2982
      %v2995 = vld [vmem:[%s675] sm:$0xff]
      %v2996 = vld [vmem:[%s675 + $0x8] sm:$0xff]
      %v2997 = vld [vmem:[%s675 + $0x10] sm:$0xff]
      %v2998 = vld [vmem:[%s675 + $0x18] sm:$0xff]
      %v2999 = vld [vmem:[%s675 + $0x20] sm:$0xff]
      %v3000 = vld [vmem:[%s675 + $0x28] sm:$0xff]
      %v3001 = vld [vmem:[%s675 + $0x30] sm:$0xff]
      %v3002 = vld [vmem:[%s675 + $0x38] sm:$0xff]
      %v3003 = vld [vmem:[%s675 + $0x40] sm:$0xff]
      %v3004 = vld [vmem:[%s675 + $0x48] sm:$0xff]
      %v3005 = vld [vmem:[%s675 + $0x50] sm:$0xff]
      %v3006 = vld [vmem:[%s675 + $0x58] sm:$0xff]
      %v3007 = vmax.f32 %v2983, %v2995
      %v3008 = vmax.f32 %v2984, %v2996
      %v3009 = vmax.f32 %v2985, %v2997
      %v3010 = vmax.f32 %v2986, %v2998
      %v3011 = vmax.f32 %v2987, %v2999
      %v3012 = vmax.f32 %v2988, %v3000
      %v3013 = vmax.f32 %v2989, %v3001
      %v3014 = vmax.f32 %v2990, %v3002
      %v3015 = vmax.f32 %v2991, %v3003
      %v3016 = vmax.f32 %v2992, %v3004
      %v3017 = vmax.f32 %v2993, %v3005
      %v3018 = vmax.f32 %v2994, %v3006
      %v3019 = vld [vmem:[%s700] sm:$0xff]
      %v3020 = vld [vmem:[%s700 + $0x8] sm:$0xff]
      %v3021 = vld [vmem:[%s700 + $0x10] sm:$0xff]
      %v3022 = vld [vmem:[%s700 + $0x18] sm:$0xff]
      %v3023 = vld [vmem:[%s700 + $0x20] sm:$0xff]
      %v3024 = vld [vmem:[%s700 + $0x28] sm:$0xff]
      %v3025 = vld [vmem:[%s700 + $0x30] sm:$0xff]
      %v3026 = vld [vmem:[%s700 + $0x38] sm:$0xff]
      %v3027 = vld [vmem:[%s700 + $0x40] sm:$0xff]
      %v3028 = vld [vmem:[%s700 + $0x48] sm:$0xff]
      %v3029 = vld [vmem:[%s700 + $0x50] sm:$0xff]
      %v3030 = vld [vmem:[%s700 + $0x58] sm:$0xff]
      %v3031 = vmax.f32 %v3007, %v3019
      %v3032 = vmax.f32 %v3008, %v3020
      %v3033 = vmax.f32 %v3009, %v3021
      %v3034 = vmax.f32 %v3010, %v3022
      %v3035 = vmax.f32 %v3011, %v3023
      %v3036 = vmax.f32 %v3012, %v3024
      %v3037 = vmax.f32 %v3013, %v3025
      %v3038 = vmax.f32 %v3014, %v3026
      %v3039 = vmax.f32 %v3015, %v3027
      %v3040 = vmax.f32 %v3016, %v3028
      %v3041 = vmax.f32 %v3017, %v3029
      %v3042 = vmax.f32 %v3018, %v3030
      %v3055 = vrot.slane %v3031, 1
      %v3056 = vrot.slane %v3032, 1
      %v3057 = vsel %vm457, %v3055, %v3056
      %v3058 = vrot.slane %v3033, 1
      %v3059 = vsel %vm457, %v3056, %v3058
      %v3060 = vrot.slane %v3034, 1
      %v3061 = vrot.slane %v3035, 1
      %v3062 = vsel %vm457, %v3060, %v3061
      %v3063 = vrot.slane %v3036, 1
      %v3064 = vsel %vm457, %v3061, %v3063
      %v3065 = vrot.slane %v3037, 1
      %v3066 = vrot.slane %v3038, 1
      %v3067 = vsel %vm457, %v3065, %v3066
      %v3068 = vrot.slane %v3039, 1
      %v3069 = vsel %vm457, %v3066, %v3068
      %v3070 = vrot.slane %v3040, 1
      %v3071 = vrot.slane %v3041, 1
      %v3072 = vsel %vm457, %v3070, %v3071
      %v3073 = vrot.slane %v3042, 1
      %v3074 = vsel %vm457, %v3071, %v3073
      %v3083 = vmax.f32 %v3031, %v3057
      %v3084 = vmax.f32 %v3032, %v3059
      %v3085 = vmax.f32 %v3034, %v3062
      %v3086 = vmax.f32 %v3035, %v3064
      %v3087 = vmax.f32 %v3037, %v3067
      %v3088 = vmax.f32 %v3038, %v3069
      %v3089 = vmax.f32 %v3040, %v3072
      %v3090 = vmax.f32 %v3041, %v3074
      %v3091 = vrot.slane %v3031, 2
      %v3092 = vrot.slane %v3032, 2
      %v3093 = vsel %vm494, %v3091, %v3092
      %v3094 = vrot.slane %v3033, 2
      %v3095 = vsel %vm494, %v3092, %v3094
      %v3096 = vrot.slane %v3034, 2
      %v3097 = vrot.slane %v3035, 2
      %v3098 = vsel %vm494, %v3096, %v3097
      %v3099 = vrot.slane %v3036, 2
      %v3100 = vsel %vm494, %v3097, %v3099
      %v3101 = vrot.slane %v3037, 2
      %v3102 = vrot.slane %v3038, 2
      %v3103 = vsel %vm494, %v3101, %v3102
      %v3104 = vrot.slane %v3039, 2
      %v3105 = vsel %vm494, %v3102, %v3104
      %v3106 = vrot.slane %v3040, 2
      %v3107 = vrot.slane %v3041, 2
      %v3108 = vsel %vm494, %v3106, %v3107
      %v3109 = vrot.slane %v3042, 2
      %v3110 = vsel %vm494, %v3107, %v3109
      %v3119 = vmax.f32 %v3083, %v3093
      %v3120 = vmax.f32 %v3084, %v3095
      %v3121 = vmax.f32 %v3085, %v3098
      %v3122 = vmax.f32 %v3086, %v3100
      %v3123 = vmax.f32 %v3087, %v3103
      %v3124 = vmax.f32 %v3088, %v3105
      %v3125 = vmax.f32 %v3089, %v3108
      %v3126 = vmax.f32 %v3090, %v3110
      %v3127 = vrot.slane %v3031, 3
      %v3128 = vrot.slane %v3032, 3
      %v3129 = vsel %vm531, %v3127, %v3128
      %v3130 = vrot.slane %v3033, 3
      %v3131 = vsel %vm531, %v3128, %v3130
      %v3132 = vrot.slane %v3034, 3
      %v3133 = vrot.slane %v3035, 3
      %v3134 = vsel %vm531, %v3132, %v3133
      %v3135 = vrot.slane %v3036, 3
      %v3136 = vsel %vm531, %v3133, %v3135
      %v3137 = vrot.slane %v3037, 3
      %v3138 = vrot.slane %v3038, 3
      %v3139 = vsel %vm531, %v3137, %v3138
      %v3140 = vrot.slane %v3039, 3
      %v3141 = vsel %vm531, %v3138, %v3140
      %v3142 = vrot.slane %v3040, 3
      %v3143 = vrot.slane %v3041, 3
      %v3144 = vsel %vm531, %v3142, %v3143
      %v3145 = vrot.slane %v3042, 3
      %v3146 = vsel %vm531, %v3143, %v3145
      %v3155 = vmax.f32 %v3119, %v3129
      %v3156 = vmax.f32 %v3120, %v3131
      %v3157 = vmax.f32 %v3121, %v3134
      %v3158 = vmax.f32 %v3122, %v3136
      %v3159 = vmax.f32 %v3123, %v3139
      %v3160 = vmax.f32 %v3124, %v3141
      %v3161 = vmax.f32 %v3125, %v3144
      %v3162 = vmax.f32 %v3126, %v3146
      %v3163 = vrot.slane %v3031, 4
      %v3164 = vrot.slane %v3032, 4
      %v3165 = vsel %vm568, %v3163, %v3164
      %v3166 = vrot.slane %v3033, 4
      %v3167 = vsel %vm568, %v3164, %v3166
      %v3168 = vrot.slane %v3034, 4
      %v3169 = vrot.slane %v3035, 4
      %v3170 = vsel %vm568, %v3168, %v3169
      %v3171 = vrot.slane %v3036, 4
      %v3172 = vsel %vm568, %v3169, %v3171
      %v3173 = vrot.slane %v3037, 4
      %v3174 = vrot.slane %v3038, 4
      %v3175 = vsel %vm568, %v3173, %v3174
      %v3176 = vrot.slane %v3039, 4
      %v3177 = vsel %vm568, %v3174, %v3176
      %v3178 = vrot.slane %v3040, 4
      %v3179 = vrot.slane %v3041, 4
      %v3180 = vsel %vm568, %v3178, %v3179
      %v3181 = vrot.slane %v3042, 4
      %v3182 = vsel %vm568, %v3179, %v3181
      %v3191 = vmax.f32 %v3155, %v3165
      %v3192 = vmax.f32 %v3156, %v3167
      %v3193 = vmax.f32 %v3157, %v3170
      %v3194 = vmax.f32 %v3158, %v3172
      %v3195 = vmax.f32 %v3159, %v3175
      %v3196 = vmax.f32 %v3160, %v3177
      %v3197 = vmax.f32 %v3161, %v3180
      %v3198 = vmax.f32 %v3162, %v3182
      %s3199 = scalar_lea.vmem %s147, 832
      %3200 = vst.msk [vmem:[%s3199] sm:$0xff] %vm148, %v3191
      %3201 = vst.msk [vmem:[%s3199 + $0x8] sm:$0xff] %vm148, %v3192
      %3202 = vst.msk [vmem:[%s3199 + $0x10] sm:$0xff] %vm148, %v3193
      %3203 = vst.msk [vmem:[%s3199 + $0x18] sm:$0xff] %vm148, %v3194
      %3204 = vst.msk [vmem:[%s3199 + $0x20] sm:$0xff] %vm148, %v3195
      %3205 = vst.msk [vmem:[%s3199 + $0x28] sm:$0xff] %vm148, %v3196
      %3206 = vst.msk [vmem:[%s3199 + $0x30] sm:$0xff] %vm148, %v3197
      %3207 = vst.msk [vmem:[%s3199 + $0x38] sm:$0xff] %vm148, %v3198
      %v3208 = vld [vmem:[%s700] sm:$0xff]
      %v3209 = vld [vmem:[%s700 + $0x8] sm:$0xff]
      %v3210 = vld [vmem:[%s700 + $0x10] sm:$0xff]
      %v3211 = vld [vmem:[%s700 + $0x18] sm:$0xff]
      %v3212 = vld [vmem:[%s700 + $0x20] sm:$0xff]
      %v3213 = vld [vmem:[%s700 + $0x28] sm:$0xff]
      %v3214 = vld [vmem:[%s700 + $0x30] sm:$0xff]
      %v3215 = vld [vmem:[%s700 + $0x38] sm:$0xff]
      %v3216 = vld [vmem:[%s700 + $0x40] sm:$0xff]
      %v3217 = vld [vmem:[%s700 + $0x48] sm:$0xff]
      %v3218 = vld [vmem:[%s700 + $0x50] sm:$0xff]
      %v3219 = vld [vmem:[%s700 + $0x58] sm:$0xff]
      %v3220 = vld [vmem:[%s902] sm:$0xff]
      %v3221 = vld [vmem:[%s902 + $0x8] sm:$0xff]
      %v3222 = vld [vmem:[%s902 + $0x10] sm:$0xff]
      %v3223 = vld [vmem:[%s902 + $0x18] sm:$0xff]
      %v3224 = vld [vmem:[%s902 + $0x20] sm:$0xff]
      %v3225 = vld [vmem:[%s902 + $0x28] sm:$0xff]
      %v3226 = vld [vmem:[%s902 + $0x30] sm:$0xff]
      %v3227 = vld [vmem:[%s902 + $0x38] sm:$0xff]
      %v3228 = vld [vmem:[%s902 + $0x40] sm:$0xff]
      %v3229 = vld [vmem:[%s902 + $0x48] sm:$0xff]
      %v3230 = vld [vmem:[%s902 + $0x50] sm:$0xff]
      %v3231 = vld [vmem:[%s902 + $0x58] sm:$0xff]
      %v3232 = vmax.f32 %v3208, %v3220
      %v3233 = vmax.f32 %v3209, %v3221
      %v3234 = vmax.f32 %v3210, %v3222
      %v3235 = vmax.f32 %v3211, %v3223
      %v3236 = vmax.f32 %v3212, %v3224
      %v3237 = vmax.f32 %v3213, %v3225
      %v3238 = vmax.f32 %v3214, %v3226
      %v3239 = vmax.f32 %v3215, %v3227
      %v3240 = vmax.f32 %v3216, %v3228
      %v3241 = vmax.f32 %v3217, %v3229
      %v3242 = vmax.f32 %v3218, %v3230
      %v3243 = vmax.f32 %v3219, %v3231
      %v3244 = vld [vmem:[%s308] sm:$0xff]
      %v3245 = vld [vmem:[%s308 + $0x8] sm:$0xff]
      %v3246 = vld [vmem:[%s308 + $0x10] sm:$0xff]
      %v3247 = vld [vmem:[%s308 + $0x18] sm:$0xff]
      %v3248 = vld [vmem:[%s308 + $0x20] sm:$0xff]
      %v3249 = vld [vmem:[%s308 + $0x28] sm:$0xff]
      %v3250 = vld [vmem:[%s308 + $0x30] sm:$0xff]
      %v3251 = vld [vmem:[%s308 + $0x38] sm:$0xff]
      %v3252 = vld [vmem:[%s308 + $0x40] sm:$0xff]
      %v3253 = vld [vmem:[%s308 + $0x48] sm:$0xff]
      %v3254 = vld [vmem:[%s308 + $0x50] sm:$0xff]
      %v3255 = vld [vmem:[%s308 + $0x58] sm:$0xff]
      %v3256 = vmax.f32 %v3232, %v3244
      %v3257 = vmax.f32 %v3233, %v3245
      %v3258 = vmax.f32 %v3234, %v3246
      %v3259 = vmax.f32 %v3235, %v3247
      %v3260 = vmax.f32 %v3236, %v3248
      %v3261 = vmax.f32 %v3237, %v3249
      %v3262 = vmax.f32 %v3238, %v3250
      %v3263 = vmax.f32 %v3239, %v3251
      %v3264 = vmax.f32 %v3240, %v3252
      %v3265 = vmax.f32 %v3241, %v3253
      %v3266 = vmax.f32 %v3242, %v3254
      %v3267 = vmax.f32 %v3243, %v3255
      %v3268 = vld [vmem:[%s951] sm:$0xff]
      %v3269 = vld [vmem:[%s951 + $0x8] sm:$0xff]
      %v3270 = vld [vmem:[%s951 + $0x10] sm:$0xff]
      %v3271 = vld [vmem:[%s951 + $0x18] sm:$0xff]
      %v3272 = vld [vmem:[%s951 + $0x20] sm:$0xff]
      %v3273 = vld [vmem:[%s951 + $0x28] sm:$0xff]
      %v3274 = vld [vmem:[%s951 + $0x30] sm:$0xff]
      %v3275 = vld [vmem:[%s951 + $0x38] sm:$0xff]
      %v3276 = vld [vmem:[%s951 + $0x40] sm:$0xff]
      %v3277 = vld [vmem:[%s951 + $0x48] sm:$0xff]
      %v3278 = vld [vmem:[%s951 + $0x50] sm:$0xff]
      %v3279 = vld [vmem:[%s951 + $0x58] sm:$0xff]
      %v3280 = vmax.f32 %v3256, %v3268
      %v3281 = vmax.f32 %v3257, %v3269
      %v3282 = vmax.f32 %v3258, %v3270
      %v3283 = vmax.f32 %v3259, %v3271
      %v3284 = vmax.f32 %v3260, %v3272
      %v3285 = vmax.f32 %v3261, %v3273
      %v3286 = vmax.f32 %v3262, %v3274
      %v3287 = vmax.f32 %v3263, %v3275
      %v3288 = vmax.f32 %v3264, %v3276
      %v3289 = vmax.f32 %v3265, %v3277
      %v3290 = vmax.f32 %v3266, %v3278
      %v3291 = vmax.f32 %v3267, %v3279
      %v3292 = vld [vmem:[%s976] sm:$0xff]
      %v3293 = vld [vmem:[%s976 + $0x8] sm:$0xff]
      %v3294 = vld [vmem:[%s976 + $0x10] sm:$0xff]
      %v3295 = vld [vmem:[%s976 + $0x18] sm:$0xff]
      %v3296 = vld [vmem:[%s976 + $0x20] sm:$0xff]
      %v3297 = vld [vmem:[%s976 + $0x28] sm:$0xff]
      %v3298 = vld [vmem:[%s976 + $0x30] sm:$0xff]
      %v3299 = vld [vmem:[%s976 + $0x38] sm:$0xff]
      %v3300 = vld [vmem:[%s976 + $0x40] sm:$0xff]
      %v3301 = vld [vmem:[%s976 + $0x48] sm:$0xff]
      %v3302 = vld [vmem:[%s976 + $0x50] sm:$0xff]
      %v3303 = vld [vmem:[%s976 + $0x58] sm:$0xff]
      %v3304 = vmax.f32 %v3280, %v3292
      %v3305 = vmax.f32 %v3281, %v3293
      %v3306 = vmax.f32 %v3282, %v3294
      %v3307 = vmax.f32 %v3283, %v3295
      %v3308 = vmax.f32 %v3284, %v3296
      %v3309 = vmax.f32 %v3285, %v3297
      %v3310 = vmax.f32 %v3286, %v3298
      %v3311 = vmax.f32 %v3287, %v3299
      %v3312 = vmax.f32 %v3288, %v3300
      %v3313 = vmax.f32 %v3289, %v3301
      %v3314 = vmax.f32 %v3290, %v3302
      %v3315 = vmax.f32 %v3291, %v3303
      %v3328 = vrot.slane %v3304, 1
      %v3329 = vrot.slane %v3305, 1
      %v3330 = vsel %vm457, %v3328, %v3329
      %v3331 = vrot.slane %v3306, 1
      %v3332 = vsel %vm457, %v3329, %v3331
      %v3333 = vrot.slane %v3307, 1
      %v3334 = vrot.slane %v3308, 1
      %v3335 = vsel %vm457, %v3333, %v3334
      %v3336 = vrot.slane %v3309, 1
      %v3337 = vsel %vm457, %v3334, %v3336
      %v3338 = vrot.slane %v3310, 1
      %v3339 = vrot.slane %v3311, 1
      %v3340 = vsel %vm457, %v3338, %v3339
      %v3341 = vrot.slane %v3312, 1
      %v3342 = vsel %vm457, %v3339, %v3341
      %v3343 = vrot.slane %v3313, 1
      %v3344 = vrot.slane %v3314, 1
      %v3345 = vsel %vm457, %v3343, %v3344
      %v3346 = vrot.slane %v3315, 1
      %v3347 = vsel %vm457, %v3344, %v3346
      %v3356 = vmax.f32 %v3304, %v3330
      %v3357 = vmax.f32 %v3305, %v3332
      %v3358 = vmax.f32 %v3307, %v3335
      %v3359 = vmax.f32 %v3308, %v3337
      %v3360 = vmax.f32 %v3310, %v3340
      %v3361 = vmax.f32 %v3311, %v3342
      %v3362 = vmax.f32 %v3313, %v3345
      %v3363 = vmax.f32 %v3314, %v3347
      %v3364 = vrot.slane %v3304, 2
      %v3365 = vrot.slane %v3305, 2
      %v3366 = vsel %vm494, %v3364, %v3365
      %v3367 = vrot.slane %v3306, 2
      %v3368 = vsel %vm494, %v3365, %v3367
      %v3369 = vrot.slane %v3307, 2
      %v3370 = vrot.slane %v3308, 2
      %v3371 = vsel %vm494, %v3369, %v3370
      %v3372 = vrot.slane %v3309, 2
      %v3373 = vsel %vm494, %v3370, %v3372
      %v3374 = vrot.slane %v3310, 2
      %v3375 = vrot.slane %v3311, 2
      %v3376 = vsel %vm494, %v3374, %v3375
      %v3377 = vrot.slane %v3312, 2
      %v3378 = vsel %vm494, %v3375, %v3377
      %v3379 = vrot.slane %v3313, 2
      %v3380 = vrot.slane %v3314, 2
      %v3381 = vsel %vm494, %v3379, %v3380
      %v3382 = vrot.slane %v3315, 2
      %v3383 = vsel %vm494, %v3380, %v3382
      %v3392 = vmax.f32 %v3356, %v3366
      %v3393 = vmax.f32 %v3357, %v3368
      %v3394 = vmax.f32 %v3358, %v3371
      %v3395 = vmax.f32 %v3359, %v3373
      %v3396 = vmax.f32 %v3360, %v3376
      %v3397 = vmax.f32 %v3361, %v3378
      %v3398 = vmax.f32 %v3362, %v3381
      %v3399 = vmax.f32 %v3363, %v3383
      %v3400 = vrot.slane %v3304, 3
      %v3401 = vrot.slane %v3305, 3
      %v3402 = vsel %vm531, %v3400, %v3401
      %v3403 = vrot.slane %v3306, 3
      %v3404 = vsel %vm531, %v3401, %v3403
      %v3405 = vrot.slane %v3307, 3
      %v3406 = vrot.slane %v3308, 3
      %v3407 = vsel %vm531, %v3405, %v3406
      %v3408 = vrot.slane %v3309, 3
      %v3409 = vsel %vm531, %v3406, %v3408
      %v3410 = vrot.slane %v3310, 3
      %v3411 = vrot.slane %v3311, 3
      %v3412 = vsel %vm531, %v3410, %v3411
      %v3413 = vrot.slane %v3312, 3
      %v3414 = vsel %vm531, %v3411, %v3413
      %v3415 = vrot.slane %v3313, 3
      %v3416 = vrot.slane %v3314, 3
      %v3417 = vsel %vm531, %v3415, %v3416
      %v3418 = vrot.slane %v3315, 3
      %v3419 = vsel %vm531, %v3416, %v3418
      %v3428 = vmax.f32 %v3392, %v3402
      %v3429 = vmax.f32 %v3393, %v3404
      %v3430 = vmax.f32 %v3394, %v3407
      %v3431 = vmax.f32 %v3395, %v3409
      %v3432 = vmax.f32 %v3396, %v3412
      %v3433 = vmax.f32 %v3397, %v3414
      %v3434 = vmax.f32 %v3398, %v3417
      %v3435 = vmax.f32 %v3399, %v3419
      %v3436 = vrot.slane %v3304, 4
      %v3437 = vrot.slane %v3305, 4
      %v3438 = vsel %vm568, %v3436, %v3437
      %v3439 = vrot.slane %v3306, 4
      %v3440 = vsel %vm568, %v3437, %v3439
      %v3441 = vrot.slane %v3307, 4
      %v3442 = vrot.slane %v3308, 4
      %v3443 = vsel %vm568, %v3441, %v3442
      %v3444 = vrot.slane %v3309, 4
      %v3445 = vsel %vm568, %v3442, %v3444
      %v3446 = vrot.slane %v3310, 4
      %v3447 = vrot.slane %v3311, 4
      %v3448 = vsel %vm568, %v3446, %v3447
      %v3449 = vrot.slane %v3312, 4
      %v3450 = vsel %vm568, %v3447, %v3449
      %v3451 = vrot.slane %v3313, 4
      %v3452 = vrot.slane %v3314, 4
      %v3453 = vsel %vm568, %v3451, %v3452
      %v3454 = vrot.slane %v3315, 4
      %v3455 = vsel %vm568, %v3452, %v3454
      %v3464 = vmax.f32 %v3428, %v3438
      %v3465 = vmax.f32 %v3429, %v3440
      %v3466 = vmax.f32 %v3430, %v3443
      %v3467 = vmax.f32 %v3431, %v3445
      %v3468 = vmax.f32 %v3432, %v3448
      %v3469 = vmax.f32 %v3433, %v3450
      %v3470 = vmax.f32 %v3434, %v3453
      %v3471 = vmax.f32 %v3435, %v3455
      %s3472 = scalar_lea.vmem %s147, 896
      %3473 = vst.msk [vmem:[%s3472] sm:$0xff] %vm148, %v3464
      %3474 = vst.msk [vmem:[%s3472 + $0x8] sm:$0xff] %vm148, %v3465
      %3475 = vst.msk [vmem:[%s3472 + $0x10] sm:$0xff] %vm148, %v3466
      %3476 = vst.msk [vmem:[%s3472 + $0x18] sm:$0xff] %vm148, %v3467
      %3477 = vst.msk [vmem:[%s3472 + $0x20] sm:$0xff] %vm148, %v3468
      %3478 = vst.msk [vmem:[%s3472 + $0x28] sm:$0xff] %vm148, %v3469
      %3479 = vst.msk [vmem:[%s3472 + $0x30] sm:$0xff] %vm148, %v3470
      %3480 = vst.msk [vmem:[%s3472 + $0x38] sm:$0xff] %vm148, %v3471
      %v3481 = vld [vmem:[%s976] sm:$0xff]
      %v3482 = vld [vmem:[%s976 + $0x8] sm:$0xff]
      %v3483 = vld [vmem:[%s976 + $0x10] sm:$0xff]
      %v3484 = vld [vmem:[%s976 + $0x18] sm:$0xff]
      %v3485 = vld [vmem:[%s976 + $0x20] sm:$0xff]
      %v3486 = vld [vmem:[%s976 + $0x28] sm:$0xff]
      %v3487 = vld [vmem:[%s976 + $0x30] sm:$0xff]
      %v3488 = vld [vmem:[%s976 + $0x38] sm:$0xff]
      %v3489 = vld [vmem:[%s976 + $0x40] sm:$0xff]
      %v3490 = vld [vmem:[%s976 + $0x48] sm:$0xff]
      %v3491 = vld [vmem:[%s976 + $0x50] sm:$0xff]
      %v3492 = vld [vmem:[%s976 + $0x58] sm:$0xff]
      %v3493 = vld [vmem:[%s1178] sm:$0xff]
      %v3494 = vld [vmem:[%s1178 + $0x8] sm:$0xff]
      %v3495 = vld [vmem:[%s1178 + $0x10] sm:$0xff]
      %v3496 = vld [vmem:[%s1178 + $0x18] sm:$0xff]
      %v3497 = vld [vmem:[%s1178 + $0x20] sm:$0xff]
      %v3498 = vld [vmem:[%s1178 + $0x28] sm:$0xff]
      %v3499 = vld [vmem:[%s1178 + $0x30] sm:$0xff]
      %v3500 = vld [vmem:[%s1178 + $0x38] sm:$0xff]
      %v3501 = vld [vmem:[%s1178 + $0x40] sm:$0xff]
      %v3502 = vld [vmem:[%s1178 + $0x48] sm:$0xff]
      %v3503 = vld [vmem:[%s1178 + $0x50] sm:$0xff]
      %v3504 = vld [vmem:[%s1178 + $0x58] sm:$0xff]
      %v3505 = vmax.f32 %v3481, %v3493
      %v3506 = vmax.f32 %v3482, %v3494
      %v3507 = vmax.f32 %v3483, %v3495
      %v3508 = vmax.f32 %v3484, %v3496
      %v3509 = vmax.f32 %v3485, %v3497
      %v3510 = vmax.f32 %v3486, %v3498
      %v3511 = vmax.f32 %v3487, %v3499
      %v3512 = vmax.f32 %v3488, %v3500
      %v3513 = vmax.f32 %v3489, %v3501
      %v3514 = vmax.f32 %v3490, %v3502
      %v3515 = vmax.f32 %v3491, %v3503
      %v3516 = vmax.f32 %v3492, %v3504
      %v3517 = vld [vmem:[%s325] sm:$0xff]
      %v3518 = vld [vmem:[%s325 + $0x8] sm:$0xff]
      %v3519 = vld [vmem:[%s325 + $0x10] sm:$0xff]
      %v3520 = vld [vmem:[%s325 + $0x18] sm:$0xff]
      %v3521 = vld [vmem:[%s325 + $0x20] sm:$0xff]
      %v3522 = vld [vmem:[%s325 + $0x28] sm:$0xff]
      %v3523 = vld [vmem:[%s325 + $0x30] sm:$0xff]
      %v3524 = vld [vmem:[%s325 + $0x38] sm:$0xff]
      %v3525 = vld [vmem:[%s325 + $0x40] sm:$0xff]
      %v3526 = vld [vmem:[%s325 + $0x48] sm:$0xff]
      %v3527 = vld [vmem:[%s325 + $0x50] sm:$0xff]
      %v3528 = vld [vmem:[%s325 + $0x58] sm:$0xff]
      %v3529 = vmax.f32 %v3505, %v3517
      %v3530 = vmax.f32 %v3506, %v3518
      %v3531 = vmax.f32 %v3507, %v3519
      %v3532 = vmax.f32 %v3508, %v3520
      %v3533 = vmax.f32 %v3509, %v3521
      %v3534 = vmax.f32 %v3510, %v3522
      %v3535 = vmax.f32 %v3511, %v3523
      %v3536 = vmax.f32 %v3512, %v3524
      %v3537 = vmax.f32 %v3513, %v3525
      %v3538 = vmax.f32 %v3514, %v3526
      %v3539 = vmax.f32 %v3515, %v3527
      %v3540 = vmax.f32 %v3516, %v3528
      %v3541 = vld [vmem:[%s1227] sm:$0xff]
      %v3542 = vld [vmem:[%s1227 + $0x8] sm:$0xff]
      %v3543 = vld [vmem:[%s1227 + $0x10] sm:$0xff]
      %v3544 = vld [vmem:[%s1227 + $0x18] sm:$0xff]
      %v3545 = vld [vmem:[%s1227 + $0x20] sm:$0xff]
      %v3546 = vld [vmem:[%s1227 + $0x28] sm:$0xff]
      %v3547 = vld [vmem:[%s1227 + $0x30] sm:$0xff]
      %v3548 = vld [vmem:[%s1227 + $0x38] sm:$0xff]
      %v3549 = vld [vmem:[%s1227 + $0x40] sm:$0xff]
      %v3550 = vld [vmem:[%s1227 + $0x48] sm:$0xff]
      %v3551 = vld [vmem:[%s1227 + $0x50] sm:$0xff]
      %v3552 = vld [vmem:[%s1227 + $0x58] sm:$0xff]
      %v3553 = vmax.f32 %v3529, %v3541
      %v3554 = vmax.f32 %v3530, %v3542
      %v3555 = vmax.f32 %v3531, %v3543
      %v3556 = vmax.f32 %v3532, %v3544
      %v3557 = vmax.f32 %v3533, %v3545
      %v3558 = vmax.f32 %v3534, %v3546
      %v3559 = vmax.f32 %v3535, %v3547
      %v3560 = vmax.f32 %v3536, %v3548
      %v3561 = vmax.f32 %v3537, %v3549
      %v3562 = vmax.f32 %v3538, %v3550
      %v3563 = vmax.f32 %v3539, %v3551
      %v3564 = vmax.f32 %v3540, %v3552
      %v3565 = vld [vmem:[%s1252] sm:$0xff]
      %v3566 = vld [vmem:[%s1252 + $0x8] sm:$0xff]
      %v3567 = vld [vmem:[%s1252 + $0x10] sm:$0xff]
      %v3568 = vld [vmem:[%s1252 + $0x18] sm:$0xff]
      %v3569 = vld [vmem:[%s1252 + $0x20] sm:$0xff]
      %v3570 = vld [vmem:[%s1252 + $0x28] sm:$0xff]
      %v3571 = vld [vmem:[%s1252 + $0x30] sm:$0xff]
      %v3572 = vld [vmem:[%s1252 + $0x38] sm:$0xff]
      %v3573 = vld [vmem:[%s1252 + $0x40] sm:$0xff]
      %v3574 = vld [vmem:[%s1252 + $0x48] sm:$0xff]
      %v3575 = vld [vmem:[%s1252 + $0x50] sm:$0xff]
      %v3576 = vld [vmem:[%s1252 + $0x58] sm:$0xff]
      %v3577 = vmax.f32 %v3553, %v3565
      %v3578 = vmax.f32 %v3554, %v3566
      %v3579 = vmax.f32 %v3555, %v3567
      %v3580 = vmax.f32 %v3556, %v3568
      %v3581 = vmax.f32 %v3557, %v3569
      %v3582 = vmax.f32 %v3558, %v3570
      %v3583 = vmax.f32 %v3559, %v3571
      %v3584 = vmax.f32 %v3560, %v3572
      %v3585 = vmax.f32 %v3561, %v3573
      %v3586 = vmax.f32 %v3562, %v3574
      %v3587 = vmax.f32 %v3563, %v3575
      %v3588 = vmax.f32 %v3564, %v3576
      %v3601 = vrot.slane %v3577, 1
      %v3602 = vrot.slane %v3578, 1
      %v3603 = vsel %vm457, %v3601, %v3602
      %v3604 = vrot.slane %v3579, 1
      %v3605 = vsel %vm457, %v3602, %v3604
      %v3606 = vrot.slane %v3580, 1
      %v3607 = vrot.slane %v3581, 1
      %v3608 = vsel %vm457, %v3606, %v3607
      %v3609 = vrot.slane %v3582, 1
      %v3610 = vsel %vm457, %v3607, %v3609
      %v3611 = vrot.slane %v3583, 1
      %v3612 = vrot.slane %v3584, 1
      %v3613 = vsel %vm457, %v3611, %v3612
      %v3614 = vrot.slane %v3585, 1
      %v3615 = vsel %vm457, %v3612, %v3614
      %v3616 = vrot.slane %v3586, 1
      %v3617 = vrot.slane %v3587, 1
      %v3618 = vsel %vm457, %v3616, %v3617
      %v3619 = vrot.slane %v3588, 1
      %v3620 = vsel %vm457, %v3617, %v3619
      %v3629 = vmax.f32 %v3577, %v3603
      %v3630 = vmax.f32 %v3578, %v3605
      %v3631 = vmax.f32 %v3580, %v3608
      %v3632 = vmax.f32 %v3581, %v3610
      %v3633 = vmax.f32 %v3583, %v3613
      %v3634 = vmax.f32 %v3584, %v3615
      %v3635 = vmax.f32 %v3586, %v3618
      %v3636 = vmax.f32 %v3587, %v3620
      %v3637 = vrot.slane %v3577, 2
      %v3638 = vrot.slane %v3578, 2
      %v3639 = vsel %vm494, %v3637, %v3638
      %v3640 = vrot.slane %v3579, 2
      %v3641 = vsel %vm494, %v3638, %v3640
      %v3642 = vrot.slane %v3580, 2
      %v3643 = vrot.slane %v3581, 2
      %v3644 = vsel %vm494, %v3642, %v3643
      %v3645 = vrot.slane %v3582, 2
      %v3646 = vsel %vm494, %v3643, %v3645
      %v3647 = vrot.slane %v3583, 2
      %v3648 = vrot.slane %v3584, 2
      %v3649 = vsel %vm494, %v3647, %v3648
      %v3650 = vrot.slane %v3585, 2
      %v3651 = vsel %vm494, %v3648, %v3650
      %v3652 = vrot.slane %v3586, 2
      %v3653 = vrot.slane %v3587, 2
      %v3654 = vsel %vm494, %v3652, %v3653
      %v3655 = vrot.slane %v3588, 2
      %v3656 = vsel %vm494, %v3653, %v3655
      %v3665 = vmax.f32 %v3629, %v3639
      %v3666 = vmax.f32 %v3630, %v3641
      %v3667 = vmax.f32 %v3631, %v3644
      %v3668 = vmax.f32 %v3632, %v3646
      %v3669 = vmax.f32 %v3633, %v3649
      %v3670 = vmax.f32 %v3634, %v3651
      %v3671 = vmax.f32 %v3635, %v3654
      %v3672 = vmax.f32 %v3636, %v3656
      %v3673 = vrot.slane %v3577, 3
      %v3674 = vrot.slane %v3578, 3
      %v3675 = vsel %vm531, %v3673, %v3674
      %v3676 = vrot.slane %v3579, 3
      %v3677 = vsel %vm531, %v3674, %v3676
      %v3678 = vrot.slane %v3580, 3
      %v3679 = vrot.slane %v3581, 3
      %v3680 = vsel %vm531, %v3678, %v3679
      %v3681 = vrot.slane %v3582, 3
      %v3682 = vsel %vm531, %v3679, %v3681
      %v3683 = vrot.slane %v3583, 3
      %v3684 = vrot.slane %v3584, 3
      %v3685 = vsel %vm531, %v3683, %v3684
      %v3686 = vrot.slane %v3585, 3
      %v3687 = vsel %vm531, %v3684, %v3686
      %v3688 = vrot.slane %v3586, 3
      %v3689 = vrot.slane %v3587, 3
      %v3690 = vsel %vm531, %v3688, %v3689
      %v3691 = vrot.slane %v3588, 3
      %v3692 = vsel %vm531, %v3689, %v3691
      %v3701 = vmax.f32 %v3665, %v3675
      %v3702 = vmax.f32 %v3666, %v3677
      %v3703 = vmax.f32 %v3667, %v3680
      %v3704 = vmax.f32 %v3668, %v3682
      %v3705 = vmax.f32 %v3669, %v3685
      %v3706 = vmax.f32 %v3670, %v3687
      %v3707 = vmax.f32 %v3671, %v3690
      %v3708 = vmax.f32 %v3672, %v3692
      %v3709 = vrot.slane %v3577, 4
      %v3710 = vrot.slane %v3578, 4
      %v3711 = vsel %vm568, %v3709, %v3710
      %v3712 = vrot.slane %v3579, 4
      %v3713 = vsel %vm568, %v3710, %v3712
      %v3714 = vrot.slane %v3580, 4
      %v3715 = vrot.slane %v3581, 4
      %v3716 = vsel %vm568, %v3714, %v3715
      %v3717 = vrot.slane %v3582, 4
      %v3718 = vsel %vm568, %v3715, %v3717
      %v3719 = vrot.slane %v3583, 4
      %v3720 = vrot.slane %v3584, 4
      %v3721 = vsel %vm568, %v3719, %v3720
      %v3722 = vrot.slane %v3585, 4
      %v3723 = vsel %vm568, %v3720, %v3722
      %v3724 = vrot.slane %v3586, 4
      %v3725 = vrot.slane %v3587, 4
      %v3726 = vsel %vm568, %v3724, %v3725
      %v3727 = vrot.slane %v3588, 4
      %v3728 = vsel %vm568, %v3725, %v3727
      %v3737 = vmax.f32 %v3701, %v3711
      %v3738 = vmax.f32 %v3702, %v3713
      %v3739 = vmax.f32 %v3703, %v3716
      %v3740 = vmax.f32 %v3704, %v3718
      %v3741 = vmax.f32 %v3705, %v3721
      %v3742 = vmax.f32 %v3706, %v3723
      %v3743 = vmax.f32 %v3707, %v3726
      %v3744 = vmax.f32 %v3708, %v3728
      %s3745 = scalar_lea.vmem %s147, 960
      %3746 = vst.msk [vmem:[%s3745] sm:$0xff] %vm148, %v3737
      %3747 = vst.msk [vmem:[%s3745 + $0x8] sm:$0xff] %vm148, %v3738
      %3748 = vst.msk [vmem:[%s3745 + $0x10] sm:$0xff] %vm148, %v3739
      %3749 = vst.msk [vmem:[%s3745 + $0x18] sm:$0xff] %vm148, %v3740
      %3750 = vst.msk [vmem:[%s3745 + $0x20] sm:$0xff] %vm148, %v3741
      %3751 = vst.msk [vmem:[%s3745 + $0x28] sm:$0xff] %vm148, %v3742
      %3752 = vst.msk [vmem:[%s3745 + $0x30] sm:$0xff] %vm148, %v3743
      %3753 = vst.msk [vmem:[%s3745 + $0x38] sm:$0xff] %vm148, %v3744
      %p3754 = scmp.lt.s32.totalorder %s16, 1
      %s3755 = scalar_select %p3754, %s16, 1
      %p3756 = scmp.lt.s32.totalorder %s17, 0
      %s3757 = scalar_select %p3756, %s17, 0
      %s3758 = smul.addr %s3755, 128
      %s3759 = sadd.s32 %s3757, %s3758
      %s3760 = smul.addr %s3759, 8
      %s3761 = scalar_lea.vmem %s1, %s3760
      // Predicated region
      $region25: #{tpu_custom_call.1} parent=23 // pred_check
        %p3762 = pneg %p72
      $region26: #{tpu_custom_call.1} parent=23 // pred_check_branch
        %3764 = sbr.rel (%p3762) target = $region28
      $region27: #{tpu_custom_call.1} parent=23 // pred_region
        _
      $region28: #{tpu_custom_call.1} parent=23 // pred_fallthru
        _
    $region24: #{tpu_custom_call.1} parent=5 // pred_fallthru
      _
    %p3765 = scmp.le.s32.totalorder 2, %s7
    // Predicated region
    $region29: #{tpu_custom_call.1} parent=5 // pred_check
      %p3766 = pneg %p3765
    $region30: #{tpu_custom_call.1} parent=5 // pred_check_branch
      %3768 = sbr.rel (%p3766) target = $region32
    $region31: #{tpu_custom_call.1} parent=5 // pred_region
      %s3769 = ssub.s32 %s7, 2
      // Predicated region
      $region33: #{tpu_custom_call.1} parent=31 // pred_check
        %p3770 = pneg %p78
      $region34: #{tpu_custom_call.1} parent=31 // pred_check_branch
        %3772 = sbr.rel (%p3770) target = $region36
      $region35: #{tpu_custom_call.1} parent=31 // pred_region
        %p3773 = scmp.lt.s32.totalorder %s18, 1
        %s3774 = scalar_select %p3773, %s18, 1
        %p3775 = scmp.lt.s32.totalorder %s19, 0
        %s3776 = scalar_select %p3775, %s19, 0
        %s3777 = smul.addr %s3774, 128
        %s3778 = sadd.s32 %s3776, %s3777
        %s3779 = smul.addr %s3778, 8
        %s3780 = scalar_lea.vmem %s1, %s3779
      $region36: #{tpu_custom_call.1} parent=31 // pred_fallthru
        _
    $region32: #{tpu_custom_call.1} parent=5 // pred_fallthru
      _
  $region6: #{tpu_custom_call.1} parent=0 // loop_footer
    %s11 = sadd.s32 1, %s7
  $region7: #{tpu_custom_call.1} parent=0 // loop_footer_branch
    %6 = sbr.rel target = $region3
  $region8: #{tpu_custom_call.1} parent=0 // loop_exit
    _

</llo_original>
